<compile_context>
chip_gen: v6e
topology: v6e:2x2x1
jax: 0.10.0
libtpu: 0.0.40
codegen_flags: <defaults>
</compile_context>

<pallas_src>
import functools

import jax
import jax.numpy as jnp
from jax.experimental import pallas as pl
from jax.experimental.pallas import tpu as pltpu

EPS = 1e-5
_VMEM_LIMIT = 32 * 1024 * 1024


# ----------------------------------------------------------------------------
# In-kernel helpers (operate on values already loaded into vregs/VMEM)
# ----------------------------------------------------------------------------
def _reflect_pad_hw(x):
    """ReflectionPad2d(1) on a (H, W, C) value."""
    x = jnp.concatenate([x[1:2], x, x[-2:-1]], axis=0)
    x = jnp.concatenate([x[:, 1:2], x, x[:, -2:-1]], axis=1)
    return x


def _conv3x3_flat(xp, w, H, W):
    """3x3 conv of padded xp (H+2, W+2, Cin) bf16 with w (3,3,Cin,Cout) bf16.

    Returns f32 (H*W, Cout): 9 shifted matmuls accumulated in f32 (no im2col buffer).
    """
    cin = xp.shape[-1]
    acc = None
    for ky in range(3):
        for kx in range(3):
            win = xp[ky:ky + H, kx:kx + W, :].reshape(H * W, cin)
            part = jnp.dot(win, w[ky, kx], preferred_element_type=jnp.float32)
            acc = part if acc is None else acc + part
    return acc


# ----------------------------------------------------------------------------
# Kernel 1: fused double conv stage
#   (reflect-pad + conv3x3 + BN-affine + ReLU) -> (reflect-pad + conv3x3 + BN-affine
#    [+ ReLU]); supports multiple inputs for a fused skip-concat (split conv1 weights).
# ----------------------------------------------------------------------------
def _double_conv_kernel(*refs, n_in, relu2):
    x_refs = refs[:n_in]
    w1_refs = refs[n_in:2 * n_in]
    a1_ref, b1_ref, w2_ref, a2_ref, b2_ref, o_ref = refs[2 * n_in:]
    H, W, _ = o_ref.shape

    # conv1 over (implicitly concatenated) inputs, accumulated in f32
    acc = None
    for x_ref, w1_ref in zip(x_refs, w1_refs):
        xp = _reflect_pad_hw(x_ref[...].astype(jnp.bfloat16))
        c = _conv3x3_flat(xp, w1_ref[...], H, W)
        acc = c if acc is None else acc + c
    h = acc * a1_ref[...] + b1_ref[...]        # folded conv-bias + BN affine (f32)
    h = jnp.maximum(h, 0.0)                    # first conv is always followed by ReLU
    h = h.reshape(H, W, h.shape[-1])

    # conv2 (intermediate stays in VMEM)
    hp = _reflect_pad_hw(h.astype(jnp.bfloat16))
    y = _conv3x3_flat(hp, w2_ref[...], H, W)
    y = y * a2_ref[...] + b2_ref[...]
    if relu2:
        y = jnp.maximum(y, 0.0)
    o_ref[...] = y.reshape(H, W, y.shape[-1]).astype(o_ref.dtype)


def _fold_affine(conv_bias, bn):
    """Fold conv bias + eval-mode BatchNorm into a per-channel (scale, shift)."""
    cout = conv_bias.shape[0]
    if bn is None:
        scale = jnp.ones((cout,), jnp.float32)
        shift = jnp.zeros((cout,), jnp.float32)
    else:
        gamma, beta, mean, var = bn
        scale = gamma / jnp.sqrt(var + EPS)
        shift = beta - mean * scale
    a = scale.astype(jnp.float32)
    b = (conv_bias * scale + shift).astype(jnp.float32)
    return a.reshape(1, cout), b.reshape(1, cout)


def fused_double_conv(xs, w1s, bias1, bn1, w2, bias2, bn2, relu2, out_dtype):
    """xs: list of (B,H,W,Cin_i); w1s: matching list of (3,3,Cin_i,C1); w2: (3,3,C1,C2)."""
    a1, b1 = _fold_affine(bias1, bn1)
    a2, b2 = _fold_affine(bias2, bn2)
    w1s = [w.astype(jnp.bfloat16) for w in w1s]
    w2 = w2.astype(jnp.bfloat16)

    B, H, W, _ = xs[0].shape
    C1 = w1s[0].shape[-1]
    C2 = w2.shape[-1]

    in_specs = []
    for x in xs:
        in_specs.append(pl.BlockSpec((None, H, W, x.shape[-1]),
                                     lambda i: (i, 0, 0, 0)))
    for w in w1s:
        in_specs.append(pl.BlockSpec(w.shape, lambda i: (0, 0, 0, 0)))
    in_specs += [
        pl.BlockSpec((1, C1), lambda i: (0, 0)),
        pl.BlockSpec((1, C1), lambda i: (0, 0)),
        pl.BlockSpec(w2.shape, lambda i: (0, 0, 0, 0)),
        pl.BlockSpec((1, C2), lambda i: (0, 0)),
        pl.BlockSpec((1, C2), lambda i: (0, 0)),
    ]

    return pl.pallas_call(
        functools.partial(_double_conv_kernel, n_in=len(xs), relu2=relu2),
        out_shape=jax.ShapeDtypeStruct((B, H, W, C2), out_dtype),
        grid=(B,),
        in_specs=in_specs,
        out_specs=pl.BlockSpec((None, H, W, C2), lambda i: (i, 0, 0, 0)),
        compiler_params=pltpu.CompilerParams(
            dimension_semantics=("parallel",),
            vmem_limit_bytes=_VMEM_LIMIT),
    )(*xs, *w1s, a1, b1, w2, a2, b2)


# ----------------------------------------------------------------------------
# Kernel 2: MaxPool2d(kernel_size=3, stride=2, padding=1)
#   Input is viewed as (Ho, 2, Wo, 2, C) parity planes (free reshape in the wrapper).
#   Clamp-shifted edges are equivalent to -inf padding for max.
# ----------------------------------------------------------------------------
def _maxpool_kernel(x_ref, o_ref):
    x = x_ref[...].astype(jnp.float32)          # (Ho, 2, Wo, 2, C)
    x00 = x[:, 0, :, 0, :]                      # rows 2a,   cols 2b
    x01 = x[:, 0, :, 1, :]                      # rows 2a,   cols 2b+1
    x10 = x[:, 1, :, 0, :]                      # rows 2a+1, cols 2b
    x11 = x[:, 1, :, 1, :]                      # rows 2a+1, cols 2b+1
    # rows 2a-1 (previous pair's odd row), edge-clamped at a=0
    xm0 = jnp.concatenate([x00[:1], x10[:-1]], axis=0)
    xm1 = jnp.concatenate([x01[:1], x11[:-1]], axis=0)
    # vertical 3-max per column parity
    c0 = jnp.maximum(jnp.maximum(x00, x10), xm0)
    c1 = jnp.maximum(jnp.maximum(x01, x11), xm1)
    # col 2b-1 (previous pair's odd col), edge-clamped at b=0
    cm1 = jnp.concatenate([c0[:, :1], c1[:, :-1]], axis=1)
    out = jnp.maximum(jnp.maximum(c0, c1), cm1)
    o_ref[...] = out.astype(o_ref.dtype)


def maxpool3x3_s2_p1(x):
    B, H, W, C = x.shape
    if (H % 2) or (W % 2):
        # replicate-pad to even size (equivalent to -inf padding for max)
        x = jnp.pad(x, ((0, 0), (0, H % 2), (0, W % 2), (0, 0)), mode="edge")
        H, W = H + H % 2, W + W % 2
    Ho, Wo = H // 2, W // 2
    x5 = x.reshape(B, Ho, 2, Wo, 2, C)          # free metadata reshape
    return pl.pallas_call(
        _maxpool_kernel,
        out_shape=jax.ShapeDtypeStruct((B, Ho, Wo, C), x.dtype),
        grid=(B,),
        in_specs=[pl.BlockSpec((None, Ho, 2, Wo, 2, C),
                               lambda i: (i, 0, 0, 0, 0, 0))],
        out_specs=pl.BlockSpec((None, Ho, Wo, C), lambda i: (i, 0, 0, 0)),
        compiler_params=pltpu.CompilerParams(
            dimension_semantics=("parallel",),
            vmem_limit_bytes=_VMEM_LIMIT),
    )(x5)


# ----------------------------------------------------------------------------
# Kernel 3: bilinear x2 upsampling, align_corners=False
#   out[2a+r, 2b+s] written to a (h, 2, w, 2, C) block, which is bit-identical to the
#   interleaved (2h, 2w, C) row-major layout -> wrapper reshape is free.
# ----------------------------------------------------------------------------
def _upsample_kernel(x_ref, o_ref):
    x = x_ref[...].astype(jnp.float32)                   # (h, w, C)
    up = jnp.concatenate([x[:1], x[:-1]], axis=0)        # row a-1, edge-clamped
    dn = jnp.concatenate([x[1:], x[-1:]], axis=0)        # row a+1, edge-clamped
    row_planes = (0.75 * x + 0.25 * up,                  # output rows 2a
                  0.75 * x + 0.25 * dn)                  # output rows 2a+1
    for r in range(2):
        v = row_planes[r]
        lf = jnp.concatenate([v[:, :1], v[:, :-1]], axis=1)   # col b-1, clamped
        rt = jnp.concatenate([v[:, 1:], v[:, -1:]], axis=1)   # col b+1, clamped
        o_ref[:, r, :, 0, :] = (0.75 * v + 0.25 * lf).astype(o_ref.dtype)
        o_ref[:, r, :, 1, :] = (0.75 * v + 0.25 * rt).astype(o_ref.dtype)


def upsample_bilinear_x2(x):
    B, h, w, C = x.shape
    out5 = pl.pallas_call(
        _upsample_kernel,
        out_shape=jax.ShapeDtypeStruct((B, h, 2, w, 2, C), x.dtype),
        grid=(B,),
        in_specs=[pl.BlockSpec((None, h, w, C), lambda i: (i, 0, 0, 0))],
        out_specs=pl.BlockSpec((None, h, 2, w, 2, C),
                               lambda i: (i, 0, 0, 0, 0, 0)),
        compiler_params=pltpu.CompilerParams(
            dimension_semantics=("parallel",),
            vmem_limit_bytes=_VMEM_LIMIT),
    )(x)
    return out5.reshape(B, 2 * h, 2 * w, C)   # merge of adjacent dims: free reshape


# ----------------------------------------------------------------------------
# Deterministic parameter construction (shapes mirror UNet.__init__)
# ----------------------------------------------------------------------------
def make_conv_params(key, cin, cout):
    k1, k2 = jax.random.split(key)
    bound = 1.0 / (3.0 * float(cin) ** 0.5)  # PyTorch default: U(-1/sqrt(fan_in), .)
    w = jax.random.uniform(k1, (3, 3, cin, cout), jnp.float32, -bound, bound)
    b = jax.random.uniform(k2, (cout,), jnp.float32, -bound, bound)
    return w, b


def make_bn_params(key, c):
    k1, k2, k3, k4 = jax.random.split(key, 4)
    gamma = 1.0 + 0.1 * jax.random.normal(k1, (c,), jnp.float32)
    beta = 0.1 * jax.random.normal(k2, (c,), jnp.float32)
    mean = 0.05 * jax.random.normal(k3, (c,), jnp.float32)
    var = 1.0 + 0.1 * jax.random.uniform(k4, (c,), jnp.float32)
    return gamma, beta, mean, var


def init_unet_params(key, cin, f, cout, depth, batchnorms=True):
    keys = jax.random.split(key, 16)
    p = {}
    p["pre1"] = make_conv_params(keys[0], cin, f)
    p["pre2"] = make_conv_params(keys[1], f, f)
    cat_c = 3 * f if batchnorms else 2 * f
    p["post1"] = make_conv_params(keys[2], cat_c, f)
    p["post2"] = make_conv_params(keys[3], f, cout)
    if batchnorms:
        p["pre1_bn"] = make_bn_params(keys[4], f)
        p["pre2_bn"] = make_bn_params(keys[5], f)
        p["post1_bn"] = make_bn_params(keys[6], f)
        p["post2_bn"] = make_bn_params(keys[7], cout)
    if depth > 1:
        p["process"] = init_unet_params(keys[8], f, 2 * f, f, depth - 1, batchnorms)
    else:
        pc = 2 * f if batchnorms else f
        p["proc1"] = make_conv_params(keys[9], f, pc)
        p["proc2"] = make_conv_params(keys[10], pc, pc)
        if batchnorms:
            p["proc1_bn"] = make_bn_params(keys[11], pc)
            p["proc2_bn"] = make_bn_params(keys[12], pc)
    return p


# ----------------------------------------------------------------------------
# UNet forward (recursive), NHWC
# ----------------------------------------------------------------------------
def unet_forward(p, x):
    g = p.get  # returns None for missing BN entries when batchnorms=False

    # pre: fused conv+BN+ReLU + conv+BN+ReLU
    features = fused_double_conv(
        [x], [p["pre1"][0]], p["pre1"][1], g("pre1_bn"),
        p["pre2"][0], p["pre2"][1], g("pre2_bn"),
        relu2=True, out_dtype=jnp.bfloat16)

    # down
    pooled = maxpool3x3_s2_p1(features)

    # process (recursive UNet or fused leaf double-conv)
    if "process" in p:
        lower = unet_forward(p["process"], pooled)
    else:
        lower = fused_double_conv(
            [pooled], [p["proc1"][0]], p["proc1"][1], g("proc1_bn"),
            p["proc2"][0], p["proc2"][1], g("proc2_bn"),
            relu2=True, out_dtype=jnp.bfloat16)

    # up + crop
    up = upsample_bilinear_x2(lower)
    H, W = x.shape[1], x.shape[2]
    up = up[:, :H, :W, :].astype(features.dtype)

    # post with the skip-concat fused into the kernel (conv1 weight split by source)
    Fc = features.shape[-1]
    wp1 = p["post1"][0]
    out = fused_double_conv(
        [features, up],
        [wp1[:, :, :Fc, :], wp1[:, :, Fc:, :]], p["post1"][1], g("post1_bn"),
        p["post2"][0], p["post2"][1], g("post2_bn"),
        relu2=False, out_dtype=jnp.float32)   # final layer: no ReLU
    return out


if __name__ == "__main__":
    key = jax.random.PRNGKey(0)
    kp, kx = jax.random.split(key)

    # UNet(Cin=4, F=8, Cout=4, depth=1, batchnorms=True)
    # (With batchnorms=True the module is only channel-consistent at depth=1.)
    B, Cin, H, W = 2, 4, 16, 16
    Fchan, Cout, depth = 8, 4, 1

    params = init_unet_params(kp, Cin, Fchan, Cout, depth, batchnorms=True)
    x_nchw = jax.random.normal(kx, (B, Cin, H, W), jnp.float32)

    x_nhwc = jnp.transpose(x_nchw, (0, 2, 3, 1))      # NCHW -> NHWC
    y_nhwc = unet_forward(params, x_nhwc)             # (B, H, W, Cout)
    y_nchw = jnp.transpose(y_nhwc, (0, 3, 1, 2))      # NHWC -> NCHW, matches PyTorch

    jax.block_until_ready(y_nchw)
    assert y_nchw.shape == (B, Cout, H, W)
    print("KERNEL_OK")
</pallas_src>

<mosaic_0001>
module attributes {stable_mosaic.version = 11 : i64} {
  func.func @_double_conv_kernel(%arg0: i32, %arg1: memref<1x16x16x4xf32, #tpu.memory_space<vmem>>, %arg2: memref<3x3x4x8xbf16, #tpu.memory_space<vmem>>, %arg3: memref<1x8xf32, #tpu.memory_space<vmem>>, %arg4: memref<1x8xf32, #tpu.memory_space<vmem>>, %arg5: memref<3x3x8x8xbf16, #tpu.memory_space<vmem>>, %arg6: memref<1x8xf32, #tpu.memory_space<vmem>>, %arg7: memref<1x8xf32, #tpu.memory_space<vmem>>, %arg8: memref<1x16x16x8xbf16, #tpu.memory_space<vmem>>) attributes {dimension_semantics = [#tpu.dimension_semantics<parallel>], iteration_bounds = array<i64: 2>, scalar_prefetch = 0 : i64, scratch_operands = 0 : i64, tpu.core_type = #tpu.core_type<tc>, window_params = [{transform_indices = @transform_0, window_bounds = array<i64: 1, 16, 16, 4>}, {pipeline_mode = #tpu.pipeline_mode<synchronous>, transform_indices = @transform_1, window_bounds = array<i64: 3, 3, 4, 8>}, {pipeline_mode = #tpu.pipeline_mode<synchronous>, transform_indices = @transform_2, window_bounds = array<i64: 1, 8>}, {pipeline_mode = #tpu.pipeline_mode<synchronous>, transform_indices = @transform_3, window_bounds = array<i64: 1, 8>}, {pipeline_mode = #tpu.pipeline_mode<synchronous>, transform_indices = @transform_4, window_bounds = array<i64: 3, 3, 8, 8>}, {pipeline_mode = #tpu.pipeline_mode<synchronous>, transform_indices = @transform_5, window_bounds = array<i64: 1, 8>}, {pipeline_mode = #tpu.pipeline_mode<synchronous>, transform_indices = @transform_6, window_bounds = array<i64: 1, 8>}, {transform_indices = @transform_7, window_bounds = array<i64: 1, 16, 16, 8>}]} {
    %c0 = arith.constant 0 : index
    %c0_0 = arith.constant 0 : index
    %c0_1 = arith.constant 0 : index
    %c0_2 = arith.constant 0 : index
    %0 = vector.load %arg1[%c0, %c0_0, %c0_1, %c0_2] : memref<1x16x16x4xf32, #tpu.memory_space<vmem>>, vector<1x16x16x4xf32>
    %1 = vector.shape_cast %0 : vector<1x16x16x4xf32> to vector<16x16x4xf32>
    %2 = arith.truncf %1 : vector<16x16x4xf32> to vector<16x16x4xbf16>
    %3 = vector.extract_strided_slice %2 {offsets = [1, 0, 0], sizes = [1, 16, 4], strides = [1, 1, 1]} : vector<16x16x4xbf16> to vector<1x16x4xbf16>
    %4 = vector.extract_strided_slice %2 {offsets = [14, 0, 0], sizes = [1, 16, 4], strides = [1, 1, 1]} : vector<16x16x4xbf16> to vector<1x16x4xbf16>
    %5 = tpu.concatenate %3, %2, %4 in 0 : vector<1x16x4xbf16>, vector<16x16x4xbf16>, vector<1x16x4xbf16> -> vector<18x16x4xbf16>
    %6 = vector.extract_strided_slice %5 {offsets = [0, 1, 0], sizes = [18, 1, 4], strides = [1, 1, 1]} : vector<18x16x4xbf16> to vector<18x1x4xbf16>
    %7 = vector.extract_strided_slice %5 {offsets = [0, 14, 0], sizes = [18, 1, 4], strides = [1, 1, 1]} : vector<18x16x4xbf16> to vector<18x1x4xbf16>
    %8 = tpu.concatenate %6, %5, %7 in 1 : vector<18x1x4xbf16>, vector<18x16x4xbf16>, vector<18x1x4xbf16> -> vector<18x18x4xbf16>
    %c0_3 = arith.constant 0 : index
    %c0_4 = arith.constant 0 : index
    %c0_5 = arith.constant 0 : index
    %c0_6 = arith.constant 0 : index
    %9 = vector.load %arg2[%c0_3, %c0_4, %c0_5, %c0_6] : memref<3x3x4x8xbf16, #tpu.memory_space<vmem>>, vector<3x3x4x8xbf16>
    %10 = vector.extract_strided_slice %8 {offsets = [0, 0, 0], sizes = [16, 16, 4], strides = [1, 1, 1]} : vector<18x18x4xbf16> to vector<16x16x4xbf16>
    %11 = vector.shape_cast %10 : vector<16x16x4xbf16> to vector<256x4xbf16>
    %12 = vector.extract_strided_slice %9 {offsets = [0, 0, 0, 0], sizes = [1, 1, 4, 8], strides = [1, 1, 1, 1]} : vector<3x3x4x8xbf16> to vector<1x1x4x8xbf16>
    %13 = vector.shape_cast %12 : vector<1x1x4x8xbf16> to vector<4x8xbf16>
    %cst = arith.constant dense<0.000000e+00> : vector<256x8xf32>
    %14 = tpu.matmul %11, %13, %cst {dimension_numbers = #tpu.dot_dimension_numbers<[1], [0], [0], [1], [0, 0, 1, 1], [], []>} : vector<256x4xbf16>, vector<4x8xbf16>, vector<256x8xf32> -> vector<256x8xf32>
    %15 = vector.extract_strided_slice %8 {offsets = [0, 1, 0], sizes = [16, 16, 4], strides = [1, 1, 1]} : vector<18x18x4xbf16> to vector<16x16x4xbf16>
    %16 = vector.shape_cast %15 : vector<16x16x4xbf16> to vector<256x4xbf16>
    %17 = vector.extract_strided_slice %9 {offsets = [0, 1, 0, 0], sizes = [1, 1, 4, 8], strides = [1, 1, 1, 1]} : vector<3x3x4x8xbf16> to vector<1x1x4x8xbf16>
    %18 = vector.shape_cast %17 : vector<1x1x4x8xbf16> to vector<4x8xbf16>
    %cst_7 = arith.constant dense<0.000000e+00> : vector<256x8xf32>
    %19 = tpu.matmul %16, %18, %cst_7 {dimension_numbers = #tpu.dot_dimension_numbers<[1], [0], [0], [1], [0, 0, 1, 1], [], []>} : vector<256x4xbf16>, vector<4x8xbf16>, vector<256x8xf32> -> vector<256x8xf32>
    %20 = arith.addf %14, %19 : vector<256x8xf32>
    %21 = vector.extract_strided_slice %8 {offsets = [0, 2, 0], sizes = [16, 16, 4], strides = [1, 1, 1]} : vector<18x18x4xbf16> to vector<16x16x4xbf16>
    %22 = vector.shape_cast %21 : vector<16x16x4xbf16> to vector<256x4xbf16>
    %23 = vector.extract_strided_slice %9 {offsets = [0, 2, 0, 0], sizes = [1, 1, 4, 8], strides = [1, 1, 1, 1]} : vector<3x3x4x8xbf16> to vector<1x1x4x8xbf16>
    %24 = vector.shape_cast %23 : vector<1x1x4x8xbf16> to vector<4x8xbf16>
    %cst_8 = arith.constant dense<0.000000e+00> : vector<256x8xf32>
    %25 = tpu.matmul %22, %24, %cst_8 {dimension_numbers = #tpu.dot_dimension_numbers<[1], [0], [0], [1], [0, 0, 1, 1], [], []>} : vector<256x4xbf16>, vector<4x8xbf16>, vector<256x8xf32> -> vector<256x8xf32>
    %26 = arith.addf %20, %25 : vector<256x8xf32>
    %27 = vector.extract_strided_slice %8 {offsets = [1, 0, 0], sizes = [16, 16, 4], strides = [1, 1, 1]} : vector<18x18x4xbf16> to vector<16x16x4xbf16>
    %28 = vector.shape_cast %27 : vector<16x16x4xbf16> to vector<256x4xbf16>
    %29 = vector.extract_strided_slice %9 {offsets = [1, 0, 0, 0], sizes = [1, 1, 4, 8], strides = [1, 1, 1, 1]} : vector<3x3x4x8xbf16> to vector<1x1x4x8xbf16>
    %30 = vector.shape_cast %29 : vector<1x1x4x8xbf16> to vector<4x8xbf16>
    %cst_9 = arith.constant dense<0.000000e+00> : vector<256x8xf32>
    %31 = tpu.matmul %28, %30, %cst_9 {dimension_numbers = #tpu.dot_dimension_numbers<[1], [0], [0], [1], [0, 0, 1, 1], [], []>} : vector<256x4xbf16>, vector<4x8xbf16>, vector<256x8xf32> -> vector<256x8xf32>
    %32 = arith.addf %26, %31 : vector<256x8xf32>
    %33 = vector.extract_strided_slice %8 {offsets = [1, 1, 0], sizes = [16, 16, 4], strides = [1, 1, 1]} : vector<18x18x4xbf16> to vector<16x16x4xbf16>
    %34 = vector.shape_cast %33 : vector<16x16x4xbf16> to vector<256x4xbf16>
    %35 = vector.extract_strided_slice %9 {offsets = [1, 1, 0, 0], sizes = [1, 1, 4, 8], strides = [1, 1, 1, 1]} : vector<3x3x4x8xbf16> to vector<1x1x4x8xbf16>
    %36 = vector.shape_cast %35 : vector<1x1x4x8xbf16> to vector<4x8xbf16>
    %cst_10 = arith.constant dense<0.000000e+00> : vector<256x8xf32>
    %37 = tpu.matmul %34, %36, %cst_10 {dimension_numbers = #tpu.dot_dimension_numbers<[1], [0], [0], [1], [0, 0, 1, 1], [], []>} : vector<256x4xbf16>, vector<4x8xbf16>, vector<256x8xf32> -> vector<256x8xf32>
    %38 = arith.addf %32, %37 : vector<256x8xf32>
    %39 = vector.extract_strided_slice %8 {offsets = [1, 2, 0], sizes = [16, 16, 4], strides = [1, 1, 1]} : vector<18x18x4xbf16> to vector<16x16x4xbf16>
    %40 = vector.shape_cast %39 : vector<16x16x4xbf16> to vector<256x4xbf16>
    %41 = vector.extract_strided_slice %9 {offsets = [1, 2, 0, 0], sizes = [1, 1, 4, 8], strides = [1, 1, 1, 1]} : vector<3x3x4x8xbf16> to vector<1x1x4x8xbf16>
    %42 = vector.shape_cast %41 : vector<1x1x4x8xbf16> to vector<4x8xbf16>
    %cst_11 = arith.constant dense<0.000000e+00> : vector<256x8xf32>
    %43 = tpu.matmul %40, %42, %cst_11 {dimension_numbers = #tpu.dot_dimension_numbers<[1], [0], [0], [1], [0, 0, 1, 1], [], []>} : vector<256x4xbf16>, vector<4x8xbf16>, vector<256x8xf32> -> vector<256x8xf32>
    %44 = arith.addf %38, %43 : vector<256x8xf32>
    %45 = vector.extract_strided_slice %8 {offsets = [2, 0, 0], sizes = [16, 16, 4], strides = [1, 1, 1]} : vector<18x18x4xbf16> to vector<16x16x4xbf16>
    %46 = vector.shape_cast %45 : vector<16x16x4xbf16> to vector<256x4xbf16>
    %47 = vector.extract_strided_slice %9 {offsets = [2, 0, 0, 0], sizes = [1, 1, 4, 8], strides = [1, 1, 1, 1]} : vector<3x3x4x8xbf16> to vector<1x1x4x8xbf16>
    %48 = vector.shape_cast %47 : vector<1x1x4x8xbf16> to vector<4x8xbf16>
    %cst_12 = arith.constant dense<0.000000e+00> : vector<256x8xf32>
    %49 = tpu.matmul %46, %48, %cst_12 {dimension_numbers = #tpu.dot_dimension_numbers<[1], [0], [0], [1], [0, 0, 1, 1], [], []>} : vector<256x4xbf16>, vector<4x8xbf16>, vector<256x8xf32> -> vector<256x8xf32>
    %50 = arith.addf %44, %49 : vector<256x8xf32>
    %51 = vector.extract_strided_slice %8 {offsets = [2, 1, 0], sizes = [16, 16, 4], strides = [1, 1, 1]} : vector<18x18x4xbf16> to vector<16x16x4xbf16>
    %52 = vector.shape_cast %51 : vector<16x16x4xbf16> to vector<256x4xbf16>
    %53 = vector.extract_strided_slice %9 {offsets = [2, 1, 0, 0], sizes = [1, 1, 4, 8], strides = [1, 1, 1, 1]} : vector<3x3x4x8xbf16> to vector<1x1x4x8xbf16>
    %54 = vector.shape_cast %53 : vector<1x1x4x8xbf16> to vector<4x8xbf16>
    %cst_13 = arith.constant dense<0.000000e+00> : vector<256x8xf32>
    %55 = tpu.matmul %52, %54, %cst_13 {dimension_numbers = #tpu.dot_dimension_numbers<[1], [0], [0], [1], [0, 0, 1, 1], [], []>} : vector<256x4xbf16>, vector<4x8xbf16>, vector<256x8xf32> -> vector<256x8xf32>
    %56 = arith.addf %50, %55 : vector<256x8xf32>
    %57 = vector.extract_strided_slice %8 {offsets = [2, 2, 0], sizes = [16, 16, 4], strides = [1, 1, 1]} : vector<18x18x4xbf16> to vector<16x16x4xbf16>
    %58 = vector.shape_cast %57 : vector<16x16x4xbf16> to vector<256x4xbf16>
    %59 = vector.extract_strided_slice %9 {offsets = [2, 2, 0, 0], sizes = [1, 1, 4, 8], strides = [1, 1, 1, 1]} : vector<3x3x4x8xbf16> to vector<1x1x4x8xbf16>
    %60 = vector.shape_cast %59 : vector<1x1x4x8xbf16> to vector<4x8xbf16>
    %cst_14 = arith.constant dense<0.000000e+00> : vector<256x8xf32>
    %61 = tpu.matmul %58, %60, %cst_14 {dimension_numbers = #tpu.dot_dimension_numbers<[1], [0], [0], [1], [0, 0, 1, 1], [], []>} : vector<256x4xbf16>, vector<4x8xbf16>, vector<256x8xf32> -> vector<256x8xf32>
    %62 = arith.addf %56, %61 : vector<256x8xf32>
    %c0_15 = arith.constant 0 : index
    %c0_16 = arith.constant 0 : index
    %63 = vector.load %arg3[%c0_15, %c0_16] : memref<1x8xf32, #tpu.memory_space<vmem>>, vector<1x8xf32>
    %64 = vector.broadcast %63 : vector<1x8xf32> to vector<256x8xf32>
    %65 = arith.mulf %62, %64 : vector<256x8xf32>
    %c0_17 = arith.constant 0 : index
    %c0_18 = arith.constant 0 : index
    %66 = vector.load %arg4[%c0_17, %c0_18] : memref<1x8xf32, #tpu.memory_space<vmem>>, vector<1x8xf32>
    %67 = vector.broadcast %66 : vector<1x8xf32> to vector<256x8xf32>
    %68 = arith.addf %65, %67 : vector<256x8xf32>
    %cst_19 = arith.constant 0.000000e+00 : f32
    %69 = vector.broadcast %cst_19 : f32 to vector<256x8xf32>
    %70 = arith.maximumf %68, %69 : vector<256x8xf32>
    %71 = vector.shape_cast %70 : vector<256x8xf32> to vector<16x16x8xf32>
    %72 = arith.truncf %71 : vector<16x16x8xf32> to vector<16x16x8xbf16>
    %73 = vector.extract_strided_slice %72 {offsets = [1, 0, 0], sizes = [1, 16, 8], strides = [1, 1, 1]} : vector<16x16x8xbf16> to vector<1x16x8xbf16>
    %74 = vector.extract_strided_slice %72 {offsets = [14, 0, 0], sizes = [1, 16, 8], strides = [1, 1, 1]} : vector<16x16x8xbf16> to vector<1x16x8xbf16>
    %75 = tpu.concatenate %73, %72, %74 in 0 : vector<1x16x8xbf16>, vector<16x16x8xbf16>, vector<1x16x8xbf16> -> vector<18x16x8xbf16>
    %76 = vector.extract_strided_slice %75 {offsets = [0, 1, 0], sizes = [18, 1, 8], strides = [1, 1, 1]} : vector<18x16x8xbf16> to vector<18x1x8xbf16>
    %77 = vector.extract_strided_slice %75 {offsets = [0, 14, 0], sizes = [18, 1, 8], strides = [1, 1, 1]} : vector<18x16x8xbf16> to vector<18x1x8xbf16>
    %78 = tpu.concatenate %76, %75, %77 in 1 : vector<18x1x8xbf16>, vector<18x16x8xbf16>, vector<18x1x8xbf16> -> vector<18x18x8xbf16>
    %c0_20 = arith.constant 0 : index
    %c0_21 = arith.constant 0 : index
    %c0_22 = arith.constant 0 : index
    %c0_23 = arith.constant 0 : index
    %79 = vector.load %arg5[%c0_20, %c0_21, %c0_22, %c0_23] : memref<3x3x8x8xbf16, #tpu.memory_space<vmem>>, vector<3x3x8x8xbf16>
    %80 = vector.extract_strided_slice %78 {offsets = [0, 0, 0], sizes = [16, 16, 8], strides = [1, 1, 1]} : vector<18x18x8xbf16> to vector<16x16x8xbf16>
    %81 = vector.shape_cast %80 : vector<16x16x8xbf16> to vector<256x8xbf16>
    %82 = vector.extract_strided_slice %79 {offsets = [0, 0, 0, 0], sizes = [1, 1, 8, 8], strides = [1, 1, 1, 1]} : vector<3x3x8x8xbf16> to vector<1x1x8x8xbf16>
    %83 = vector.shape_cast %82 : vector<1x1x8x8xbf16> to vector<8x8xbf16>
    %cst_24 = arith.constant dense<0.000000e+00> : vector<256x8xf32>
    %84 = tpu.matmul %81, %83, %cst_24 {dimension_numbers = #tpu.dot_dimension_numbers<[1], [0], [0], [1], [0, 0, 1, 1], [], []>} : vector<256x8xbf16>, vector<8x8xbf16>, vector<256x8xf32> -> vector<256x8xf32>
    %85 = vector.extract_strided_slice %78 {offsets = [0, 1, 0], sizes = [16, 16, 8], strides = [1, 1, 1]} : vector<18x18x8xbf16> to vector<16x16x8xbf16>
    %86 = vector.shape_cast %85 : vector<16x16x8xbf16> to vector<256x8xbf16>
    %87 = vector.extract_strided_slice %79 {offsets = [0, 1, 0, 0], sizes = [1, 1, 8, 8], strides = [1, 1, 1, 1]} : vector<3x3x8x8xbf16> to vector<1x1x8x8xbf16>
    %88 = vector.shape_cast %87 : vector<1x1x8x8xbf16> to vector<8x8xbf16>
    %cst_25 = arith.constant dense<0.000000e+00> : vector<256x8xf32>
    %89 = tpu.matmul %86, %88, %cst_25 {dimension_numbers = #tpu.dot_dimension_numbers<[1], [0], [0], [1], [0, 0, 1, 1], [], []>} : vector<256x8xbf16>, vector<8x8xbf16>, vector<256x8xf32> -> vector<256x8xf32>
    %90 = arith.addf %84, %89 : vector<256x8xf32>
    %91 = vector.extract_strided_slice %78 {offsets = [0, 2, 0], sizes = [16, 16, 8], strides = [1, 1, 1]} : vector<18x18x8xbf16> to vector<16x16x8xbf16>
    %92 = vector.shape_cast %91 : vector<16x16x8xbf16> to vector<256x8xbf16>
    %93 = vector.extract_strided_slice %79 {offsets = [0, 2, 0, 0], sizes = [1, 1, 8, 8], strides = [1, 1, 1, 1]} : vector<3x3x8x8xbf16> to vector<1x1x8x8xbf16>
    %94 = vector.shape_cast %93 : vector<1x1x8x8xbf16> to vector<8x8xbf16>
    %cst_26 = arith.constant dense<0.000000e+00> : vector<256x8xf32>
    %95 = tpu.matmul %92, %94, %cst_26 {dimension_numbers = #tpu.dot_dimension_numbers<[1], [0], [0], [1], [0, 0, 1, 1], [], []>} : vector<256x8xbf16>, vector<8x8xbf16>, vector<256x8xf32> -> vector<256x8xf32>
    %96 = arith.addf %90, %95 : vector<256x8xf32>
    %97 = vector.extract_strided_slice %78 {offsets = [1, 0, 0], sizes = [16, 16, 8], strides = [1, 1, 1]} : vector<18x18x8xbf16> to vector<16x16x8xbf16>
    %98 = vector.shape_cast %97 : vector<16x16x8xbf16> to vector<256x8xbf16>
    %99 = vector.extract_strided_slice %79 {offsets = [1, 0, 0, 0], sizes = [1, 1, 8, 8], strides = [1, 1, 1, 1]} : vector<3x3x8x8xbf16> to vector<1x1x8x8xbf16>
    %100 = vector.shape_cast %99 : vector<1x1x8x8xbf16> to vector<8x8xbf16>
    %cst_27 = arith.constant dense<0.000000e+00> : vector<256x8xf32>
    %101 = tpu.matmul %98, %100, %cst_27 {dimension_numbers = #tpu.dot_dimension_numbers<[1], [0], [0], [1], [0, 0, 1, 1], [], []>} : vector<256x8xbf16>, vector<8x8xbf16>, vector<256x8xf32> -> vector<256x8xf32>
    %102 = arith.addf %96, %101 : vector<256x8xf32>
    %103 = vector.extract_strided_slice %78 {offsets = [1, 1, 0], sizes = [16, 16, 8], strides = [1, 1, 1]} : vector<18x18x8xbf16> to vector<16x16x8xbf16>
    %104 = vector.shape_cast %103 : vector<16x16x8xbf16> to vector<256x8xbf16>
    %105 = vector.extract_strided_slice %79 {offsets = [1, 1, 0, 0], sizes = [1, 1, 8, 8], strides = [1, 1, 1, 1]} : vector<3x3x8x8xbf16> to vector<1x1x8x8xbf16>
    %106 = vector.shape_cast %105 : vector<1x1x8x8xbf16> to vector<8x8xbf16>
    %cst_28 = arith.constant dense<0.000000e+00> : vector<256x8xf32>
    %107 = tpu.matmul %104, %106, %cst_28 {dimension_numbers = #tpu.dot_dimension_numbers<[1], [0], [0], [1], [0, 0, 1, 1], [], []>} : vector<256x8xbf16>, vector<8x8xbf16>, vector<256x8xf32> -> vector<256x8xf32>
    %108 = arith.addf %102, %107 : vector<256x8xf32>
    %109 = vector.extract_strided_slice %78 {offsets = [1, 2, 0], sizes = [16, 16, 8], strides = [1, 1, 1]} : vector<18x18x8xbf16> to vector<16x16x8xbf16>
    %110 = vector.shape_cast %109 : vector<16x16x8xbf16> to vector<256x8xbf16>
    %111 = vector.extract_strided_slice %79 {offsets = [1, 2, 0, 0], sizes = [1, 1, 8, 8], strides = [1, 1, 1, 1]} : vector<3x3x8x8xbf16> to vector<1x1x8x8xbf16>
    %112 = vector.shape_cast %111 : vector<1x1x8x8xbf16> to vector<8x8xbf16>
    %cst_29 = arith.constant dense<0.000000e+00> : vector<256x8xf32>
    %113 = tpu.matmul %110, %112, %cst_29 {dimension_numbers = #tpu.dot_dimension_numbers<[1], [0], [0], [1], [0, 0, 1, 1], [], []>} : vector<256x8xbf16>, vector<8x8xbf16>, vector<256x8xf32> -> vector<256x8xf32>
    %114 = arith.addf %108, %113 : vector<256x8xf32>
    %115 = vector.extract_strided_slice %78 {offsets = [2, 0, 0], sizes = [16, 16, 8], strides = [1, 1, 1]} : vector<18x18x8xbf16> to vector<16x16x8xbf16>
    %116 = vector.shape_cast %115 : vector<16x16x8xbf16> to vector<256x8xbf16>
    %117 = vector.extract_strided_slice %79 {offsets = [2, 0, 0, 0], sizes = [1, 1, 8, 8], strides = [1, 1, 1, 1]} : vector<3x3x8x8xbf16> to vector<1x1x8x8xbf16>
    %118 = vector.shape_cast %117 : vector<1x1x8x8xbf16> to vector<8x8xbf16>
    %cst_30 = arith.constant dense<0.000000e+00> : vector<256x8xf32>
    %119 = tpu.matmul %116, %118, %cst_30 {dimension_numbers = #tpu.dot_dimension_numbers<[1], [0], [0], [1], [0, 0, 1, 1], [], []>} : vector<256x8xbf16>, vector<8x8xbf16>, vector<256x8xf32> -> vector<256x8xf32>
    %120 = arith.addf %114, %119 : vector<256x8xf32>
    %121 = vector.extract_strided_slice %78 {offsets = [2, 1, 0], sizes = [16, 16, 8], strides = [1, 1, 1]} : vector<18x18x8xbf16> to vector<16x16x8xbf16>
    %122 = vector.shape_cast %121 : vector<16x16x8xbf16> to vector<256x8xbf16>
    %123 = vector.extract_strided_slice %79 {offsets = [2, 1, 0, 0], sizes = [1, 1, 8, 8], strides = [1, 1, 1, 1]} : vector<3x3x8x8xbf16> to vector<1x1x8x8xbf16>
    %124 = vector.shape_cast %123 : vector<1x1x8x8xbf16> to vector<8x8xbf16>
    %cst_31 = arith.constant dense<0.000000e+00> : vector<256x8xf32>
    %125 = tpu.matmul %122, %124, %cst_31 {dimension_numbers = #tpu.dot_dimension_numbers<[1], [0], [0], [1], [0, 0, 1, 1], [], []>} : vector<256x8xbf16>, vector<8x8xbf16>, vector<256x8xf32> -> vector<256x8xf32>
    %126 = arith.addf %120, %125 : vector<256x8xf32>
    %127 = vector.extract_strided_slice %78 {offsets = [2, 2, 0], sizes = [16, 16, 8], strides = [1, 1, 1]} : vector<18x18x8xbf16> to vector<16x16x8xbf16>
    %128 = vector.shape_cast %127 : vector<16x16x8xbf16> to vector<256x8xbf16>
    %129 = vector.extract_strided_slice %79 {offsets = [2, 2, 0, 0], sizes = [1, 1, 8, 8], strides = [1, 1, 1, 1]} : vector<3x3x8x8xbf16> to vector<1x1x8x8xbf16>
    %130 = vector.shape_cast %129 : vector<1x1x8x8xbf16> to vector<8x8xbf16>
    %cst_32 = arith.constant dense<0.000000e+00> : vector<256x8xf32>
    %131 = tpu.matmul %128, %130, %cst_32 {dimension_numbers = #tpu.dot_dimension_numbers<[1], [0], [0], [1], [0, 0, 1, 1], [], []>} : vector<256x8xbf16>, vector<8x8xbf16>, vector<256x8xf32> -> vector<256x8xf32>
    %132 = arith.addf %126, %131 : vector<256x8xf32>
    %c0_33 = arith.constant 0 : index
    %c0_34 = arith.constant 0 : index
    %133 = vector.load %arg6[%c0_33, %c0_34] : memref<1x8xf32, #tpu.memory_space<vmem>>, vector<1x8xf32>
    %134 = vector.broadcast %133 : vector<1x8xf32> to vector<256x8xf32>
    %135 = arith.mulf %132, %134 : vector<256x8xf32>
    %c0_35 = arith.constant 0 : index
    %c0_36 = arith.constant 0 : index
    %136 = vector.load %arg7[%c0_35, %c0_36] : memref<1x8xf32, #tpu.memory_space<vmem>>, vector<1x8xf32>
    %137 = vector.broadcast %136 : vector<1x8xf32> to vector<256x8xf32>
    %138 = arith.addf %135, %137 : vector<256x8xf32>
    %cst_37 = arith.constant 0.000000e+00 : f32
    %139 = vector.broadcast %cst_37 : f32 to vector<256x8xf32>
    %140 = arith.maximumf %138, %139 : vector<256x8xf32>
    %141 = vector.shape_cast %140 : vector<256x8xf32> to vector<16x16x8xf32>
    %142 = arith.truncf %141 : vector<16x16x8xf32> to vector<16x16x8xbf16>
    %c0_38 = arith.constant 0 : index
    %c0_39 = arith.constant 0 : index
    %c0_40 = arith.constant 0 : index
    %c0_41 = arith.constant 0 : index
    %143 = vector.load %arg8[%c0_38, %c0_39, %c0_40, %c0_41] : memref<1x16x16x8xbf16, #tpu.memory_space<vmem>>, vector<1x16x16x8xbf16>
    %144 = vector.shape_cast %143 : vector<1x16x16x8xbf16> to vector<16x16x8xbf16>
    %145 = vector.shape_cast %142 : vector<16x16x8xbf16> to vector<1x16x16x8xbf16>
    tpu.vector_store %arg8[%c0_38, %c0_39, %c0_40, %c0_41], %145 {strides = array<i32>} : memref<1x16x16x8xbf16, #tpu.memory_space<vmem>>, vector<1x16x16x8xbf16>,
    return
  }
  func.func @transform_0(%arg0: i32) -> (i32, i32, i32, i32) {
    %c0_i32 = arith.constant 0 : i32
    %c0_i32_0 = arith.constant 0 : i32
    %c0_i32_1 = arith.constant 0 : i32
    %c0_i32_2 = arith.constant 0 : i32
    return %arg0, %c0_i32, %c0_i32_0, %c0_i32_1 : i32, i32, i32, i32
  }
  func.func @transform_1(%arg0: i32) -> (i32, i32, i32, i32) {
    %c0_i32 = arith.constant 0 : i32
    %c0_i32_0 = arith.constant 0 : i32
    %c0_i32_1 = arith.constant 0 : i32
    %c0_i32_2 = arith.constant 0 : i32
    %c0_i32_3 = arith.constant 0 : i32
    return %c0_i32, %c0_i32_0, %c0_i32_1, %c0_i32_2 : i32, i32, i32, i32
  }
  func.func @transform_2(%arg0: i32) -> (i32, i32) {
    %c0_i32 = arith.constant 0 : i32
    %c0_i32_0 = arith.constant 0 : i32
    %c0_i32_1 = arith.constant 0 : i32
    return %c0_i32, %c0_i32_0 : i32, i32
  }
  func.func @transform_3(%arg0: i32) -> (i32, i32) {
    %c0_i32 = arith.constant 0 : i32
    %c0_i32_0 = arith.constant 0 : i32
    %c0_i32_1 = arith.constant 0 : i32
    return %c0_i32, %c0_i32_0 : i32, i32
  }
  func.func @transform_4(%arg0: i32) -> (i32, i32, i32, i32) {
    %c0_i32 = arith.constant 0 : i32
    %c0_i32_0 = arith.constant 0 : i32
    %c0_i32_1 = arith.constant 0 : i32
    %c0_i32_2 = arith.constant 0 : i32
    %c0_i32_3 = arith.constant 0 : i32
    return %c0_i32, %c0_i32_0, %c0_i32_1, %c0_i32_2 : i32, i32, i32, i32
  }
  func.func @transform_5(%arg0: i32) -> (i32, i32) {
    %c0_i32 = arith.constant 0 : i32
    %c0_i32_0 = arith.constant 0 : i32
    %c0_i32_1 = arith.constant 0 : i32
    return %c0_i32, %c0_i32_0 : i32, i32
  }
  func.func @transform_6(%arg0: i32) -> (i32, i32) {
    %c0_i32 = arith.constant 0 : i32
    %c0_i32_0 = arith.constant 0 : i32
    %c0_i32_1 = arith.constant 0 : i32
    return %c0_i32, %c0_i32_0 : i32, i32
  }
  func.func @transform_7(%arg0: i32) -> (i32, i32, i32, i32) {
    %c0_i32 = arith.constant 0 : i32
    %c0_i32_0 = arith.constant 0 : i32
    %c0_i32_1 = arith.constant 0 : i32
    %c0_i32_2 = arith.constant 0 : i32
    return %arg0, %c0_i32, %c0_i32_0, %c0_i32_1 : i32, i32, i32, i32
  }
}

</mosaic_0001>

<llo_original>
// kernel: tpu_custom_call.1
$region0: #{tpu_custom_call.1}
  #allocation0 [shape = 'u32[]', space=smem, size = 0x4, offset = 0x4, fixed_abs, tag = 'smem constant byte address 0x4 - core index']
  #allocation1 [shape = 'u32[144,128]{1,0:T(1,128)}', space=vmem, size = 0x12000, scoped, tag = 'internal scratch']
  %s0 = inlined_call_operand.vmem [shape: f32[2,16,16,4], index: 0, kind: input, shape index: {}]
  %s1 = inlined_call_operand.vmem [shape: bf16[3,3,4,8], index: 1, kind: input, shape index: {}]
  %s2 = inlined_call_operand.vmem [shape: f32[1,8], index: 2, kind: input, shape index: {}]
  %s3 = inlined_call_operand.vmem [shape: f32[1,8], index: 3, kind: input, shape index: {}]
  %s4 = inlined_call_operand.vmem [shape: bf16[3,3,8,8], index: 4, kind: input, shape index: {}]
  %s5 = inlined_call_operand.vmem [shape: f32[1,8], index: 5, kind: input, shape index: {}]
  %s6 = inlined_call_operand.vmem [shape: f32[1,8], index: 6, kind: input, shape index: {}]
  %s7 = inlined_call_operand.vmem [shape: bf16[2,16,16,8], index: 7, kind: output, shape index: {}]
  %s8 = sld [smem:[#allocation0]]
  $region61: #{tpu_custom_call.1} parent=0
    _
  %s10 = ssub.s32 1, %s8
  %s11 = scalar_select 0, %s10, %s8
  loop: start=0, step=1, limit=4
  $region2: #{tpu_custom_call.1} parent=0 // loop_pre_header
    _
  $region3: #{tpu_custom_call.1} parent=0 // loop_header
    %s13 = sphi 0, %s17
    %p14 = scmp.ge.s32.totalorder %s13, 4
    %s23 = sphi 0, %s25
    %s26 = sphi 0, %s23
    %s27 = sphi 0, %s26
    %s43 = sphi 0, %s27
    %s47 = sphi 0, %s47
    %s49 = sphi 0, %s47
    %s50 = sphi 0, %s49
    %s64 = sphi 0, %s50
    %s68 = sphi 0, %s68
    %s70 = sphi 0, %s68
    %s71 = sphi 0, %s70
    %s85 = sphi 0, %s71
    %s89 = sphi 0, %s89
    %s91 = sphi 0, %s89
    %s92 = sphi 0, %s91
    %s106 = sphi 0, %s92
    %s110 = sphi 0, %s110
    %s112 = sphi 0, %s110
    %s113 = sphi 0, %s112
    %s127 = sphi 0, %s113
    %s131 = sphi 0, %s131
    %s133 = sphi 0, %s131
    %s134 = sphi 0, %s133
    %s148 = sphi 0, %s134
    %s152 = sphi 0, %s152
    %s154 = sphi 0, %s152
    %s155 = sphi 0, %s154
    %s169 = sphi 0, %s155
    %s175 = sphi 0, %s177
    %s178 = sphi 0, %s175
    %s179 = sphi 0, %s178
    %s195 = sphi 0, %s179
  $region4: #{tpu_custom_call.1} parent=0 // loop_header_branch
    %16 = sbr.rel (%p14) target = $region8
  $region5: #{tpu_custom_call.1} parent=0 // loop_body
    %s18 = ssub.s32 %s13, 1
    %s19 = ssub.s32 %s13, 2
    %s20 = sadd.s32 %s13, 1
    %s21 = ssub.s32 %s13, %s20
    %p22 = scmp.eq.s32.totalorder %s21, 0
    %s24 = sadd.s32 %s23, 1
    %s25 = scalar_select %p22, %s23, %s24
    %p28 = pneg %p22
    %p29 = scmp.eq.s32.totalorder %s13, 1
    %p30 = por %p28, %p29
    %p31 = scmp.ne.s32.totalorder %s23, %s26
    %p32 = scmp.eq.s32.totalorder %s13, 0
    %p33 = por %p31, %p32
    %p34 = scmp.ne.s32.totalorder %s23, %s26
    %p35 = scmp.eq.s32.totalorder %s18, 1
    %p36 = por %p34, %p35
    %p37 = scmp.ne.s32.totalorder %s26, %s27
    %p38 = scmp.eq.s32.totalorder %s18, 0
    %p39 = por %p37, %p38
    %p40 = scmp.ne.s32.totalorder %s26, %s27
    %p41 = scmp.eq.s32.totalorder %s19, 1
    %p42 = por %p40, %p41
    %p44 = scmp.ne.s32.totalorder %s27, %s43
    %p45 = scmp.eq.s32.totalorder %s19, 0
    %p46 = por %p44, %p45
    %s48 = sadd.s32 %s47, 1
    %p51 = scmp.eq.s32.totalorder %s13, 1
    %p52 = scmp.ne.s32.totalorder %s47, %s49
    %p53 = scmp.eq.s32.totalorder %s13, 0
    %p54 = por %p52, %p53
    %p55 = scmp.ne.s32.totalorder %s47, %s49
    %p56 = scmp.eq.s32.totalorder %s18, 1
    %p57 = por %p55, %p56
    %p58 = scmp.ne.s32.totalorder %s49, %s50
    %p59 = scmp.eq.s32.totalorder %s18, 0
    %p60 = por %p58, %p59
    %p61 = scmp.ne.s32.totalorder %s49, %s50
    %p62 = scmp.eq.s32.totalorder %s19, 1
    %p63 = por %p61, %p62
    %p65 = scmp.ne.s32.totalorder %s50, %s64
    %p66 = scmp.eq.s32.totalorder %s19, 0
    %p67 = por %p65, %p66
    %s69 = sadd.s32 %s68, 1
    %p72 = scmp.eq.s32.totalorder %s13, 1
    %p73 = scmp.ne.s32.totalorder %s68, %s70
    %p74 = scmp.eq.s32.totalorder %s13, 0
    %p75 = por %p73, %p74
    %p76 = scmp.ne.s32.totalorder %s68, %s70
    %p77 = scmp.eq.s32.totalorder %s18, 1
    %p78 = por %p76, %p77
    %p79 = scmp.ne.s32.totalorder %s70, %s71
    %p80 = scmp.eq.s32.totalorder %s18, 0
    %p81 = por %p79, %p80
    %p82 = scmp.ne.s32.totalorder %s70, %s71
    %p83 = scmp.eq.s32.totalorder %s19, 1
    %p84 = por %p82, %p83
    %p86 = scmp.ne.s32.totalorder %s71, %s85
    %p87 = scmp.eq.s32.totalorder %s19, 0
    %p88 = por %p86, %p87
    %s90 = sadd.s32 %s89, 1
    %p93 = scmp.eq.s32.totalorder %s13, 1
    %p94 = scmp.ne.s32.totalorder %s89, %s91
    %p95 = scmp.eq.s32.totalorder %s13, 0
    %p96 = por %p94, %p95
    %p97 = scmp.ne.s32.totalorder %s89, %s91
    %p98 = scmp.eq.s32.totalorder %s18, 1
    %p99 = por %p97, %p98
    %p100 = scmp.ne.s32.totalorder %s91, %s92
    %p101 = scmp.eq.s32.totalorder %s18, 0
    %p102 = por %p100, %p101
    %p103 = scmp.ne.s32.totalorder %s91, %s92
    %p104 = scmp.eq.s32.totalorder %s19, 1
    %p105 = por %p103, %p104
    %p107 = scmp.ne.s32.totalorder %s92, %s106
    %p108 = scmp.eq.s32.totalorder %s19, 0
    %p109 = por %p107, %p108
    %s111 = sadd.s32 %s110, 1
    %p114 = scmp.eq.s32.totalorder %s13, 1
    %p115 = scmp.ne.s32.totalorder %s110, %s112
    %p116 = scmp.eq.s32.totalorder %s13, 0
    %p117 = por %p115, %p116
    %p118 = scmp.ne.s32.totalorder %s110, %s112
    %p119 = scmp.eq.s32.totalorder %s18, 1
    %p120 = por %p118, %p119
    %p121 = scmp.ne.s32.totalorder %s112, %s113
    %p122 = scmp.eq.s32.totalorder %s18, 0
    %p123 = por %p121, %p122
    %p124 = scmp.ne.s32.totalorder %s112, %s113
    %p125 = scmp.eq.s32.totalorder %s19, 1
    %p126 = por %p124, %p125
    %p128 = scmp.ne.s32.totalorder %s113, %s127
    %p129 = scmp.eq.s32.totalorder %s19, 0
    %p130 = por %p128, %p129
    %s132 = sadd.s32 %s131, 1
    %p135 = scmp.eq.s32.totalorder %s13, 1
    %p136 = scmp.ne.s32.totalorder %s131, %s133
    %p137 = scmp.eq.s32.totalorder %s13, 0
    %p138 = por %p136, %p137
    %p139 = scmp.ne.s32.totalorder %s131, %s133
    %p140 = scmp.eq.s32.totalorder %s18, 1
    %p141 = por %p139, %p140
    %p142 = scmp.ne.s32.totalorder %s133, %s134
    %p143 = scmp.eq.s32.totalorder %s18, 0
    %p144 = por %p142, %p143
    %p145 = scmp.ne.s32.totalorder %s133, %s134
    %p146 = scmp.eq.s32.totalorder %s19, 1
    %p147 = por %p145, %p146
    %p149 = scmp.ne.s32.totalorder %s134, %s148
    %p150 = scmp.eq.s32.totalorder %s19, 0
    %p151 = por %p149, %p150
    %s153 = sadd.s32 %s152, 1
    %p156 = scmp.eq.s32.totalorder %s13, 1
    %p157 = scmp.ne.s32.totalorder %s152, %s154
    %p158 = scmp.eq.s32.totalorder %s13, 0
    %p159 = por %p157, %p158
    %p160 = scmp.ne.s32.totalorder %s152, %s154
    %p161 = scmp.eq.s32.totalorder %s18, 1
    %p162 = por %p160, %p161
    %p163 = scmp.ne.s32.totalorder %s154, %s155
    %p164 = scmp.eq.s32.totalorder %s18, 0
    %p165 = por %p163, %p164
    %p166 = scmp.ne.s32.totalorder %s154, %s155
    %p167 = scmp.eq.s32.totalorder %s19, 1
    %p168 = por %p166, %p167
    %p170 = scmp.ne.s32.totalorder %s155, %s169
    %p171 = scmp.eq.s32.totalorder %s19, 0
    %p172 = por %p170, %p171
    %s173 = ssub.s32 %s13, %s20
    %p174 = scmp.eq.s32.totalorder %s173, 0
    %s176 = sadd.s32 %s175, 1
    %s177 = scalar_select %p174, %s175, %s176
    %p180 = pneg %p174
    %p181 = scmp.eq.s32.totalorder %s13, 1
    %p182 = por %p180, %p181
    %p183 = scmp.ne.s32.totalorder %s175, %s178
    %p184 = scmp.eq.s32.totalorder %s13, 0
    %p185 = por %p183, %p184
    %p186 = scmp.ne.s32.totalorder %s175, %s178
    %p187 = scmp.eq.s32.totalorder %s18, 1
    %p188 = por %p186, %p187
    %p189 = scmp.ne.s32.totalorder %s178, %s179
    %p190 = scmp.eq.s32.totalorder %s18, 0
    %p191 = por %p189, %p190
    %p192 = scmp.ne.s32.totalorder %s178, %s179
    %p193 = scmp.eq.s32.totalorder %s19, 1
    %p194 = por %p192, %p193
    %p196 = scmp.ne.s32.totalorder %s179, %s195
    %p197 = scmp.eq.s32.totalorder %s19, 0
    %p198 = por %p196, %p197
    %p199 = scmp.le.s32.totalorder 1, %s13
    %p200 = scmp.lt.s32.totalorder %s13, 3
    %p201 = pnand %p199, %p200
    %p202 = pneg %p201
    // Predicated region
    $region9: #{tpu_custom_call.1} parent=5 // pred_check
      _
    $region10: #{tpu_custom_call.1} parent=5 // pred_check_branch
      %204 = sbr.rel (%p201) target = $region12
    $region11: #{tpu_custom_call.1} parent=5 // pred_region
      %s205 = ssub.s32 %s13, 1
      // Predicated region
      $region13: #{tpu_custom_call.1} parent=11 // pred_check
        %p206 = pneg %p60
      $region14: #{tpu_custom_call.1} parent=11 // pred_check_branch
        %208 = sbr.rel (%p206) target = $region16
      $region15: #{tpu_custom_call.1} parent=11 // pred_region
        _
      $region16: #{tpu_custom_call.1} parent=11 // pred_fallthru
        _
      // Predicated region
      $region17: #{tpu_custom_call.1} parent=11 // pred_check
        %p209 = pneg %p81
      $region18: #{tpu_custom_call.1} parent=11 // pred_check_branch
        %211 = sbr.rel (%p209) target = $region20
      $region19: #{tpu_custom_call.1} parent=11 // pred_region
        _
      $region20: #{tpu_custom_call.1} parent=11 // pred_fallthru
        _
      // Predicated region
      $region21: #{tpu_custom_call.1} parent=11 // pred_check
        %p212 = pneg %p102
      $region22: #{tpu_custom_call.1} parent=11 // pred_check_branch
        %214 = sbr.rel (%p212) target = $region24
      $region23: #{tpu_custom_call.1} parent=11 // pred_region
        _
      $region24: #{tpu_custom_call.1} parent=11 // pred_fallthru
        _
      // Predicated region
      $region25: #{tpu_custom_call.1} parent=11 // pred_check
        %p215 = pneg %p123
      $region26: #{tpu_custom_call.1} parent=11 // pred_check_branch
        %217 = sbr.rel (%p215) target = $region28
      $region27: #{tpu_custom_call.1} parent=11 // pred_region
        _
      $region28: #{tpu_custom_call.1} parent=11 // pred_fallthru
        _
      // Predicated region
      $region29: #{tpu_custom_call.1} parent=11 // pred_check
        %p218 = pneg %p144
      $region30: #{tpu_custom_call.1} parent=11 // pred_check_branch
        %220 = sbr.rel (%p218) target = $region32
      $region31: #{tpu_custom_call.1} parent=11 // pred_region
        _
      $region32: #{tpu_custom_call.1} parent=11 // pred_fallthru
        _
      // Predicated region
      $region33: #{tpu_custom_call.1} parent=11 // pred_check
        %p221 = pneg %p165
      $region34: #{tpu_custom_call.1} parent=11 // pred_check_branch
        %223 = sbr.rel (%p221) target = $region36
      $region35: #{tpu_custom_call.1} parent=11 // pred_region
        _
      $region36: #{tpu_custom_call.1} parent=11 // pred_fallthru
        _
    $region12: #{tpu_custom_call.1} parent=5 // pred_fallthru
      _
    %p224 = scmp.lt.s32.totalorder %s13, 2
    // Predicated region
    $region37: #{tpu_custom_call.1} parent=5 // pred_check
      %p225 = pneg %p224
    $region38: #{tpu_custom_call.1} parent=5 // pred_check_branch
      %227 = sbr.rel (%p225) target = $region40
    $region39: #{tpu_custom_call.1} parent=5 // pred_region
      // Predicated region
      $region41: #{tpu_custom_call.1} parent=39 // pred_check
        %p228 = pneg %p33
      $region42: #{tpu_custom_call.1} parent=39 // pred_check_branch
        %230 = sbr.rel (%p228) target = $region44
      $region43: #{tpu_custom_call.1} parent=39 // pred_region
        %p231 = scmp.lt.s32.totalorder %s13, 1
        %s232 = scalar_select %p231, %s13, 1
        %s233 = smul.addr %s232, 32
        %s234 = smul.addr %s233, 8
        %s235 = scalar_lea.vmem %s0, %s234
      $region44: #{tpu_custom_call.1} parent=39 // pred_fallthru
        _
    $region40: #{tpu_custom_call.1} parent=5 // pred_fallthru
      _
    %p236 = scmp.le.s32.totalorder 1, %s13
    %p237 = scmp.lt.s32.totalorder %s13, 3
    %p238 = pnand %p236, %p237
    %p239 = pneg %p238
    // Predicated region
    $region45: #{tpu_custom_call.1} parent=5 // pred_check
      _
    $region46: #{tpu_custom_call.1} parent=5 // pred_check_branch
      %241 = sbr.rel (%p238) target = $region48
    $region47: #{tpu_custom_call.1} parent=5 // pred_region
      %s242 = ssub.s32 %s13, 1
      %p243 = scmp.lt.s32.totalorder %s18, 1
      %s244 = scalar_select %p243, %s18, 1
      %s245 = smul.addr %s244, 32
      %s246 = smul.addr %s245, 8
      %s247 = scalar_lea.vmem %s0, %s246
      %p248 = pneg %p39
      %p249 = pneg %p36
      %p250 = pneg %p60
      %p251 = pneg %p57
      %p252 = pneg %p81
      %p253 = pneg %p78
      %p254 = pneg %p102
      %p255 = pneg %p99
      %p256 = pneg %p123
      %p257 = pneg %p120
      %p258 = pneg %p144
      %p259 = pneg %p141
      %p260 = pneg %p165
      %p261 = pneg %p162
      %p262 = pneg %p191
      %p263 = pneg %p188
      %p264 = scmp.lt.s32.totalorder %s18, 1
      %s265 = scalar_select %p264, %s18, 1
      %s266 = smul.addr %s265, 32
      %s267 = smul.addr %s266, 4
      %s268 = scalar_lea.vmem %s7, %s267
      %p269 = scmp.lt.s32.totalorder %s18, 1
      %s270 = scalar_select %p269, %s18, 1
      %s271 = smul.addr %s270, 32
      %s272 = smul.addr %s271, 8
      %s273 = scalar_lea.vmem %s0, %s272
      %p274 = scmp.lt.s32.totalorder %s18, 1
      %s275 = scalar_select %p274, %s18, 1
      %s276 = smul.addr %s275, 32
      %s277 = smul.addr %s276, 4
      %s278 = scalar_lea.vmem %s7, %s277
      %v280 = vld [vmem:[%s273] sm:$0xff]
      %v281 = vld [vmem:[%s273 + $0x8] sm:$0xff]
      %v282 = vld [vmem:[%s273 + $0x10] sm:$0xff]
      %v283 = vld [vmem:[%s273 + $0x18] sm:$0xff]
      %v284 = vld [vmem:[%s273 + $0x20] sm:$0xff]
      %v285 = vld [vmem:[%s273 + $0x28] sm:$0xff]
      %v286 = vld [vmem:[%s273 + $0x30] sm:$0xff]
      %v287 = vld [vmem:[%s273 + $0x38] sm:$0xff]
      %v288 = vld [vmem:[%s273 + $0x40] sm:$0xff]
      %v289 = vld [vmem:[%s273 + $0x48] sm:$0xff]
      %v290 = vld [vmem:[%s273 + $0x50] sm:$0xff]
      %v291 = vld [vmem:[%s273 + $0x58] sm:$0xff]
      %v292 = vld [vmem:[%s273 + $0x60] sm:$0xff]
      %v293 = vld [vmem:[%s273 + $0x68] sm:$0xff]
      %v294 = vld [vmem:[%s273 + $0x70] sm:$0xff]
      %v295 = vld [vmem:[%s273 + $0x78] sm:$0xff]
      %v296 = vld [vmem:[%s273 + $0x80] sm:$0xff]
      %v297 = vld [vmem:[%s273 + $0x88] sm:$0xff]
      %v298 = vld [vmem:[%s273 + $0x90] sm:$0xff]
      %v299 = vld [vmem:[%s273 + $0x98] sm:$0xff]
      %v300 = vld [vmem:[%s273 + $0xa0] sm:$0xff]
      %v301 = vld [vmem:[%s273 + $0xa8] sm:$0xff]
      %v302 = vld [vmem:[%s273 + $0xb0] sm:$0xff]
      %v303 = vld [vmem:[%s273 + $0xb8] sm:$0xff]
      %v304 = vld [vmem:[%s273 + $0xc0] sm:$0xff]
      %v305 = vld [vmem:[%s273 + $0xc8] sm:$0xff]
      %v306 = vld [vmem:[%s273 + $0xd0] sm:$0xff]
      %v307 = vld [vmem:[%s273 + $0xd8] sm:$0xff]
      %v308 = vld [vmem:[%s273 + $0xe0] sm:$0xff]
      %v309 = vld [vmem:[%s273 + $0xe8] sm:$0xff]
      %v310 = vld [vmem:[%s273 + $0xf0] sm:$0xff]
      %v311 = vld [vmem:[%s273 + $0xf8] sm:$0xff]
      %v312 = vpack.c.bf16 %v281, %v280
      %v313 = vpack.c.bf16 %v283, %v282
      %v314 = vpack.c.bf16 %v285, %v284
      %v315 = vpack.c.bf16 %v287, %v286
      %v316 = vpack.c.bf16 %v289, %v288
      %v317 = vpack.c.bf16 %v291, %v290
      %v318 = vpack.c.bf16 %v293, %v292
      %v319 = vpack.c.bf16 %v295, %v294
      %v320 = vpack.c.bf16 %v297, %v296
      %v321 = vpack.c.bf16 %v299, %v298
      %v322 = vpack.c.bf16 %v301, %v300
      %v323 = vpack.c.bf16 %v303, %v302
      %v324 = vpack.c.bf16 %v305, %v304
      %v325 = vpack.c.bf16 %v307, %v306
      %v326 = vpack.c.bf16 %v309, %v308
      %v327 = vpack.c.bf16 %v311, %v310
      %v329 = vshrl.u32 %v313, 16
      %v332 = vshrl.u32 %v312, 16
      %v335 = vshrl.u32 %v314, 16
      %v338 = vshrl.u32 %v315, 16
      %v341 = vshrl.u32 %v316, 16
      %v344 = vshrl.u32 %v317, 16
      %v347 = vshrl.u32 %v318, 16
      %v350 = vshrl.u32 %v319, 16
      %v353 = vshrl.u32 %v320, 16
      %v356 = vshrl.u32 %v321, 16
      %v359 = vshrl.u32 %v322, 16
      %v362 = vshrl.u32 %v323, 16
      %v365 = vshrl.u32 %v324, 16
      %v368 = vshrl.u32 %v325, 16
      %v371 = vshrl.u32 %v326, 16
      %v374 = vshrl.u32 %v327, 16
      %v392 = vrot.slane %v329, 7
      %v393 = vshll.u32 %v313, 16
      %v395 = vor.u32 %v392, %v393
      %v396 = vrot.slane %v332, 7
      %v397 = vshll.u32 %v312, 16
      %v399 = vor.u32 %v396, %v397
      %v400 = vrot.slane %v335, 7
      %v401 = vshll.u32 %v314, 16
      %v403 = vor.u32 %v400, %v401
      %v404 = vrot.slane %v338, 7
      %v405 = vshll.u32 %v315, 16
      %v407 = vor.u32 %v404, %v405
      %v408 = vrot.slane %v341, 7
      %v409 = vshll.u32 %v316, 16
      %v411 = vor.u32 %v408, %v409
      %v412 = vrot.slane %v344, 7
      %v413 = vshll.u32 %v317, 16
      %v415 = vor.u32 %v412, %v413
      %v416 = vrot.slane %v347, 7
      %v417 = vshll.u32 %v318, 16
      %v419 = vor.u32 %v416, %v417
      %v420 = vrot.slane %v350, 7
      %v421 = vshll.u32 %v319, 16
      %v423 = vor.u32 %v420, %v421
      %v424 = vrot.slane %v353, 7
      %v425 = vshll.u32 %v320, 16
      %v427 = vor.u32 %v424, %v425
      %v428 = vrot.slane %v356, 7
      %v429 = vshll.u32 %v321, 16
      %v431 = vor.u32 %v428, %v429
      %v432 = vrot.slane %v359, 7
      %v433 = vshll.u32 %v322, 16
      %v435 = vor.u32 %v432, %v433
      %v436 = vrot.slane %v362, 7
      %v437 = vshll.u32 %v323, 16
      %v439 = vor.u32 %v436, %v437
      %v440 = vrot.slane %v365, 7
      %v441 = vshll.u32 %v324, 16
      %v443 = vor.u32 %v440, %v441
      %v444 = vrot.slane %v368, 7
      %v445 = vshll.u32 %v325, 16
      %v447 = vor.u32 %v444, %v445
      %v448 = vrot.slane %v371, 7
      %v449 = vshll.u32 %v326, 16
      %v451 = vor.u32 %v448, %v449
      %v452 = vrot.slane %v374, 7
      %v453 = vshll.u32 %v327, 16
      %v455 = vor.u32 %v452, %v453
      %v488 = vrot.slane %v393, 7
      %v489 = vrot.slane %v397, 7
      %v490 = vrot.slane %v401, 7
      %v491 = vrot.slane %v405, 7
      %v492 = vrot.slane %v409, 7
      %v493 = vrot.slane %v413, 7
      %v494 = vrot.slane %v417, 7
      %v495 = vrot.slane %v421, 7
      %v496 = vrot.slane %v425, 7
      %v497 = vrot.slane %v429, 7
      %v498 = vrot.slane %v433, 7
      %v499 = vrot.slane %v437, 7
      %v500 = vrot.slane %v441, 7
      %v501 = vrot.slane %v445, 7
      %v502 = vrot.slane %v449, 7
      %v503 = vrot.slane %v453, 7
      %vm520 = vcmask 1040384
      %vm521 = vsmask.f32 256
      %vm522 = vmand %vm520, %vm521
      %v523 = vsel %vm522, %v329, %v395
      %v524 = vsel %vm522, %v332, %v399
      %v525 = vsel %vm522, %v335, %v403
      %v526 = vsel %vm522, %v338, %v407
      %v527 = vsel %vm522, %v341, %v411
      %v528 = vsel %vm522, %v344, %v415
      %v529 = vsel %vm522, %v347, %v419
      %v530 = vsel %vm522, %v350, %v423
      %v531 = vsel %vm522, %v353, %v427
      %v532 = vsel %vm522, %v356, %v431
      %v533 = vsel %vm522, %v359, %v435
      %v534 = vsel %vm522, %v362, %v439
      %v535 = vsel %vm522, %v365, %v443
      %v536 = vsel %vm522, %v368, %v447
      %v537 = vsel %vm522, %v371, %v451
      %v538 = vsel %vm522, %v374, %v455
      %v539 = vsel %vm522, %v392, %v488
      %v540 = vsel %vm522, %v396, %v489
      %v541 = vsel %vm522, %v400, %v490
      %v542 = vsel %vm522, %v404, %v491
      %v543 = vsel %vm522, %v408, %v492
      %v544 = vsel %vm522, %v412, %v493
      %v545 = vsel %vm522, %v416, %v494
      %v546 = vsel %vm522, %v420, %v495
      %v547 = vsel %vm522, %v424, %v496
      %v548 = vsel %vm522, %v428, %v497
      %v549 = vsel %vm522, %v432, %v498
      %v550 = vsel %vm522, %v436, %v499
      %v551 = vsel %vm522, %v440, %v500
      %v552 = vsel %vm522, %v444, %v501
      %v553 = vsel %vm522, %v448, %v502
      %v554 = vsel %vm522, %v452, %v503
      %v555 = vld [vmem:[%s1] sm:$0x3]
      %v556 = vld [vmem:[%s1 + $0x2] sm:$0x3]
      %v557 = vld [vmem:[%s1 + $0x4] sm:$0x3]
      %v558 = vld [vmem:[%s1 + $0x6] sm:$0x3]
      %v559 = vld [vmem:[%s1 + $0x8] sm:$0x3]
      %v560 = vld [vmem:[%s1 + $0xa] sm:$0x3]
      %v561 = vld [vmem:[%s1 + $0xc] sm:$0x3]
      %v562 = vld [vmem:[%s1 + $0xe] sm:$0x3]
      %v563 = vld [vmem:[%s1 + $0x10] sm:$0x3]
      %vm564 = vsmask.f32 7424
      %v566 = vshrl.u32 %v523, 16
      %v568 = vshll.u32 %v523, 16
      %v570 = vrot.slane %v568, 1
      %v571 = vor.u32 %v566, %v570
      %v573 = vshll.u32 %v539, 16
      %v575 = vrot.slane %v573, 1
      %v576 = vsel %vm564, %v571, %v575
      %v578 = vshrl.u32 %v524, 16
      %v580 = vshll.u32 %v524, 16
      %v582 = vrot.slane %v580, 1
      %v583 = vor.u32 %v578, %v582
      %v585 = vshll.u32 %v540, 16
      %v587 = vrot.slane %v585, 1
      %v588 = vsel %vm564, %v583, %v587
      %v590 = vshrl.u32 %v525, 16
      %v592 = vshll.u32 %v525, 16
      %v594 = vrot.slane %v592, 1
      %v595 = vor.u32 %v590, %v594
      %v597 = vshll.u32 %v541, 16
      %v599 = vrot.slane %v597, 1
      %v600 = vsel %vm564, %v595, %v599
      %v602 = vshrl.u32 %v526, 16
      %v604 = vshll.u32 %v526, 16
      %v606 = vrot.slane %v604, 1
      %v607 = vor.u32 %v602, %v606
      %v609 = vshll.u32 %v542, 16
      %v611 = vrot.slane %v609, 1
      %v612 = vsel %vm564, %v607, %v611
      %v614 = vshrl.u32 %v527, 16
      %v616 = vshll.u32 %v527, 16
      %v618 = vrot.slane %v616, 1
      %v619 = vor.u32 %v614, %v618
      %v621 = vshll.u32 %v543, 16
      %v623 = vrot.slane %v621, 1
      %v624 = vsel %vm564, %v619, %v623
      %v626 = vshrl.u32 %v528, 16
      %v628 = vshll.u32 %v528, 16
      %v630 = vrot.slane %v628, 1
      %v631 = vor.u32 %v626, %v630
      %v633 = vshll.u32 %v544, 16
      %v635 = vrot.slane %v633, 1
      %v636 = vsel %vm564, %v631, %v635
      %v638 = vshrl.u32 %v529, 16
      %v640 = vshll.u32 %v529, 16
      %v642 = vrot.slane %v640, 1
      %v643 = vor.u32 %v638, %v642
      %v645 = vshll.u32 %v545, 16
      %v647 = vrot.slane %v645, 1
      %v648 = vsel %vm564, %v643, %v647
      %v650 = vshrl.u32 %v530, 16
      %v652 = vshll.u32 %v530, 16
      %v654 = vrot.slane %v652, 1
      %v655 = vor.u32 %v650, %v654
      %v657 = vshll.u32 %v546, 16
      %v659 = vrot.slane %v657, 1
      %v660 = vsel %vm564, %v655, %v659
      %v662 = vshrl.u32 %v531, 16
      %v664 = vshll.u32 %v531, 16
      %v666 = vrot.slane %v664, 1
      %v667 = vor.u32 %v662, %v666
      %v669 = vshll.u32 %v547, 16
      %v671 = vrot.slane %v669, 1
      %v672 = vsel %vm564, %v667, %v671
      %v674 = vshrl.u32 %v532, 16
      %v676 = vshll.u32 %v532, 16
      %v678 = vrot.slane %v676, 1
      %v679 = vor.u32 %v674, %v678
      %v681 = vshll.u32 %v548, 16
      %v683 = vrot.slane %v681, 1
      %v684 = vsel %vm564, %v679, %v683
      %v686 = vshrl.u32 %v533, 16
      %v688 = vshll.u32 %v533, 16
      %v690 = vrot.slane %v688, 1
      %v691 = vor.u32 %v686, %v690
      %v693 = vshll.u32 %v549, 16
      %v695 = vrot.slane %v693, 1
      %v696 = vsel %vm564, %v691, %v695
      %v698 = vshrl.u32 %v534, 16
      %v700 = vshll.u32 %v534, 16
      %v702 = vrot.slane %v700, 1
      %v703 = vor.u32 %v698, %v702
      %v705 = vshll.u32 %v550, 16
      %v707 = vrot.slane %v705, 1
      %v708 = vsel %vm564, %v703, %v707
      %v710 = vshrl.u32 %v535, 16
      %v712 = vshll.u32 %v535, 16
      %v714 = vrot.slane %v712, 1
      %v715 = vor.u32 %v710, %v714
      %v717 = vshll.u32 %v551, 16
      %v719 = vrot.slane %v717, 1
      %v720 = vsel %vm564, %v715, %v719
      %v722 = vshrl.u32 %v536, 16
      %v724 = vshll.u32 %v536, 16
      %v726 = vrot.slane %v724, 1
      %v727 = vor.u32 %v722, %v726
      %v729 = vshll.u32 %v552, 16
      %v731 = vrot.slane %v729, 1
      %v732 = vsel %vm564, %v727, %v731
      %v734 = vshrl.u32 %v537, 16
      %v736 = vshll.u32 %v537, 16
      %v738 = vrot.slane %v736, 1
      %v739 = vor.u32 %v734, %v738
      %v741 = vshll.u32 %v553, 16
      %v743 = vrot.slane %v741, 1
      %v744 = vsel %vm564, %v739, %v743
      %vm745 = vcmask 31744
      %v747 = vsel %vm745, %v576, 0
      %v750 = vsel %vm745, %v588, 0
      %v753 = vsel %vm745, %v600, 0
      %v756 = vsel %vm745, %v612, 0
      %v759 = vsel %vm745, %v624, 0
      %v762 = vsel %vm745, %v636, 0
      %v765 = vsel %vm745, %v648, 0
      %v768 = vsel %vm745, %v660, 0
      %v771 = vsel %vm745, %v672, 0
      %v774 = vsel %vm745, %v684, 0
      %v777 = vsel %vm745, %v696, 0
      %v780 = vsel %vm745, %v708, 0
      %v783 = vsel %vm745, %v720, 0
      %v786 = vsel %vm745, %v732, 0
      %v789 = vsel %vm745, %v744, 0
      %vm791 = vcmask 1041408
      %v793 = vsel %vm791, %v556, 0
      %795 = vmatprep.subr.bf16.mxu0 0
      %796 = vmatpush1.bf16.msra.mxu0 0
      %797 = vmatprep.subr.bf16.mxu0 0
      %798 = vmatpush1.bf16.msra.mxu0 0
      %799 = vmatprep.subr.bf16.mxu0 0
      %800 = vmatpush1.bf16.msra.mxu0 0
      %801 = vmatprep.subr.bf16.mxu0 0
      %802 = vmatpush1.bf16.msra.mxu0 0
      %803 = vmatprep.subr.bf16.mxu0 0
      %804 = vmatpush1.bf16.msra.mxu0 0
      %805 = vmatprep.subr.bf16.mxu0 0
      %806 = vmatpush1.bf16.msra.mxu0 0
      %807 = vmatprep.subr.bf16.mxu0 0
      %808 = vmatpush1.bf16.msra.mxu0 0
      %809 = vmatprep.subr.bf16.mxu0 0
      %810 = vmatpush1.bf16.msra.mxu0 %v793
      %811 = vmatprep.subr.bf16.mxu0 0
      %812 = vmatpush2.bf16.msra.mxu0 0
      %813 = vmatprep.subr.bf16.mxu0 0
      %814 = vmatpush2.bf16.msra.mxu0 0
      %815 = vmatprep.subr.bf16.mxu0 0
      %816 = vmatpush2.bf16.msra.mxu0 0
      %817 = vmatprep.subr.bf16.mxu0 0
      %818 = vmatpush2.bf16.msra.mxu0 0
      %819 = vmatprep.subr.bf16.mxu0 0
      %820 = vmatpush2.bf16.msra.mxu0 0
      %821 = vmatprep.subr.bf16.mxu0 0
      %822 = vmatpush2.bf16.msra.mxu0 0
      %823 = vmatprep.subr.bf16.mxu0 0
      %824 = vmatpush2.bf16.msra.mxu0 0
      %825 = vmatprep.subr.bf16.mxu0 0
      %826 = vmatpush2.bf16.msra.mxu0 0
      %827 = vmatprep.mubr.bf16.mxu0 0
      %828 = vmatmul.mubr.bf16.gmra.mxu0 %v747
      %v829 = vpop.f32.mrf.mxu0
      %v830 = vadd.f32 0.0, %v829
      %v831 = vpop.f32.mrf.mxu0
      %v832 = vpop.f32.mrf.mxu0
      %v833 = vadd.f32 0.0, %v832
      %v834 = vpop.f32.mrf.mxu0
      %835 = vmatprep.mubr.bf16.mxu0 0
      %836 = vmatmul.mubr.bf16.gmra.mxu0 %v750
      %v837 = vpop.f32.mrf.mxu0
      %v838 = vadd.f32 0.0, %v837
      %v839 = vpop.f32.mrf.mxu0
      %v840 = vpop.f32.mrf.mxu0
      %v841 = vadd.f32 0.0, %v840
      %v842 = vpop.f32.mrf.mxu0
      %843 = vmatprep.mubr.bf16.mxu0 0
      %844 = vmatmul.mubr.bf16.gmra.mxu0 %v747
      %v845 = vpop.f32.mrf.mxu0
      %v846 = vadd.f32 0.0, %v845
      %v847 = vpop.f32.mrf.mxu0
      %v848 = vpop.f32.mrf.mxu0
      %v849 = vadd.f32 0.0, %v848
      %v850 = vpop.f32.mrf.mxu0
      %851 = vmatprep.mubr.bf16.mxu0 0
      %852 = vmatmul.mubr.bf16.gmra.mxu0 %v753
      %v853 = vpop.f32.mrf.mxu0
      %v854 = vadd.f32 0.0, %v853
      %v855 = vpop.f32.mrf.mxu0
      %v856 = vpop.f32.mrf.mxu0
      %v857 = vadd.f32 0.0, %v856
      %v858 = vpop.f32.mrf.mxu0
      %859 = vmatprep.mubr.bf16.mxu0 0
      %860 = vmatmul.mubr.bf16.gmra.mxu0 %v756
      %v861 = vpop.f32.mrf.mxu0
      %v862 = vadd.f32 0.0, %v861
      %v863 = vpop.f32.mrf.mxu0
      %v864 = vpop.f32.mrf.mxu0
      %v865 = vadd.f32 0.0, %v864
      %v866 = vpop.f32.mrf.mxu0
      %867 = vmatprep.mubr.bf16.mxu0 0
      %868 = vmatmul.mubr.bf16.gmra.mxu0 %v759
      %v869 = vpop.f32.mrf.mxu0
      %v870 = vadd.f32 0.0, %v869
      %v871 = vpop.f32.mrf.mxu0
      %v872 = vpop.f32.mrf.mxu0
      %v873 = vadd.f32 0.0, %v872
      %v874 = vpop.f32.mrf.mxu0
      %875 = vmatprep.mubr.bf16.mxu0 0
      %876 = vmatmul.mubr.bf16.gmra.mxu0 %v762
      %v877 = vpop.f32.mrf.mxu0
      %v878 = vadd.f32 0.0, %v877
      %v879 = vpop.f32.mrf.mxu0
      %v880 = vpop.f32.mrf.mxu0
      %v881 = vadd.f32 0.0, %v880
      %v882 = vpop.f32.mrf.mxu0
      %883 = vmatprep.mubr.bf16.mxu0 0
      %884 = vmatmul.mubr.bf16.gmra.mxu0 %v765
      %v885 = vpop.f32.mrf.mxu0
      %v886 = vadd.f32 0.0, %v885
      %v887 = vpop.f32.mrf.mxu0
      %v888 = vpop.f32.mrf.mxu0
      %v889 = vadd.f32 0.0, %v888
      %v890 = vpop.f32.mrf.mxu0
      %891 = vmatprep.mubr.bf16.mxu0 0
      %892 = vmatmul.mubr.bf16.gmra.mxu0 %v768
      %v893 = vpop.f32.mrf.mxu0
      %v894 = vadd.f32 0.0, %v893
      %v895 = vpop.f32.mrf.mxu0
      %v896 = vpop.f32.mrf.mxu0
      %v897 = vadd.f32 0.0, %v896
      %v898 = vpop.f32.mrf.mxu0
      %899 = vmatprep.mubr.bf16.mxu0 0
      %900 = vmatmul.mubr.bf16.gmra.mxu0 %v771
      %v901 = vpop.f32.mrf.mxu0
      %v902 = vadd.f32 0.0, %v901
      %v903 = vpop.f32.mrf.mxu0
      %v904 = vpop.f32.mrf.mxu0
      %v905 = vadd.f32 0.0, %v904
      %v906 = vpop.f32.mrf.mxu0
      %907 = vmatprep.mubr.bf16.mxu0 0
      %908 = vmatmul.mubr.bf16.gmra.mxu0 %v774
      %v909 = vpop.f32.mrf.mxu0
      %v910 = vadd.f32 0.0, %v909
      %v911 = vpop.f32.mrf.mxu0
      %v912 = vpop.f32.mrf.mxu0
      %v913 = vadd.f32 0.0, %v912
      %v914 = vpop.f32.mrf.mxu0
      %915 = vmatprep.mubr.bf16.mxu0 0
      %916 = vmatmul.mubr.bf16.gmra.mxu0 %v777
      %v917 = vpop.f32.mrf.mxu0
      %v918 = vadd.f32 0.0, %v917
      %v919 = vpop.f32.mrf.mxu0
      %v920 = vpop.f32.mrf.mxu0
      %v921 = vadd.f32 0.0, %v920
      %v922 = vpop.f32.mrf.mxu0
      %923 = vmatprep.mubr.bf16.mxu0 0
      %924 = vmatmul.mubr.bf16.gmra.mxu0 %v780
      %v925 = vpop.f32.mrf.mxu0
      %v926 = vadd.f32 0.0, %v925
      %v927 = vpop.f32.mrf.mxu0
      %v928 = vpop.f32.mrf.mxu0
      %v929 = vadd.f32 0.0, %v928
      %v930 = vpop.f32.mrf.mxu0
      %931 = vmatprep.mubr.bf16.mxu0 0
      %932 = vmatmul.mubr.bf16.gmra.mxu0 %v783
      %v933 = vpop.f32.mrf.mxu0
      %v934 = vadd.f32 0.0, %v933
      %v935 = vpop.f32.mrf.mxu0
      %v936 = vpop.f32.mrf.mxu0
      %v937 = vadd.f32 0.0, %v936
      %v938 = vpop.f32.mrf.mxu0
      %939 = vmatprep.mubr.bf16.mxu0 0
      %940 = vmatmul.mubr.bf16.gmra.mxu0 %v786
      %v941 = vpop.f32.mrf.mxu0
      %v942 = vadd.f32 0.0, %v941
      %v943 = vpop.f32.mrf.mxu0
      %v944 = vpop.f32.mrf.mxu0
      %v945 = vadd.f32 0.0, %v944
      %v946 = vpop.f32.mrf.mxu0
      %947 = vmatprep.mubr.bf16.mxu0 0
      %948 = vmatmul.mubr.bf16.gmra.mxu0 %v789
      %v949 = vpop.f32.mrf.mxu0
      %v950 = vadd.f32 0.0, %v949
      %v951 = vpop.f32.mrf.mxu0
      %v952 = vpop.f32.mrf.mxu0
      %v953 = vadd.f32 0.0, %v952
      %v954 = vpop.f32.mrf.mxu0
      %955 = vdwg.mxu0
      %v956 = vsel %vm745, %v523, 0
      %v958 = vsel %vm745, %v524, 0
      %v960 = vsel %vm745, %v525, 0
      %v962 = vsel %vm745, %v526, 0
      %v964 = vsel %vm745, %v527, 0
      %v966 = vsel %vm745, %v528, 0
      %v968 = vsel %vm745, %v529, 0
      %v970 = vsel %vm745, %v530, 0
      %v972 = vsel %vm745, %v531, 0
      %v974 = vsel %vm745, %v532, 0
      %v976 = vsel %vm745, %v533, 0
      %v978 = vsel %vm745, %v534, 0
      %v980 = vsel %vm745, %v535, 0
      %v982 = vsel %vm745, %v536, 0
      %v984 = vsel %vm745, %v537, 0
      %v987 = vsel %vm791, %v555, 0
      %989 = vmatprep.subr.bf16.mxu0 0
      %990 = vmatpush1.bf16.msra.mxu0 0
      %991 = vmatprep.subr.bf16.mxu0 0
      %992 = vmatpush1.bf16.msra.mxu0 0
      %993 = vmatprep.subr.bf16.mxu0 0
      %994 = vmatpush1.bf16.msra.mxu0 0
      %995 = vmatprep.subr.bf16.mxu0 0
      %996 = vmatpush1.bf16.msra.mxu0 0
      %997 = vmatprep.subr.bf16.mxu0 0
      %998 = vmatpush1.bf16.msra.mxu0 0
      %999 = vmatprep.subr.bf16.mxu0 0
      %1000 = vmatpush1.bf16.msra.mxu0 0
      %1001 = vmatprep.subr.bf16.mxu0 0
      %1002 = vmatpush1.bf16.msra.mxu0 0
      %1003 = vmatprep.subr.bf16.mxu0 0
      %1004 = vmatpush1.bf16.msra.mxu0 %v987
      %1005 = vmatprep.subr.bf16.mxu0 0
      %1006 = vmatpush2.bf16.msra.mxu0 0
      %1007 = vmatprep.subr.bf16.mxu0 0
      %1008 = vmatpush2.bf16.msra.mxu0 0
      %1009 = vmatprep.subr.bf16.mxu0 0
      %1010 = vmatpush2.bf16.msra.mxu0 0
      %1011 = vmatprep.subr.bf16.mxu0 0
      %1012 = vmatpush2.bf16.msra.mxu0 0
      %1013 = vmatprep.subr.bf16.mxu0 0
      %1014 = vmatpush2.bf16.msra.mxu0 0
      %1015 = vmatprep.subr.bf16.mxu0 0
      %1016 = vmatpush2.bf16.msra.mxu0 0
      %1017 = vmatprep.subr.bf16.mxu0 0
      %1018 = vmatpush2.bf16.msra.mxu0 0
      %1019 = vmatprep.subr.bf16.mxu0 0
      %1020 = vmatpush2.bf16.msra.mxu0 0
      %1021 = vmatprep.mubr.bf16.mxu0 0
      %1022 = vmatmul.mubr.bf16.gmra.mxu0 %v956
      %v1023 = vpop.f32.mrf.mxu0
      %v1024 = vadd.f32 %v830, %v1023
      %v1025 = vpop.f32.mrf.mxu0
      %v1026 = vpop.f32.mrf.mxu0
      %v1027 = vadd.f32 %v833, %v1026
      %v1028 = vpop.f32.mrf.mxu0
      %1029 = vmatprep.mubr.bf16.mxu0 0
      %1030 = vmatmul.mubr.bf16.gmra.mxu0 %v958
      %v1031 = vpop.f32.mrf.mxu0
      %v1032 = vadd.f32 %v838, %v1031
      %v1033 = vpop.f32.mrf.mxu0
      %v1034 = vpop.f32.mrf.mxu0
      %v1035 = vadd.f32 %v841, %v1034
      %v1036 = vpop.f32.mrf.mxu0
      %1037 = vmatprep.mubr.bf16.mxu0 0
      %1038 = vmatmul.mubr.bf16.gmra.mxu0 %v956
      %v1039 = vpop.f32.mrf.mxu0
      %v1040 = vadd.f32 %v846, %v1039
      %v1041 = vpop.f32.mrf.mxu0
      %v1042 = vpop.f32.mrf.mxu0
      %v1043 = vadd.f32 %v849, %v1042
      %v1044 = vpop.f32.mrf.mxu0
      %1045 = vmatprep.mubr.bf16.mxu0 0
      %1046 = vmatmul.mubr.bf16.gmra.mxu0 %v960
      %v1047 = vpop.f32.mrf.mxu0
      %v1048 = vadd.f32 %v854, %v1047
      %v1049 = vpop.f32.mrf.mxu0
      %v1050 = vpop.f32.mrf.mxu0
      %v1051 = vadd.f32 %v857, %v1050
      %v1052 = vpop.f32.mrf.mxu0
      %1053 = vmatprep.mubr.bf16.mxu0 0
      %1054 = vmatmul.mubr.bf16.gmra.mxu0 %v962
      %v1055 = vpop.f32.mrf.mxu0
      %v1056 = vadd.f32 %v862, %v1055
      %v1057 = vpop.f32.mrf.mxu0
      %v1058 = vpop.f32.mrf.mxu0
      %v1059 = vadd.f32 %v865, %v1058
      %v1060 = vpop.f32.mrf.mxu0
      %1061 = vmatprep.mubr.bf16.mxu0 0
      %1062 = vmatmul.mubr.bf16.gmra.mxu0 %v964
      %v1063 = vpop.f32.mrf.mxu0
      %v1064 = vadd.f32 %v870, %v1063
      %v1065 = vpop.f32.mrf.mxu0
      %v1066 = vpop.f32.mrf.mxu0
      %v1067 = vadd.f32 %v873, %v1066
      %v1068 = vpop.f32.mrf.mxu0
      %1069 = vmatprep.mubr.bf16.mxu0 0
      %1070 = vmatmul.mubr.bf16.gmra.mxu0 %v966
      %v1071 = vpop.f32.mrf.mxu0
      %v1072 = vadd.f32 %v878, %v1071
      %v1073 = vpop.f32.mrf.mxu0
      %v1074 = vpop.f32.mrf.mxu0
      %v1075 = vadd.f32 %v881, %v1074
      %v1076 = vpop.f32.mrf.mxu0
      %1077 = vmatprep.mubr.bf16.mxu0 0
      %1078 = vmatmul.mubr.bf16.gmra.mxu0 %v968
      %v1079 = vpop.f32.mrf.mxu0
      %v1080 = vadd.f32 %v886, %v1079
      %v1081 = vpop.f32.mrf.mxu0
      %v1082 = vpop.f32.mrf.mxu0
      %v1083 = vadd.f32 %v889, %v1082
      %v1084 = vpop.f32.mrf.mxu0
      %1085 = vmatprep.mubr.bf16.mxu0 0
      %1086 = vmatmul.mubr.bf16.gmra.mxu0 %v970
      %v1087 = vpop.f32.mrf.mxu0
      %v1088 = vadd.f32 %v894, %v1087
      %v1089 = vpop.f32.mrf.mxu0
      %v1090 = vpop.f32.mrf.mxu0
      %v1091 = vadd.f32 %v897, %v1090
      %v1092 = vpop.f32.mrf.mxu0
      %1093 = vmatprep.mubr.bf16.mxu0 0
      %1094 = vmatmul.mubr.bf16.gmra.mxu0 %v972
      %v1095 = vpop.f32.mrf.mxu0
      %v1096 = vadd.f32 %v902, %v1095
      %v1097 = vpop.f32.mrf.mxu0
      %v1098 = vpop.f32.mrf.mxu0
      %v1099 = vadd.f32 %v905, %v1098
      %v1100 = vpop.f32.mrf.mxu0
      %1101 = vmatprep.mubr.bf16.mxu0 0
      %1102 = vmatmul.mubr.bf16.gmra.mxu0 %v974
      %v1103 = vpop.f32.mrf.mxu0
      %v1104 = vadd.f32 %v910, %v1103
      %v1105 = vpop.f32.mrf.mxu0
      %v1106 = vpop.f32.mrf.mxu0
      %v1107 = vadd.f32 %v913, %v1106
      %v1108 = vpop.f32.mrf.mxu0
      %1109 = vmatprep.mubr.bf16.mxu0 0
      %1110 = vmatmul.mubr.bf16.gmra.mxu0 %v976
      %v1111 = vpop.f32.mrf.mxu0
      %v1112 = vadd.f32 %v918, %v1111
      %v1113 = vpop.f32.mrf.mxu0
      %v1114 = vpop.f32.mrf.mxu0
      %v1115 = vadd.f32 %v921, %v1114
      %v1116 = vpop.f32.mrf.mxu0
      %1117 = vmatprep.mubr.bf16.mxu0 0
      %1118 = vmatmul.mubr.bf16.gmra.mxu0 %v978
      %v1119 = vpop.f32.mrf.mxu0
      %v1120 = vadd.f32 %v926, %v1119
      %v1121 = vpop.f32.mrf.mxu0
      %v1122 = vpop.f32.mrf.mxu0
      %v1123 = vadd.f32 %v929, %v1122
      %v1124 = vpop.f32.mrf.mxu0
      %1125 = vmatprep.mubr.bf16.mxu0 0
      %1126 = vmatmul.mubr.bf16.gmra.mxu0 %v980
      %v1127 = vpop.f32.mrf.mxu0
      %v1128 = vadd.f32 %v934, %v1127
      %v1129 = vpop.f32.mrf.mxu0
      %v1130 = vpop.f32.mrf.mxu0
      %v1131 = vadd.f32 %v937, %v1130
      %v1132 = vpop.f32.mrf.mxu0
      %1133 = vmatprep.mubr.bf16.mxu0 0
      %1134 = vmatmul.mubr.bf16.gmra.mxu0 %v982
      %v1135 = vpop.f32.mrf.mxu0
      %v1136 = vadd.f32 %v942, %v1135
      %v1137 = vpop.f32.mrf.mxu0
      %v1138 = vpop.f32.mrf.mxu0
      %v1139 = vadd.f32 %v945, %v1138
      %v1140 = vpop.f32.mrf.mxu0
      %1141 = vmatprep.mubr.bf16.mxu0 0
      %1142 = vmatmul.mubr.bf16.gmra.mxu0 %v984
      %v1143 = vpop.f32.mrf.mxu0
      %v1144 = vadd.f32 %v950, %v1143
      %v1145 = vpop.f32.mrf.mxu0
      %v1146 = vpop.f32.mrf.mxu0
      %v1147 = vadd.f32 %v953, %v1146
      %v1148 = vpop.f32.mrf.mxu0
      %1149 = vdwg.mxu0
      %vm1180 = vcmask 1046528
      %v1181 = vrot.slane %v523, 1
      %v1182 = vrot.slane %v539, 1
      %v1183 = vsel %vm1180, %v1181, %v1182
      %v1184 = vrot.slane %v524, 1
      %v1185 = vrot.slane %v540, 1
      %v1186 = vsel %vm1180, %v1184, %v1185
      %v1187 = vrot.slane %v525, 1
      %v1188 = vrot.slane %v541, 1
      %v1189 = vsel %vm1180, %v1187, %v1188
      %v1190 = vrot.slane %v526, 1
      %v1191 = vrot.slane %v542, 1
      %v1192 = vsel %vm1180, %v1190, %v1191
      %v1193 = vrot.slane %v527, 1
      %v1194 = vrot.slane %v543, 1
      %v1195 = vsel %vm1180, %v1193, %v1194
      %v1196 = vrot.slane %v528, 1
      %v1197 = vrot.slane %v544, 1
      %v1198 = vsel %vm1180, %v1196, %v1197
      %v1199 = vrot.slane %v529, 1
      %v1200 = vrot.slane %v545, 1
      %v1201 = vsel %vm1180, %v1199, %v1200
      %v1202 = vrot.slane %v530, 1
      %v1203 = vrot.slane %v546, 1
      %v1204 = vsel %vm1180, %v1202, %v1203
      %v1205 = vrot.slane %v531, 1
      %v1206 = vrot.slane %v547, 1
      %v1207 = vsel %vm1180, %v1205, %v1206
      %v1208 = vrot.slane %v532, 1
      %v1209 = vrot.slane %v548, 1
      %v1210 = vsel %vm1180, %v1208, %v1209
      %v1211 = vrot.slane %v533, 1
      %v1212 = vrot.slane %v549, 1
      %v1213 = vsel %vm1180, %v1211, %v1212
      %v1214 = vrot.slane %v534, 1
      %v1215 = vrot.slane %v550, 1
      %v1216 = vsel %vm1180, %v1214, %v1215
      %v1217 = vrot.slane %v535, 1
      %v1218 = vrot.slane %v551, 1
      %v1219 = vsel %vm1180, %v1217, %v1218
      %v1220 = vrot.slane %v536, 1
      %v1221 = vrot.slane %v552, 1
      %v1222 = vsel %vm1180, %v1220, %v1221
      %v1223 = vrot.slane %v537, 1
      %v1224 = vrot.slane %v553, 1
      %v1225 = vsel %vm1180, %v1223, %v1224
      %v1227 = vsel %vm745, %v1183, 0
      %v1230 = vsel %vm745, %v1186, 0
      %v1233 = vsel %vm745, %v1189, 0
      %v1236 = vsel %vm745, %v1192, 0
      %v1239 = vsel %vm745, %v1195, 0
      %v1242 = vsel %vm745, %v1198, 0
      %v1245 = vsel %vm745, %v1201, 0
      %v1248 = vsel %vm745, %v1204, 0
      %v1251 = vsel %vm745, %v1207, 0
      %v1254 = vsel %vm745, %v1210, 0
      %v1257 = vsel %vm745, %v1213, 0
      %v1260 = vsel %vm745, %v1216, 0
      %v1263 = vsel %vm745, %v1219, 0
      %v1266 = vsel %vm745, %v1222, 0
      %v1269 = vsel %vm745, %v1225, 0
      %v1272 = vsel %vm791, %v557, 0
      %1274 = vmatprep.subr.bf16.mxu0 0
      %1275 = vmatpush1.bf16.msra.mxu0 0
      %1276 = vmatprep.subr.bf16.mxu0 0
      %1277 = vmatpush1.bf16.msra.mxu0 0
      %1278 = vmatprep.subr.bf16.mxu0 0
      %1279 = vmatpush1.bf16.msra.mxu0 0
      %1280 = vmatprep.subr.bf16.mxu0 0
      %1281 = vmatpush1.bf16.msra.mxu0 0
      %1282 = vmatprep.subr.bf16.mxu0 0
      %1283 = vmatpush1.bf16.msra.mxu0 0
      %1284 = vmatprep.subr.bf16.mxu0 0
      %1285 = vmatpush1.bf16.msra.mxu0 0
      %1286 = vmatprep.subr.bf16.mxu0 0
      %1287 = vmatpush1.bf16.msra.mxu0 0
      %1288 = vmatprep.subr.bf16.mxu0 0
      %1289 = vmatpush1.bf16.msra.mxu0 %v1272
      %1290 = vmatprep.subr.bf16.mxu0 0
      %1291 = vmatpush2.bf16.msra.mxu0 0
      %1292 = vmatprep.subr.bf16.mxu0 0
      %1293 = vmatpush2.bf16.msra.mxu0 0
      %1294 = vmatprep.subr.bf16.mxu0 0
      %1295 = vmatpush2.bf16.msra.mxu0 0
      %1296 = vmatprep.subr.bf16.mxu0 0
      %1297 = vmatpush2.bf16.msra.mxu0 0
      %1298 = vmatprep.subr.bf16.mxu0 0
      %1299 = vmatpush2.bf16.msra.mxu0 0
      %1300 = vmatprep.subr.bf16.mxu0 0
      %1301 = vmatpush2.bf16.msra.mxu0 0
      %1302 = vmatprep.subr.bf16.mxu0 0
      %1303 = vmatpush2.bf16.msra.mxu0 0
      %1304 = vmatprep.subr.bf16.mxu0 0
      %1305 = vmatpush2.bf16.msra.mxu0 0
      %1306 = vmatprep.mubr.bf16.mxu0 0
      %1307 = vmatmul.mubr.bf16.gmra.mxu0 %v1227
      %v1308 = vpop.f32.mrf.mxu0
      %v1309 = vadd.f32 0.0, %v1308
      %v1310 = vpop.f32.mrf.mxu0
      %v1311 = vpop.f32.mrf.mxu0
      %v1312 = vadd.f32 0.0, %v1311
      %v1313 = vpop.f32.mrf.mxu0
      %1314 = vmatprep.mubr.bf16.mxu0 0
      %1315 = vmatmul.mubr.bf16.gmra.mxu0 %v1230
      %v1316 = vpop.f32.mrf.mxu0
      %v1317 = vadd.f32 0.0, %v1316
      %v1318 = vpop.f32.mrf.mxu0
      %v1319 = vpop.f32.mrf.mxu0
      %v1320 = vadd.f32 0.0, %v1319
      %v1321 = vpop.f32.mrf.mxu0
      %1322 = vmatprep.mubr.bf16.mxu0 0
      %1323 = vmatmul.mubr.bf16.gmra.mxu0 %v1227
      %v1324 = vpop.f32.mrf.mxu0
      %v1325 = vadd.f32 0.0, %v1324
      %v1326 = vpop.f32.mrf.mxu0
      %v1327 = vpop.f32.mrf.mxu0
      %v1328 = vadd.f32 0.0, %v1327
      %v1329 = vpop.f32.mrf.mxu0
      %1330 = vmatprep.mubr.bf16.mxu0 0
      %1331 = vmatmul.mubr.bf16.gmra.mxu0 %v1233
      %v1332 = vpop.f32.mrf.mxu0
      %v1333 = vadd.f32 0.0, %v1332
      %v1334 = vpop.f32.mrf.mxu0
      %v1335 = vpop.f32.mrf.mxu0
      %v1336 = vadd.f32 0.0, %v1335
      %v1337 = vpop.f32.mrf.mxu0
      %1338 = vmatprep.mubr.bf16.mxu0 0
      %1339 = vmatmul.mubr.bf16.gmra.mxu0 %v1236
      %v1340 = vpop.f32.mrf.mxu0
      %v1341 = vadd.f32 0.0, %v1340
      %v1342 = vpop.f32.mrf.mxu0
      %v1343 = vpop.f32.mrf.mxu0
      %v1344 = vadd.f32 0.0, %v1343
      %v1345 = vpop.f32.mrf.mxu0
      %1346 = vmatprep.mubr.bf16.mxu0 0
      %1347 = vmatmul.mubr.bf16.gmra.mxu0 %v1239
      %v1348 = vpop.f32.mrf.mxu0
      %v1349 = vadd.f32 0.0, %v1348
      %v1350 = vpop.f32.mrf.mxu0
      %v1351 = vpop.f32.mrf.mxu0
      %v1352 = vadd.f32 0.0, %v1351
      %v1353 = vpop.f32.mrf.mxu0
      %1354 = vmatprep.mubr.bf16.mxu0 0
      %1355 = vmatmul.mubr.bf16.gmra.mxu0 %v1242
      %v1356 = vpop.f32.mrf.mxu0
      %v1357 = vadd.f32 0.0, %v1356
      %v1358 = vpop.f32.mrf.mxu0
      %v1359 = vpop.f32.mrf.mxu0
      %v1360 = vadd.f32 0.0, %v1359
      %v1361 = vpop.f32.mrf.mxu0
      %1362 = vmatprep.mubr.bf16.mxu0 0
      %1363 = vmatmul.mubr.bf16.gmra.mxu0 %v1245
      %v1364 = vpop.f32.mrf.mxu0
      %v1365 = vadd.f32 0.0, %v1364
      %v1366 = vpop.f32.mrf.mxu0
      %v1367 = vpop.f32.mrf.mxu0
      %v1368 = vadd.f32 0.0, %v1367
      %v1369 = vpop.f32.mrf.mxu0
      %1370 = vmatprep.mubr.bf16.mxu0 0
      %1371 = vmatmul.mubr.bf16.gmra.mxu0 %v1248
      %v1372 = vpop.f32.mrf.mxu0
      %v1373 = vadd.f32 0.0, %v1372
      %v1374 = vpop.f32.mrf.mxu0
      %v1375 = vpop.f32.mrf.mxu0
      %v1376 = vadd.f32 0.0, %v1375
      %v1377 = vpop.f32.mrf.mxu0
      %1378 = vmatprep.mubr.bf16.mxu0 0
      %1379 = vmatmul.mubr.bf16.gmra.mxu0 %v1251
      %v1380 = vpop.f32.mrf.mxu0
      %v1381 = vadd.f32 0.0, %v1380
      %v1382 = vpop.f32.mrf.mxu0
      %v1383 = vpop.f32.mrf.mxu0
      %v1384 = vadd.f32 0.0, %v1383
      %v1385 = vpop.f32.mrf.mxu0
      %1386 = vmatprep.mubr.bf16.mxu0 0
      %1387 = vmatmul.mubr.bf16.gmra.mxu0 %v1254
      %v1388 = vpop.f32.mrf.mxu0
      %v1389 = vadd.f32 0.0, %v1388
      %v1390 = vpop.f32.mrf.mxu0
      %v1391 = vpop.f32.mrf.mxu0
      %v1392 = vadd.f32 0.0, %v1391
      %v1393 = vpop.f32.mrf.mxu0
      %1394 = vmatprep.mubr.bf16.mxu0 0
      %1395 = vmatmul.mubr.bf16.gmra.mxu0 %v1257
      %v1396 = vpop.f32.mrf.mxu0
      %v1397 = vadd.f32 0.0, %v1396
      %v1398 = vpop.f32.mrf.mxu0
      %v1399 = vpop.f32.mrf.mxu0
      %v1400 = vadd.f32 0.0, %v1399
      %v1401 = vpop.f32.mrf.mxu0
      %1402 = vmatprep.mubr.bf16.mxu0 0
      %1403 = vmatmul.mubr.bf16.gmra.mxu0 %v1260
      %v1404 = vpop.f32.mrf.mxu0
      %v1405 = vadd.f32 0.0, %v1404
      %v1406 = vpop.f32.mrf.mxu0
      %v1407 = vpop.f32.mrf.mxu0
      %v1408 = vadd.f32 0.0, %v1407
      %v1409 = vpop.f32.mrf.mxu0
      %1410 = vmatprep.mubr.bf16.mxu0 0
      %1411 = vmatmul.mubr.bf16.gmra.mxu0 %v1263
      %v1412 = vpop.f32.mrf.mxu0
      %v1413 = vadd.f32 0.0, %v1412
      %v1414 = vpop.f32.mrf.mxu0
      %v1415 = vpop.f32.mrf.mxu0
      %v1416 = vadd.f32 0.0, %v1415
      %v1417 = vpop.f32.mrf.mxu0
      %1418 = vmatprep.mubr.bf16.mxu0 0
      %1419 = vmatmul.mubr.bf16.gmra.mxu0 %v1266
      %v1420 = vpop.f32.mrf.mxu0
      %v1421 = vadd.f32 0.0, %v1420
      %v1422 = vpop.f32.mrf.mxu0
      %v1423 = vpop.f32.mrf.mxu0
      %v1424 = vadd.f32 0.0, %v1423
      %v1425 = vpop.f32.mrf.mxu0
      %1426 = vmatprep.mubr.bf16.mxu0 0
      %1427 = vmatmul.mubr.bf16.gmra.mxu0 %v1269
      %v1428 = vpop.f32.mrf.mxu0
      %v1429 = vadd.f32 0.0, %v1428
      %v1430 = vpop.f32.mrf.mxu0
      %v1431 = vpop.f32.mrf.mxu0
      %v1432 = vadd.f32 0.0, %v1431
      %v1433 = vpop.f32.mrf.mxu0
      %1434 = vdwg.mxu0
      %v1435 = vadd.f32 %v1024, %v1309
      %v1436 = vadd.f32 %v1027, %v1312
      %v1437 = vadd.f32 %v1032, %v1317
      %v1438 = vadd.f32 %v1035, %v1320
      %v1439 = vadd.f32 %v1040, %v1325
      %v1440 = vadd.f32 %v1043, %v1328
      %v1441 = vadd.f32 %v1048, %v1333
      %v1442 = vadd.f32 %v1051, %v1336
      %v1443 = vadd.f32 %v1056, %v1341
      %v1444 = vadd.f32 %v1059, %v1344
      %v1445 = vadd.f32 %v1064, %v1349
      %v1446 = vadd.f32 %v1067, %v1352
      %v1447 = vadd.f32 %v1072, %v1357
      %v1448 = vadd.f32 %v1075, %v1360
      %v1449 = vadd.f32 %v1080, %v1365
      %v1450 = vadd.f32 %v1083, %v1368
      %v1451 = vadd.f32 %v1088, %v1373
      %v1452 = vadd.f32 %v1091, %v1376
      %v1453 = vadd.f32 %v1096, %v1381
      %v1454 = vadd.f32 %v1099, %v1384
      %v1455 = vadd.f32 %v1104, %v1389
      %v1456 = vadd.f32 %v1107, %v1392
      %v1457 = vadd.f32 %v1112, %v1397
      %v1458 = vadd.f32 %v1115, %v1400
      %v1459 = vadd.f32 %v1120, %v1405
      %v1460 = vadd.f32 %v1123, %v1408
      %v1461 = vadd.f32 %v1128, %v1413
      %v1462 = vadd.f32 %v1131, %v1416
      %v1463 = vadd.f32 %v1136, %v1421
      %v1464 = vadd.f32 %v1139, %v1424
      %v1465 = vadd.f32 %v1144, %v1429
      %v1466 = vadd.f32 %v1147, %v1432
      %v1468 = vsel %vm745, %v538, 0
      %v1471 = vsel %vm791, %v558, 0
      %1473 = vmatprep.subr.bf16.mxu0 0
      %1474 = vmatpush1.bf16.msra.mxu0 0
      %1475 = vmatprep.subr.bf16.mxu0 0
      %1476 = vmatpush1.bf16.msra.mxu0 0
      %1477 = vmatprep.subr.bf16.mxu0 0
      %1478 = vmatpush1.bf16.msra.mxu0 0
      %1479 = vmatprep.subr.bf16.mxu0 0
      %1480 = vmatpush1.bf16.msra.mxu0 0
      %1481 = vmatprep.subr.bf16.mxu0 0
      %1482 = vmatpush1.bf16.msra.mxu0 0
      %1483 = vmatprep.subr.bf16.mxu0 0
      %1484 = vmatpush1.bf16.msra.mxu0 0
      %1485 = vmatprep.subr.bf16.mxu0 0
      %1486 = vmatpush1.bf16.msra.mxu0 0
      %1487 = vmatprep.subr.bf16.mxu0 0
      %1488 = vmatpush1.bf16.msra.mxu0 %v1471
      %1489 = vmatprep.subr.bf16.mxu0 0
      %1490 = vmatpush2.bf16.msra.mxu0 0
      %1491 = vmatprep.subr.bf16.mxu0 0
      %1492 = vmatpush2.bf16.msra.mxu0 0
      %1493 = vmatprep.subr.bf16.mxu0 0
      %1494 = vmatpush2.bf16.msra.mxu0 0
      %1495 = vmatprep.subr.bf16.mxu0 0
      %1496 = vmatpush2.bf16.msra.mxu0 0
      %1497 = vmatprep.subr.bf16.mxu0 0
      %1498 = vmatpush2.bf16.msra.mxu0 0
      %1499 = vmatprep.subr.bf16.mxu0 0
      %1500 = vmatpush2.bf16.msra.mxu0 0
      %1501 = vmatprep.subr.bf16.mxu0 0
      %1502 = vmatpush2.bf16.msra.mxu0 0
      %1503 = vmatprep.subr.bf16.mxu0 0
      %1504 = vmatpush2.bf16.msra.mxu0 0
      %1505 = vmatprep.mubr.bf16.mxu0 0
      %1506 = vmatmul.mubr.bf16.gmra.mxu0 %v958
      %v1507 = vpop.f32.mrf.mxu0
      %v1508 = vadd.f32 0.0, %v1507
      %v1509 = vpop.f32.mrf.mxu0
      %v1510 = vpop.f32.mrf.mxu0
      %v1511 = vadd.f32 0.0, %v1510
      %v1512 = vpop.f32.mrf.mxu0
      %1513 = vmatprep.mubr.bf16.mxu0 0
      %1514 = vmatmul.mubr.bf16.gmra.mxu0 %v956
      %v1515 = vpop.f32.mrf.mxu0
      %v1516 = vadd.f32 0.0, %v1515
      %v1517 = vpop.f32.mrf.mxu0
      %v1518 = vpop.f32.mrf.mxu0
      %v1519 = vadd.f32 0.0, %v1518
      %v1520 = vpop.f32.mrf.mxu0
      %1521 = vmatprep.mubr.bf16.mxu0 0
      %1522 = vmatmul.mubr.bf16.gmra.mxu0 %v960
      %v1523 = vpop.f32.mrf.mxu0
      %v1524 = vadd.f32 0.0, %v1523
      %v1525 = vpop.f32.mrf.mxu0
      %v1526 = vpop.f32.mrf.mxu0
      %v1527 = vadd.f32 0.0, %v1526
      %v1528 = vpop.f32.mrf.mxu0
      %1529 = vmatprep.mubr.bf16.mxu0 0
      %1530 = vmatmul.mubr.bf16.gmra.mxu0 %v962
      %v1531 = vpop.f32.mrf.mxu0
      %v1532 = vadd.f32 0.0, %v1531
      %v1533 = vpop.f32.mrf.mxu0
      %v1534 = vpop.f32.mrf.mxu0
      %v1535 = vadd.f32 0.0, %v1534
      %v1536 = vpop.f32.mrf.mxu0
      %1537 = vmatprep.mubr.bf16.mxu0 0
      %1538 = vmatmul.mubr.bf16.gmra.mxu0 %v964
      %v1539 = vpop.f32.mrf.mxu0
      %v1540 = vadd.f32 0.0, %v1539
      %v1541 = vpop.f32.mrf.mxu0
      %v1542 = vpop.f32.mrf.mxu0
      %v1543 = vadd.f32 0.0, %v1542
      %v1544 = vpop.f32.mrf.mxu0
      %1545 = vmatprep.mubr.bf16.mxu0 0
      %1546 = vmatmul.mubr.bf16.gmra.mxu0 %v966
      %v1547 = vpop.f32.mrf.mxu0
      %v1548 = vadd.f32 0.0, %v1547
      %v1549 = vpop.f32.mrf.mxu0
      %v1550 = vpop.f32.mrf.mxu0
      %v1551 = vadd.f32 0.0, %v1550
      %v1552 = vpop.f32.mrf.mxu0
      %1553 = vmatprep.mubr.bf16.mxu0 0
      %1554 = vmatmul.mubr.bf16.gmra.mxu0 %v968
      %v1555 = vpop.f32.mrf.mxu0
      %v1556 = vadd.f32 0.0, %v1555
      %v1557 = vpop.f32.mrf.mxu0
      %v1558 = vpop.f32.mrf.mxu0
      %v1559 = vadd.f32 0.0, %v1558
      %v1560 = vpop.f32.mrf.mxu0
      %1561 = vmatprep.mubr.bf16.mxu0 0
      %1562 = vmatmul.mubr.bf16.gmra.mxu0 %v970
      %v1563 = vpop.f32.mrf.mxu0
      %v1564 = vadd.f32 0.0, %v1563
      %v1565 = vpop.f32.mrf.mxu0
      %v1566 = vpop.f32.mrf.mxu0
      %v1567 = vadd.f32 0.0, %v1566
      %v1568 = vpop.f32.mrf.mxu0
      %1569 = vmatprep.mubr.bf16.mxu0 0
      %1570 = vmatmul.mubr.bf16.gmra.mxu0 %v972
      %v1571 = vpop.f32.mrf.mxu0
      %v1572 = vadd.f32 0.0, %v1571
      %v1573 = vpop.f32.mrf.mxu0
      %v1574 = vpop.f32.mrf.mxu0
      %v1575 = vadd.f32 0.0, %v1574
      %v1576 = vpop.f32.mrf.mxu0
      %1577 = vmatprep.mubr.bf16.mxu0 0
      %1578 = vmatmul.mubr.bf16.gmra.mxu0 %v974
      %v1579 = vpop.f32.mrf.mxu0
      %v1580 = vadd.f32 0.0, %v1579
      %v1581 = vpop.f32.mrf.mxu0
      %v1582 = vpop.f32.mrf.mxu0
      %v1583 = vadd.f32 0.0, %v1582
      %v1584 = vpop.f32.mrf.mxu0
      %1585 = vmatprep.mubr.bf16.mxu0 0
      %1586 = vmatmul.mubr.bf16.gmra.mxu0 %v976
      %v1587 = vpop.f32.mrf.mxu0
      %v1588 = vadd.f32 0.0, %v1587
      %v1589 = vpop.f32.mrf.mxu0
      %v1590 = vpop.f32.mrf.mxu0
      %v1591 = vadd.f32 0.0, %v1590
      %v1592 = vpop.f32.mrf.mxu0
      %1593 = vmatprep.mubr.bf16.mxu0 0
      %1594 = vmatmul.mubr.bf16.gmra.mxu0 %v978
      %v1595 = vpop.f32.mrf.mxu0
      %v1596 = vadd.f32 0.0, %v1595
      %v1597 = vpop.f32.mrf.mxu0
      %v1598 = vpop.f32.mrf.mxu0
      %v1599 = vadd.f32 0.0, %v1598
      %v1600 = vpop.f32.mrf.mxu0
      %1601 = vmatprep.mubr.bf16.mxu0 0
      %1602 = vmatmul.mubr.bf16.gmra.mxu0 %v980
      %v1603 = vpop.f32.mrf.mxu0
      %v1604 = vadd.f32 0.0, %v1603
      %v1605 = vpop.f32.mrf.mxu0
      %v1606 = vpop.f32.mrf.mxu0
      %v1607 = vadd.f32 0.0, %v1606
      %v1608 = vpop.f32.mrf.mxu0
      %1609 = vmatprep.mubr.bf16.mxu0 0
      %1610 = vmatmul.mubr.bf16.gmra.mxu0 %v982
      %v1611 = vpop.f32.mrf.mxu0
      %v1612 = vadd.f32 0.0, %v1611
      %v1613 = vpop.f32.mrf.mxu0
      %v1614 = vpop.f32.mrf.mxu0
      %v1615 = vadd.f32 0.0, %v1614
      %v1616 = vpop.f32.mrf.mxu0
      %1617 = vmatprep.mubr.bf16.mxu0 0
      %1618 = vmatmul.mubr.bf16.gmra.mxu0 %v984
      %v1619 = vpop.f32.mrf.mxu0
      %v1620 = vadd.f32 0.0, %v1619
      %v1621 = vpop.f32.mrf.mxu0
      %v1622 = vpop.f32.mrf.mxu0
      %v1623 = vadd.f32 0.0, %v1622
      %v1624 = vpop.f32.mrf.mxu0
      %1625 = vmatprep.mubr.bf16.mxu0 0
      %1626 = vmatmul.mubr.bf16.gmra.mxu0 %v1468
      %v1627 = vpop.f32.mrf.mxu0
      %v1628 = vadd.f32 0.0, %v1627
      %v1629 = vpop.f32.mrf.mxu0
      %v1630 = vpop.f32.mrf.mxu0
      %v1631 = vadd.f32 0.0, %v1630
      %v1632 = vpop.f32.mrf.mxu0
      %1633 = vdwg.mxu0
      %v1634 = vadd.f32 %v1435, %v1508
      %v1635 = vadd.f32 %v1436, %v1511
      %v1636 = vadd.f32 %v1437, %v1516
      %v1637 = vadd.f32 %v1438, %v1519
      %v1638 = vadd.f32 %v1439, %v1524
      %v1639 = vadd.f32 %v1440, %v1527
      %v1640 = vadd.f32 %v1441, %v1532
      %v1641 = vadd.f32 %v1442, %v1535
      %v1642 = vadd.f32 %v1443, %v1540
      %v1643 = vadd.f32 %v1444, %v1543
      %v1644 = vadd.f32 %v1445, %v1548
      %v1645 = vadd.f32 %v1446, %v1551
      %v1646 = vadd.f32 %v1447, %v1556
      %v1647 = vadd.f32 %v1448, %v1559
      %v1648 = vadd.f32 %v1449, %v1564
      %v1649 = vadd.f32 %v1450, %v1567
      %v1650 = vadd.f32 %v1451, %v1572
      %v1651 = vadd.f32 %v1452, %v1575
      %v1652 = vadd.f32 %v1453, %v1580
      %v1653 = vadd.f32 %v1454, %v1583
      %v1654 = vadd.f32 %v1455, %v1588
      %v1655 = vadd.f32 %v1456, %v1591
      %v1656 = vadd.f32 %v1457, %v1596
      %v1657 = vadd.f32 %v1458, %v1599
      %v1658 = vadd.f32 %v1459, %v1604
      %v1659 = vadd.f32 %v1460, %v1607
      %v1660 = vadd.f32 %v1461, %v1612
      %v1661 = vadd.f32 %v1462, %v1615
      %v1662 = vadd.f32 %v1463, %v1620
      %v1663 = vadd.f32 %v1464, %v1623
      %v1664 = vadd.f32 %v1465, %v1628
      %v1665 = vadd.f32 %v1466, %v1631
      %v1666 = vshrl.u32 %v538, 16
      %v1668 = vshll.u32 %v538, 16
      %v1670 = vrot.slane %v1668, 1
      %v1671 = vor.u32 %v1666, %v1670
      %v1673 = vshll.u32 %v554, 16
      %v1675 = vrot.slane %v1673, 1
      %v1676 = vsel %vm564, %v1671, %v1675
      %v1678 = vsel %vm745, %v1676, 0
      %v1681 = vsel %vm791, %v559, 0
      %1683 = vmatprep.subr.bf16.mxu0 0
      %1684 = vmatpush1.bf16.msra.mxu0 0
      %1685 = vmatprep.subr.bf16.mxu0 0
      %1686 = vmatpush1.bf16.msra.mxu0 0
      %1687 = vmatprep.subr.bf16.mxu0 0
      %1688 = vmatpush1.bf16.msra.mxu0 0
      %1689 = vmatprep.subr.bf16.mxu0 0
      %1690 = vmatpush1.bf16.msra.mxu0 0
      %1691 = vmatprep.subr.bf16.mxu0 0
      %1692 = vmatpush1.bf16.msra.mxu0 0
      %1693 = vmatprep.subr.bf16.mxu0 0
      %1694 = vmatpush1.bf16.msra.mxu0 0
      %1695 = vmatprep.subr.bf16.mxu0 0
      %1696 = vmatpush1.bf16.msra.mxu0 0
      %1697 = vmatprep.subr.bf16.mxu0 0
      %1698 = vmatpush1.bf16.msra.mxu0 %v1681
      %1699 = vmatprep.subr.bf16.mxu0 0
      %1700 = vmatpush2.bf16.msra.mxu0 0
      %1701 = vmatprep.subr.bf16.mxu0 0
      %1702 = vmatpush2.bf16.msra.mxu0 0
      %1703 = vmatprep.subr.bf16.mxu0 0
      %1704 = vmatpush2.bf16.msra.mxu0 0
      %1705 = vmatprep.subr.bf16.mxu0 0
      %1706 = vmatpush2.bf16.msra.mxu0 0
      %1707 = vmatprep.subr.bf16.mxu0 0
      %1708 = vmatpush2.bf16.msra.mxu0 0
      %1709 = vmatprep.subr.bf16.mxu0 0
      %1710 = vmatpush2.bf16.msra.mxu0 0
      %1711 = vmatprep.subr.bf16.mxu0 0
      %1712 = vmatpush2.bf16.msra.mxu0 0
      %1713 = vmatprep.subr.bf16.mxu0 0
      %1714 = vmatpush2.bf16.msra.mxu0 0
      %1715 = vmatprep.mubr.bf16.mxu0 0
      %1716 = vmatmul.mubr.bf16.gmra.mxu0 %v750
      %v1717 = vpop.f32.mrf.mxu0
      %v1718 = vadd.f32 0.0, %v1717
      %v1719 = vpop.f32.mrf.mxu0
      %v1720 = vpop.f32.mrf.mxu0
      %v1721 = vadd.f32 0.0, %v1720
      %v1722 = vpop.f32.mrf.mxu0
      %1723 = vmatprep.mubr.bf16.mxu0 0
      %1724 = vmatmul.mubr.bf16.gmra.mxu0 %v747
      %v1725 = vpop.f32.mrf.mxu0
      %v1726 = vadd.f32 0.0, %v1725
      %v1727 = vpop.f32.mrf.mxu0
      %v1728 = vpop.f32.mrf.mxu0
      %v1729 = vadd.f32 0.0, %v1728
      %v1730 = vpop.f32.mrf.mxu0
      %1731 = vmatprep.mubr.bf16.mxu0 0
      %1732 = vmatmul.mubr.bf16.gmra.mxu0 %v753
      %v1733 = vpop.f32.mrf.mxu0
      %v1734 = vadd.f32 0.0, %v1733
      %v1735 = vpop.f32.mrf.mxu0
      %v1736 = vpop.f32.mrf.mxu0
      %v1737 = vadd.f32 0.0, %v1736
      %v1738 = vpop.f32.mrf.mxu0
      %1739 = vmatprep.mubr.bf16.mxu0 0
      %1740 = vmatmul.mubr.bf16.gmra.mxu0 %v756
      %v1741 = vpop.f32.mrf.mxu0
      %v1742 = vadd.f32 0.0, %v1741
      %v1743 = vpop.f32.mrf.mxu0
      %v1744 = vpop.f32.mrf.mxu0
      %v1745 = vadd.f32 0.0, %v1744
      %v1746 = vpop.f32.mrf.mxu0
      %1747 = vmatprep.mubr.bf16.mxu0 0
      %1748 = vmatmul.mubr.bf16.gmra.mxu0 %v759
      %v1749 = vpop.f32.mrf.mxu0
      %v1750 = vadd.f32 0.0, %v1749
      %v1751 = vpop.f32.mrf.mxu0
      %v1752 = vpop.f32.mrf.mxu0
      %v1753 = vadd.f32 0.0, %v1752
      %v1754 = vpop.f32.mrf.mxu0
      %1755 = vmatprep.mubr.bf16.mxu0 0
      %1756 = vmatmul.mubr.bf16.gmra.mxu0 %v762
      %v1757 = vpop.f32.mrf.mxu0
      %v1758 = vadd.f32 0.0, %v1757
      %v1759 = vpop.f32.mrf.mxu0
      %v1760 = vpop.f32.mrf.mxu0
      %v1761 = vadd.f32 0.0, %v1760
      %v1762 = vpop.f32.mrf.mxu0
      %1763 = vmatprep.mubr.bf16.mxu0 0
      %1764 = vmatmul.mubr.bf16.gmra.mxu0 %v765
      %v1765 = vpop.f32.mrf.mxu0
      %v1766 = vadd.f32 0.0, %v1765
      %v1767 = vpop.f32.mrf.mxu0
      %v1768 = vpop.f32.mrf.mxu0
      %v1769 = vadd.f32 0.0, %v1768
      %v1770 = vpop.f32.mrf.mxu0
      %1771 = vmatprep.mubr.bf16.mxu0 0
      %1772 = vmatmul.mubr.bf16.gmra.mxu0 %v768
      %v1773 = vpop.f32.mrf.mxu0
      %v1774 = vadd.f32 0.0, %v1773
      %v1775 = vpop.f32.mrf.mxu0
      %v1776 = vpop.f32.mrf.mxu0
      %v1777 = vadd.f32 0.0, %v1776
      %v1778 = vpop.f32.mrf.mxu0
      %1779 = vmatprep.mubr.bf16.mxu0 0
      %1780 = vmatmul.mubr.bf16.gmra.mxu0 %v771
      %v1781 = vpop.f32.mrf.mxu0
      %v1782 = vadd.f32 0.0, %v1781
      %v1783 = vpop.f32.mrf.mxu0
      %v1784 = vpop.f32.mrf.mxu0
      %v1785 = vadd.f32 0.0, %v1784
      %v1786 = vpop.f32.mrf.mxu0
      %1787 = vmatprep.mubr.bf16.mxu0 0
      %1788 = vmatmul.mubr.bf16.gmra.mxu0 %v774
      %v1789 = vpop.f32.mrf.mxu0
      %v1790 = vadd.f32 0.0, %v1789
      %v1791 = vpop.f32.mrf.mxu0
      %v1792 = vpop.f32.mrf.mxu0
      %v1793 = vadd.f32 0.0, %v1792
      %v1794 = vpop.f32.mrf.mxu0
      %1795 = vmatprep.mubr.bf16.mxu0 0
      %1796 = vmatmul.mubr.bf16.gmra.mxu0 %v777
      %v1797 = vpop.f32.mrf.mxu0
      %v1798 = vadd.f32 0.0, %v1797
      %v1799 = vpop.f32.mrf.mxu0
      %v1800 = vpop.f32.mrf.mxu0
      %v1801 = vadd.f32 0.0, %v1800
      %v1802 = vpop.f32.mrf.mxu0
      %1803 = vmatprep.mubr.bf16.mxu0 0
      %1804 = vmatmul.mubr.bf16.gmra.mxu0 %v780
      %v1805 = vpop.f32.mrf.mxu0
      %v1806 = vadd.f32 0.0, %v1805
      %v1807 = vpop.f32.mrf.mxu0
      %v1808 = vpop.f32.mrf.mxu0
      %v1809 = vadd.f32 0.0, %v1808
      %v1810 = vpop.f32.mrf.mxu0
      %1811 = vmatprep.mubr.bf16.mxu0 0
      %1812 = vmatmul.mubr.bf16.gmra.mxu0 %v783
      %v1813 = vpop.f32.mrf.mxu0
      %v1814 = vadd.f32 0.0, %v1813
      %v1815 = vpop.f32.mrf.mxu0
      %v1816 = vpop.f32.mrf.mxu0
      %v1817 = vadd.f32 0.0, %v1816
      %v1818 = vpop.f32.mrf.mxu0
      %1819 = vmatprep.mubr.bf16.mxu0 0
      %1820 = vmatmul.mubr.bf16.gmra.mxu0 %v786
      %v1821 = vpop.f32.mrf.mxu0
      %v1822 = vadd.f32 0.0, %v1821
      %v1823 = vpop.f32.mrf.mxu0
      %v1824 = vpop.f32.mrf.mxu0
      %v1825 = vadd.f32 0.0, %v1824
      %v1826 = vpop.f32.mrf.mxu0
      %1827 = vmatprep.mubr.bf16.mxu0 0
      %1828 = vmatmul.mubr.bf16.gmra.mxu0 %v789
      %v1829 = vpop.f32.mrf.mxu0
      %v1830 = vadd.f32 0.0, %v1829
      %v1831 = vpop.f32.mrf.mxu0
      %v1832 = vpop.f32.mrf.mxu0
      %v1833 = vadd.f32 0.0, %v1832
      %v1834 = vpop.f32.mrf.mxu0
      %1835 = vmatprep.mubr.bf16.mxu0 0
      %1836 = vmatmul.mubr.bf16.gmra.mxu0 %v1678
      %v1837 = vpop.f32.mrf.mxu0
      %v1838 = vadd.f32 0.0, %v1837
      %v1839 = vpop.f32.mrf.mxu0
      %v1840 = vpop.f32.mrf.mxu0
      %v1841 = vadd.f32 0.0, %v1840
      %v1842 = vpop.f32.mrf.mxu0
      %1843 = vdwg.mxu0
      %v1844 = vadd.f32 %v1634, %v1718
      %v1845 = vadd.f32 %v1635, %v1721
      %v1846 = vadd.f32 %v1636, %v1726
      %v1847 = vadd.f32 %v1637, %v1729
      %v1848 = vadd.f32 %v1638, %v1734
      %v1849 = vadd.f32 %v1639, %v1737
      %v1850 = vadd.f32 %v1640, %v1742
      %v1851 = vadd.f32 %v1641, %v1745
      %v1852 = vadd.f32 %v1642, %v1750
      %v1853 = vadd.f32 %v1643, %v1753
      %v1854 = vadd.f32 %v1644, %v1758
      %v1855 = vadd.f32 %v1645, %v1761
      %v1856 = vadd.f32 %v1646, %v1766
      %v1857 = vadd.f32 %v1647, %v1769
      %v1858 = vadd.f32 %v1648, %v1774
      %v1859 = vadd.f32 %v1649, %v1777
      %v1860 = vadd.f32 %v1650, %v1782
      %v1861 = vadd.f32 %v1651, %v1785
      %v1862 = vadd.f32 %v1652, %v1790
      %v1863 = vadd.f32 %v1653, %v1793
      %v1864 = vadd.f32 %v1654, %v1798
      %v1865 = vadd.f32 %v1655, %v1801
      %v1866 = vadd.f32 %v1656, %v1806
      %v1867 = vadd.f32 %v1657, %v1809
      %v1868 = vadd.f32 %v1658, %v1814
      %v1869 = vadd.f32 %v1659, %v1817
      %v1870 = vadd.f32 %v1660, %v1822
      %v1871 = vadd.f32 %v1661, %v1825
      %v1872 = vadd.f32 %v1662, %v1830
      %v1873 = vadd.f32 %v1663, %v1833
      %v1874 = vadd.f32 %v1664, %v1838
      %v1875 = vadd.f32 %v1665, %v1841
      %v1878 = vrot.slane %v538, 1
      %v1879 = vrot.slane %v554, 1
      %v1880 = vsel %vm1180, %v1878, %v1879
      %v1882 = vsel %vm745, %v1880, 0
      %v1885 = vsel %vm791, %v560, 0
      %1887 = vmatprep.subr.bf16.mxu0 0
      %1888 = vmatpush1.bf16.msra.mxu0 0
      %1889 = vmatprep.subr.bf16.mxu0 0
      %1890 = vmatpush1.bf16.msra.mxu0 0
      %1891 = vmatprep.subr.bf16.mxu0 0
      %1892 = vmatpush1.bf16.msra.mxu0 0
      %1893 = vmatprep.subr.bf16.mxu0 0
      %1894 = vmatpush1.bf16.msra.mxu0 0
      %1895 = vmatprep.subr.bf16.mxu0 0
      %1896 = vmatpush1.bf16.msra.mxu0 0
      %1897 = vmatprep.subr.bf16.mxu0 0
      %1898 = vmatpush1.bf16.msra.mxu0 0
      %1899 = vmatprep.subr.bf16.mxu0 0
      %1900 = vmatpush1.bf16.msra.mxu0 0
      %1901 = vmatprep.subr.bf16.mxu0 0
      %1902 = vmatpush1.bf16.msra.mxu0 %v1885
      %1903 = vmatprep.subr.bf16.mxu0 0
      %1904 = vmatpush2.bf16.msra.mxu0 0
      %1905 = vmatprep.subr.bf16.mxu0 0
      %1906 = vmatpush2.bf16.msra.mxu0 0
      %1907 = vmatprep.subr.bf16.mxu0 0
      %1908 = vmatpush2.bf16.msra.mxu0 0
      %1909 = vmatprep.subr.bf16.mxu0 0
      %1910 = vmatpush2.bf16.msra.mxu0 0
      %1911 = vmatprep.subr.bf16.mxu0 0
      %1912 = vmatpush2.bf16.msra.mxu0 0
      %1913 = vmatprep.subr.bf16.mxu0 0
      %1914 = vmatpush2.bf16.msra.mxu0 0
      %1915 = vmatprep.subr.bf16.mxu0 0
      %1916 = vmatpush2.bf16.msra.mxu0 0
      %1917 = vmatprep.subr.bf16.mxu0 0
      %1918 = vmatpush2.bf16.msra.mxu0 0
      %1919 = vmatprep.mubr.bf16.mxu0 0
      %1920 = vmatmul.mubr.bf16.gmra.mxu0 %v1230
      %v1921 = vpop.f32.mrf.mxu0
      %v1922 = vadd.f32 0.0, %v1921
      %v1923 = vpop.f32.mrf.mxu0
      %v1924 = vpop.f32.mrf.mxu0
      %v1925 = vadd.f32 0.0, %v1924
      %v1926 = vpop.f32.mrf.mxu0
      %1927 = vmatprep.mubr.bf16.mxu0 0
      %1928 = vmatmul.mubr.bf16.gmra.mxu0 %v1227
      %v1929 = vpop.f32.mrf.mxu0
      %v1930 = vadd.f32 0.0, %v1929
      %v1931 = vpop.f32.mrf.mxu0
      %v1932 = vpop.f32.mrf.mxu0
      %v1933 = vadd.f32 0.0, %v1932
      %v1934 = vpop.f32.mrf.mxu0
      %1935 = vmatprep.mubr.bf16.mxu0 0
      %1936 = vmatmul.mubr.bf16.gmra.mxu0 %v1233
      %v1937 = vpop.f32.mrf.mxu0
      %v1938 = vadd.f32 0.0, %v1937
      %v1939 = vpop.f32.mrf.mxu0
      %v1940 = vpop.f32.mrf.mxu0
      %v1941 = vadd.f32 0.0, %v1940
      %v1942 = vpop.f32.mrf.mxu0
      %1943 = vmatprep.mubr.bf16.mxu0 0
      %1944 = vmatmul.mubr.bf16.gmra.mxu0 %v1236
      %v1945 = vpop.f32.mrf.mxu0
      %v1946 = vadd.f32 0.0, %v1945
      %v1947 = vpop.f32.mrf.mxu0
      %v1948 = vpop.f32.mrf.mxu0
      %v1949 = vadd.f32 0.0, %v1948
      %v1950 = vpop.f32.mrf.mxu0
      %1951 = vmatprep.mubr.bf16.mxu0 0
      %1952 = vmatmul.mubr.bf16.gmra.mxu0 %v1239
      %v1953 = vpop.f32.mrf.mxu0
      %v1954 = vadd.f32 0.0, %v1953
      %v1955 = vpop.f32.mrf.mxu0
      %v1956 = vpop.f32.mrf.mxu0
      %v1957 = vadd.f32 0.0, %v1956
      %v1958 = vpop.f32.mrf.mxu0
      %1959 = vmatprep.mubr.bf16.mxu0 0
      %1960 = vmatmul.mubr.bf16.gmra.mxu0 %v1242
      %v1961 = vpop.f32.mrf.mxu0
      %v1962 = vadd.f32 0.0, %v1961
      %v1963 = vpop.f32.mrf.mxu0
      %v1964 = vpop.f32.mrf.mxu0
      %v1965 = vadd.f32 0.0, %v1964
      %v1966 = vpop.f32.mrf.mxu0
      %1967 = vmatprep.mubr.bf16.mxu0 0
      %1968 = vmatmul.mubr.bf16.gmra.mxu0 %v1245
      %v1969 = vpop.f32.mrf.mxu0
      %v1970 = vadd.f32 0.0, %v1969
      %v1971 = vpop.f32.mrf.mxu0
      %v1972 = vpop.f32.mrf.mxu0
      %v1973 = vadd.f32 0.0, %v1972
      %v1974 = vpop.f32.mrf.mxu0
      %1975 = vmatprep.mubr.bf16.mxu0 0
      %1976 = vmatmul.mubr.bf16.gmra.mxu0 %v1248
      %v1977 = vpop.f32.mrf.mxu0
      %v1978 = vadd.f32 0.0, %v1977
      %v1979 = vpop.f32.mrf.mxu0
      %v1980 = vpop.f32.mrf.mxu0
      %v1981 = vadd.f32 0.0, %v1980
      %v1982 = vpop.f32.mrf.mxu0
      %1983 = vmatprep.mubr.bf16.mxu0 0
      %1984 = vmatmul.mubr.bf16.gmra.mxu0 %v1251
      %v1985 = vpop.f32.mrf.mxu0
      %v1986 = vadd.f32 0.0, %v1985
      %v1987 = vpop.f32.mrf.mxu0
      %v1988 = vpop.f32.mrf.mxu0
      %v1989 = vadd.f32 0.0, %v1988
      %v1990 = vpop.f32.mrf.mxu0
      %1991 = vmatprep.mubr.bf16.mxu0 0
      %1992 = vmatmul.mubr.bf16.gmra.mxu0 %v1254
      %v1993 = vpop.f32.mrf.mxu0
      %v1994 = vadd.f32 0.0, %v1993
      %v1995 = vpop.f32.mrf.mxu0
      %v1996 = vpop.f32.mrf.mxu0
      %v1997 = vadd.f32 0.0, %v1996
      %v1998 = vpop.f32.mrf.mxu0
      %1999 = vmatprep.mubr.bf16.mxu0 0
      %2000 = vmatmul.mubr.bf16.gmra.mxu0 %v1257
      %v2001 = vpop.f32.mrf.mxu0
      %v2002 = vadd.f32 0.0, %v2001
      %v2003 = vpop.f32.mrf.mxu0
      %v2004 = vpop.f32.mrf.mxu0
      %v2005 = vadd.f32 0.0, %v2004
      %v2006 = vpop.f32.mrf.mxu0
      %2007 = vmatprep.mubr.bf16.mxu0 0
      %2008 = vmatmul.mubr.bf16.gmra.mxu0 %v1260
      %v2009 = vpop.f32.mrf.mxu0
      %v2010 = vadd.f32 0.0, %v2009
      %v2011 = vpop.f32.mrf.mxu0
      %v2012 = vpop.f32.mrf.mxu0
      %v2013 = vadd.f32 0.0, %v2012
      %v2014 = vpop.f32.mrf.mxu0
      %2015 = vmatprep.mubr.bf16.mxu0 0
      %2016 = vmatmul.mubr.bf16.gmra.mxu0 %v1263
      %v2017 = vpop.f32.mrf.mxu0
      %v2018 = vadd.f32 0.0, %v2017
      %v2019 = vpop.f32.mrf.mxu0
      %v2020 = vpop.f32.mrf.mxu0
      %v2021 = vadd.f32 0.0, %v2020
      %v2022 = vpop.f32.mrf.mxu0
      %2023 = vmatprep.mubr.bf16.mxu0 0
      %2024 = vmatmul.mubr.bf16.gmra.mxu0 %v1266
      %v2025 = vpop.f32.mrf.mxu0
      %v2026 = vadd.f32 0.0, %v2025
      %v2027 = vpop.f32.mrf.mxu0
      %v2028 = vpop.f32.mrf.mxu0
      %v2029 = vadd.f32 0.0, %v2028
      %v2030 = vpop.f32.mrf.mxu0
      %2031 = vmatprep.mubr.bf16.mxu0 0
      %2032 = vmatmul.mubr.bf16.gmra.mxu0 %v1269
      %v2033 = vpop.f32.mrf.mxu0
      %v2034 = vadd.f32 0.0, %v2033
      %v2035 = vpop.f32.mrf.mxu0
      %v2036 = vpop.f32.mrf.mxu0
      %v2037 = vadd.f32 0.0, %v2036
      %v2038 = vpop.f32.mrf.mxu0
      %2039 = vmatprep.mubr.bf16.mxu0 0
      %2040 = vmatmul.mubr.bf16.gmra.mxu0 %v1882
      %v2041 = vpop.f32.mrf.mxu0
      %v2042 = vadd.f32 0.0, %v2041
      %v2043 = vpop.f32.mrf.mxu0
      %v2044 = vpop.f32.mrf.mxu0
      %v2045 = vadd.f32 0.0, %v2044
      %v2046 = vpop.f32.mrf.mxu0
      %2047 = vdwg.mxu0
      %v2048 = vadd.f32 %v1844, %v1922
      %v2049 = vadd.f32 %v1845, %v1925
      %v2050 = vadd.f32 %v1846, %v1930
      %v2051 = vadd.f32 %v1847, %v1933
      %v2052 = vadd.f32 %v1848, %v1938
      %v2053 = vadd.f32 %v1849, %v1941
      %v2054 = vadd.f32 %v1850, %v1946
      %v2055 = vadd.f32 %v1851, %v1949
      %v2056 = vadd.f32 %v1852, %v1954
      %v2057 = vadd.f32 %v1853, %v1957
      %v2058 = vadd.f32 %v1854, %v1962
      %v2059 = vadd.f32 %v1855, %v1965
      %v2060 = vadd.f32 %v1856, %v1970
      %v2061 = vadd.f32 %v1857, %v1973
      %v2062 = vadd.f32 %v1858, %v1978
      %v2063 = vadd.f32 %v1859, %v1981
      %v2064 = vadd.f32 %v1860, %v1986
      %v2065 = vadd.f32 %v1861, %v1989
      %v2066 = vadd.f32 %v1862, %v1994
      %v2067 = vadd.f32 %v1863, %v1997
      %v2068 = vadd.f32 %v1864, %v2002
      %v2069 = vadd.f32 %v1865, %v2005
      %v2070 = vadd.f32 %v1866, %v2010
      %v2071 = vadd.f32 %v1867, %v2013
      %v2072 = vadd.f32 %v1868, %v2018
      %v2073 = vadd.f32 %v1869, %v2021
      %v2074 = vadd.f32 %v1870, %v2026
      %v2075 = vadd.f32 %v1871, %v2029
      %v2076 = vadd.f32 %v1872, %v2034
      %v2077 = vadd.f32 %v1873, %v2037
      %v2078 = vadd.f32 %v1874, %v2042
      %v2079 = vadd.f32 %v1875, %v2045
      %v2081 = vsel %vm791, %v561, 0
      %2083 = vmatprep.subr.bf16.mxu0 0
      %2084 = vmatpush1.bf16.msra.mxu0 0
      %2085 = vmatprep.subr.bf16.mxu0 0
      %2086 = vmatpush1.bf16.msra.mxu0 0
      %2087 = vmatprep.subr.bf16.mxu0 0
      %2088 = vmatpush1.bf16.msra.mxu0 0
      %2089 = vmatprep.subr.bf16.mxu0 0
      %2090 = vmatpush1.bf16.msra.mxu0 0
      %2091 = vmatprep.subr.bf16.mxu0 0
      %2092 = vmatpush1.bf16.msra.mxu0 0
      %2093 = vmatprep.subr.bf16.mxu0 0
      %2094 = vmatpush1.bf16.msra.mxu0 0
      %2095 = vmatprep.subr.bf16.mxu0 0
      %2096 = vmatpush1.bf16.msra.mxu0 0
      %2097 = vmatprep.subr.bf16.mxu0 0
      %2098 = vmatpush1.bf16.msra.mxu0 %v2081
      %2099 = vmatprep.subr.bf16.mxu0 0
      %2100 = vmatpush2.bf16.msra.mxu0 0
      %2101 = vmatprep.subr.bf16.mxu0 0
      %2102 = vmatpush2.bf16.msra.mxu0 0
      %2103 = vmatprep.subr.bf16.mxu0 0
      %2104 = vmatpush2.bf16.msra.mxu0 0
      %2105 = vmatprep.subr.bf16.mxu0 0
      %2106 = vmatpush2.bf16.msra.mxu0 0
      %2107 = vmatprep.subr.bf16.mxu0 0
      %2108 = vmatpush2.bf16.msra.mxu0 0
      %2109 = vmatprep.subr.bf16.mxu0 0
      %2110 = vmatpush2.bf16.msra.mxu0 0
      %2111 = vmatprep.subr.bf16.mxu0 0
      %2112 = vmatpush2.bf16.msra.mxu0 0
      %2113 = vmatprep.subr.bf16.mxu0 0
      %2114 = vmatpush2.bf16.msra.mxu0 0
      %2115 = vmatprep.mubr.bf16.mxu0 0
      %2116 = vmatmul.mubr.bf16.gmra.mxu0 %v956
      %v2117 = vpop.f32.mrf.mxu0
      %v2118 = vadd.f32 0.0, %v2117
      %v2119 = vpop.f32.mrf.mxu0
      %v2120 = vpop.f32.mrf.mxu0
      %v2121 = vadd.f32 0.0, %v2120
      %v2122 = vpop.f32.mrf.mxu0
      %2123 = vmatprep.mubr.bf16.mxu0 0
      %2124 = vmatmul.mubr.bf16.gmra.mxu0 %v960
      %v2125 = vpop.f32.mrf.mxu0
      %v2126 = vadd.f32 0.0, %v2125
      %v2127 = vpop.f32.mrf.mxu0
      %v2128 = vpop.f32.mrf.mxu0
      %v2129 = vadd.f32 0.0, %v2128
      %v2130 = vpop.f32.mrf.mxu0
      %2131 = vmatprep.mubr.bf16.mxu0 0
      %2132 = vmatmul.mubr.bf16.gmra.mxu0 %v962
      %v2133 = vpop.f32.mrf.mxu0
      %v2134 = vadd.f32 0.0, %v2133
      %v2135 = vpop.f32.mrf.mxu0
      %v2136 = vpop.f32.mrf.mxu0
      %v2137 = vadd.f32 0.0, %v2136
      %v2138 = vpop.f32.mrf.mxu0
      %2139 = vmatprep.mubr.bf16.mxu0 0
      %2140 = vmatmul.mubr.bf16.gmra.mxu0 %v964
      %v2141 = vpop.f32.mrf.mxu0
      %v2142 = vadd.f32 0.0, %v2141
      %v2143 = vpop.f32.mrf.mxu0
      %v2144 = vpop.f32.mrf.mxu0
      %v2145 = vadd.f32 0.0, %v2144
      %v2146 = vpop.f32.mrf.mxu0
      %2147 = vmatprep.mubr.bf16.mxu0 0
      %2148 = vmatmul.mubr.bf16.gmra.mxu0 %v966
      %v2149 = vpop.f32.mrf.mxu0
      %v2150 = vadd.f32 0.0, %v2149
      %v2151 = vpop.f32.mrf.mxu0
      %v2152 = vpop.f32.mrf.mxu0
      %v2153 = vadd.f32 0.0, %v2152
      %v2154 = vpop.f32.mrf.mxu0
      %2155 = vmatprep.mubr.bf16.mxu0 0
      %2156 = vmatmul.mubr.bf16.gmra.mxu0 %v968
      %v2157 = vpop.f32.mrf.mxu0
      %v2158 = vadd.f32 0.0, %v2157
      %v2159 = vpop.f32.mrf.mxu0
      %v2160 = vpop.f32.mrf.mxu0
      %v2161 = vadd.f32 0.0, %v2160
      %v2162 = vpop.f32.mrf.mxu0
      %2163 = vmatprep.mubr.bf16.mxu0 0
      %2164 = vmatmul.mubr.bf16.gmra.mxu0 %v970
      %v2165 = vpop.f32.mrf.mxu0
      %v2166 = vadd.f32 0.0, %v2165
      %v2167 = vpop.f32.mrf.mxu0
      %v2168 = vpop.f32.mrf.mxu0
      %v2169 = vadd.f32 0.0, %v2168
      %v2170 = vpop.f32.mrf.mxu0
      %2171 = vmatprep.mubr.bf16.mxu0 0
      %2172 = vmatmul.mubr.bf16.gmra.mxu0 %v972
      %v2173 = vpop.f32.mrf.mxu0
      %v2174 = vadd.f32 0.0, %v2173
      %v2175 = vpop.f32.mrf.mxu0
      %v2176 = vpop.f32.mrf.mxu0
      %v2177 = vadd.f32 0.0, %v2176
      %v2178 = vpop.f32.mrf.mxu0
      %2179 = vmatprep.mubr.bf16.mxu0 0
      %2180 = vmatmul.mubr.bf16.gmra.mxu0 %v974
      %v2181 = vpop.f32.mrf.mxu0
      %v2182 = vadd.f32 0.0, %v2181
      %v2183 = vpop.f32.mrf.mxu0
      %v2184 = vpop.f32.mrf.mxu0
      %v2185 = vadd.f32 0.0, %v2184
      %v2186 = vpop.f32.mrf.mxu0
      %2187 = vmatprep.mubr.bf16.mxu0 0
      %2188 = vmatmul.mubr.bf16.gmra.mxu0 %v976
      %v2189 = vpop.f32.mrf.mxu0
      %v2190 = vadd.f32 0.0, %v2189
      %v2191 = vpop.f32.mrf.mxu0
      %v2192 = vpop.f32.mrf.mxu0
      %v2193 = vadd.f32 0.0, %v2192
      %v2194 = vpop.f32.mrf.mxu0
      %2195 = vmatprep.mubr.bf16.mxu0 0
      %2196 = vmatmul.mubr.bf16.gmra.mxu0 %v978
      %v2197 = vpop.f32.mrf.mxu0
      %v2198 = vadd.f32 0.0, %v2197
      %v2199 = vpop.f32.mrf.mxu0
      %v2200 = vpop.f32.mrf.mxu0
      %v2201 = vadd.f32 0.0, %v2200
      %v2202 = vpop.f32.mrf.mxu0
      %2203 = vmatprep.mubr.bf16.mxu0 0
      %2204 = vmatmul.mubr.bf16.gmra.mxu0 %v980
      %v2205 = vpop.f32.mrf.mxu0
      %v2206 = vadd.f32 0.0, %v2205
      %v2207 = vpop.f32.mrf.mxu0
      %v2208 = vpop.f32.mrf.mxu0
      %v2209 = vadd.f32 0.0, %v2208
      %v2210 = vpop.f32.mrf.mxu0
      %2211 = vmatprep.mubr.bf16.mxu0 0
      %2212 = vmatmul.mubr.bf16.gmra.mxu0 %v982
      %v2213 = vpop.f32.mrf.mxu0
      %v2214 = vadd.f32 0.0, %v2213
      %v2215 = vpop.f32.mrf.mxu0
      %v2216 = vpop.f32.mrf.mxu0
      %v2217 = vadd.f32 0.0, %v2216
      %v2218 = vpop.f32.mrf.mxu0
      %2219 = vmatprep.mubr.bf16.mxu0 0
      %2220 = vmatmul.mubr.bf16.gmra.mxu0 %v984
      %v2221 = vpop.f32.mrf.mxu0
      %v2222 = vadd.f32 0.0, %v2221
      %v2223 = vpop.f32.mrf.mxu0
      %v2224 = vpop.f32.mrf.mxu0
      %v2225 = vadd.f32 0.0, %v2224
      %v2226 = vpop.f32.mrf.mxu0
      %2227 = vmatprep.mubr.bf16.mxu0 0
      %2228 = vmatmul.mubr.bf16.gmra.mxu0 %v1468
      %v2229 = vpop.f32.mrf.mxu0
      %v2230 = vadd.f32 0.0, %v2229
      %v2231 = vpop.f32.mrf.mxu0
      %v2232 = vpop.f32.mrf.mxu0
      %v2233 = vadd.f32 0.0, %v2232
      %v2234 = vpop.f32.mrf.mxu0
      %2235 = vmatprep.mubr.bf16.mxu0 0
      %2236 = vmatmul.mubr.bf16.gmra.mxu0 %v984
      %v2237 = vpop.f32.mrf.mxu0
      %v2238 = vadd.f32 0.0, %v2237
      %v2239 = vpop.f32.mrf.mxu0
      %v2240 = vpop.f32.mrf.mxu0
      %v2241 = vadd.f32 0.0, %v2240
      %v2242 = vpop.f32.mrf.mxu0
      %2243 = vdwg.mxu0
      %v2244 = vadd.f32 %v2048, %v2118
      %v2245 = vadd.f32 %v2049, %v2121
      %v2246 = vadd.f32 %v2050, %v2126
      %v2247 = vadd.f32 %v2051, %v2129
      %v2248 = vadd.f32 %v2052, %v2134
      %v2249 = vadd.f32 %v2053, %v2137
      %v2250 = vadd.f32 %v2054, %v2142
      %v2251 = vadd.f32 %v2055, %v2145
      %v2252 = vadd.f32 %v2056, %v2150
      %v2253 = vadd.f32 %v2057, %v2153
      %v2254 = vadd.f32 %v2058, %v2158
      %v2255 = vadd.f32 %v2059, %v2161
      %v2256 = vadd.f32 %v2060, %v2166
      %v2257 = vadd.f32 %v2061, %v2169
      %v2258 = vadd.f32 %v2062, %v2174
      %v2259 = vadd.f32 %v2063, %v2177
      %v2260 = vadd.f32 %v2064, %v2182
      %v2261 = vadd.f32 %v2065, %v2185
      %v2262 = vadd.f32 %v2066, %v2190
      %v2263 = vadd.f32 %v2067, %v2193
      %v2264 = vadd.f32 %v2068, %v2198
      %v2265 = vadd.f32 %v2069, %v2201
      %v2266 = vadd.f32 %v2070, %v2206
      %v2267 = vadd.f32 %v2071, %v2209
      %v2268 = vadd.f32 %v2072, %v2214
      %v2269 = vadd.f32 %v2073, %v2217
      %v2270 = vadd.f32 %v2074, %v2222
      %v2271 = vadd.f32 %v2075, %v2225
      %v2272 = vadd.f32 %v2076, %v2230
      %v2273 = vadd.f32 %v2077, %v2233
      %v2274 = vadd.f32 %v2078, %v2238
      %v2275 = vadd.f32 %v2079, %v2241
      %v2277 = vsel %vm791, %v562, 0
      %2279 = vmatprep.subr.bf16.mxu0 0
      %2280 = vmatpush1.bf16.msra.mxu0 0
      %2281 = vmatprep.subr.bf16.mxu0 0
      %2282 = vmatpush1.bf16.msra.mxu0 0
      %2283 = vmatprep.subr.bf16.mxu0 0
      %2284 = vmatpush1.bf16.msra.mxu0 0
      %2285 = vmatprep.subr.bf16.mxu0 0
      %2286 = vmatpush1.bf16.msra.mxu0 0
      %2287 = vmatprep.subr.bf16.mxu0 0
      %2288 = vmatpush1.bf16.msra.mxu0 0
      %2289 = vmatprep.subr.bf16.mxu0 0
      %2290 = vmatpush1.bf16.msra.mxu0 0
      %2291 = vmatprep.subr.bf16.mxu0 0
      %2292 = vmatpush1.bf16.msra.mxu0 0
      %2293 = vmatprep.subr.bf16.mxu0 0
      %2294 = vmatpush1.bf16.msra.mxu0 %v2277
      %2295 = vmatprep.subr.bf16.mxu0 0
      %2296 = vmatpush2.bf16.msra.mxu0 0
      %2297 = vmatprep.subr.bf16.mxu0 0
      %2298 = vmatpush2.bf16.msra.mxu0 0
      %2299 = vmatprep.subr.bf16.mxu0 0
      %2300 = vmatpush2.bf16.msra.mxu0 0
      %2301 = vmatprep.subr.bf16.mxu0 0
      %2302 = vmatpush2.bf16.msra.mxu0 0
      %2303 = vmatprep.subr.bf16.mxu0 0
      %2304 = vmatpush2.bf16.msra.mxu0 0
      %2305 = vmatprep.subr.bf16.mxu0 0
      %2306 = vmatpush2.bf16.msra.mxu0 0
      %2307 = vmatprep.subr.bf16.mxu0 0
      %2308 = vmatpush2.bf16.msra.mxu0 0
      %2309 = vmatprep.subr.bf16.mxu0 0
      %2310 = vmatpush2.bf16.msra.mxu0 0
      %2311 = vmatprep.mubr.bf16.mxu0 0
      %2312 = vmatmul.mubr.bf16.gmra.mxu0 %v747
      %v2313 = vpop.f32.mrf.mxu0
      %v2314 = vadd.f32 0.0, %v2313
      %v2315 = vpop.f32.mrf.mxu0
      %v2316 = vpop.f32.mrf.mxu0
      %v2317 = vadd.f32 0.0, %v2316
      %v2318 = vpop.f32.mrf.mxu0
      %2319 = vmatprep.mubr.bf16.mxu0 0
      %2320 = vmatmul.mubr.bf16.gmra.mxu0 %v753
      %v2321 = vpop.f32.mrf.mxu0
      %v2322 = vadd.f32 0.0, %v2321
      %v2323 = vpop.f32.mrf.mxu0
      %v2324 = vpop.f32.mrf.mxu0
      %v2325 = vadd.f32 0.0, %v2324
      %v2326 = vpop.f32.mrf.mxu0
      %2327 = vmatprep.mubr.bf16.mxu0 0
      %2328 = vmatmul.mubr.bf16.gmra.mxu0 %v756
      %v2329 = vpop.f32.mrf.mxu0
      %v2330 = vadd.f32 0.0, %v2329
      %v2331 = vpop.f32.mrf.mxu0
      %v2332 = vpop.f32.mrf.mxu0
      %v2333 = vadd.f32 0.0, %v2332
      %v2334 = vpop.f32.mrf.mxu0
      %2335 = vmatprep.mubr.bf16.mxu0 0
      %2336 = vmatmul.mubr.bf16.gmra.mxu0 %v759
      %v2337 = vpop.f32.mrf.mxu0
      %v2338 = vadd.f32 0.0, %v2337
      %v2339 = vpop.f32.mrf.mxu0
      %v2340 = vpop.f32.mrf.mxu0
      %v2341 = vadd.f32 0.0, %v2340
      %v2342 = vpop.f32.mrf.mxu0
      %2343 = vmatprep.mubr.bf16.mxu0 0
      %2344 = vmatmul.mubr.bf16.gmra.mxu0 %v762
      %v2345 = vpop.f32.mrf.mxu0
      %v2346 = vadd.f32 0.0, %v2345
      %v2347 = vpop.f32.mrf.mxu0
      %v2348 = vpop.f32.mrf.mxu0
      %v2349 = vadd.f32 0.0, %v2348
      %v2350 = vpop.f32.mrf.mxu0
      %2351 = vmatprep.mubr.bf16.mxu0 0
      %2352 = vmatmul.mubr.bf16.gmra.mxu0 %v765
      %v2353 = vpop.f32.mrf.mxu0
      %v2354 = vadd.f32 0.0, %v2353
      %v2355 = vpop.f32.mrf.mxu0
      %v2356 = vpop.f32.mrf.mxu0
      %v2357 = vadd.f32 0.0, %v2356
      %v2358 = vpop.f32.mrf.mxu0
      %2359 = vmatprep.mubr.bf16.mxu0 0
      %2360 = vmatmul.mubr.bf16.gmra.mxu0 %v768
      %v2361 = vpop.f32.mrf.mxu0
      %v2362 = vadd.f32 0.0, %v2361
      %v2363 = vpop.f32.mrf.mxu0
      %v2364 = vpop.f32.mrf.mxu0
      %v2365 = vadd.f32 0.0, %v2364
      %v2366 = vpop.f32.mrf.mxu0
      %2367 = vmatprep.mubr.bf16.mxu0 0
      %2368 = vmatmul.mubr.bf16.gmra.mxu0 %v771
      %v2369 = vpop.f32.mrf.mxu0
      %v2370 = vadd.f32 0.0, %v2369
      %v2371 = vpop.f32.mrf.mxu0
      %v2372 = vpop.f32.mrf.mxu0
      %v2373 = vadd.f32 0.0, %v2372
      %v2374 = vpop.f32.mrf.mxu0
      %2375 = vmatprep.mubr.bf16.mxu0 0
      %2376 = vmatmul.mubr.bf16.gmra.mxu0 %v774
      %v2377 = vpop.f32.mrf.mxu0
      %v2378 = vadd.f32 0.0, %v2377
      %v2379 = vpop.f32.mrf.mxu0
      %v2380 = vpop.f32.mrf.mxu0
      %v2381 = vadd.f32 0.0, %v2380
      %v2382 = vpop.f32.mrf.mxu0
      %2383 = vmatprep.mubr.bf16.mxu0 0
      %2384 = vmatmul.mubr.bf16.gmra.mxu0 %v777
      %v2385 = vpop.f32.mrf.mxu0
      %v2386 = vadd.f32 0.0, %v2385
      %v2387 = vpop.f32.mrf.mxu0
      %v2388 = vpop.f32.mrf.mxu0
      %v2389 = vadd.f32 0.0, %v2388
      %v2390 = vpop.f32.mrf.mxu0
      %2391 = vmatprep.mubr.bf16.mxu0 0
      %2392 = vmatmul.mubr.bf16.gmra.mxu0 %v780
      %v2393 = vpop.f32.mrf.mxu0
      %v2394 = vadd.f32 0.0, %v2393
      %v2395 = vpop.f32.mrf.mxu0
      %v2396 = vpop.f32.mrf.mxu0
      %v2397 = vadd.f32 0.0, %v2396
      %v2398 = vpop.f32.mrf.mxu0
      %2399 = vmatprep.mubr.bf16.mxu0 0
      %2400 = vmatmul.mubr.bf16.gmra.mxu0 %v783
      %v2401 = vpop.f32.mrf.mxu0
      %v2402 = vadd.f32 0.0, %v2401
      %v2403 = vpop.f32.mrf.mxu0
      %v2404 = vpop.f32.mrf.mxu0
      %v2405 = vadd.f32 0.0, %v2404
      %v2406 = vpop.f32.mrf.mxu0
      %2407 = vmatprep.mubr.bf16.mxu0 0
      %2408 = vmatmul.mubr.bf16.gmra.mxu0 %v786
      %v2409 = vpop.f32.mrf.mxu0
      %v2410 = vadd.f32 0.0, %v2409
      %v2411 = vpop.f32.mrf.mxu0
      %v2412 = vpop.f32.mrf.mxu0
      %v2413 = vadd.f32 0.0, %v2412
      %v2414 = vpop.f32.mrf.mxu0
      %2415 = vmatprep.mubr.bf16.mxu0 0
      %2416 = vmatmul.mubr.bf16.gmra.mxu0 %v789
      %v2417 = vpop.f32.mrf.mxu0
      %v2418 = vadd.f32 0.0, %v2417
      %v2419 = vpop.f32.mrf.mxu0
      %v2420 = vpop.f32.mrf.mxu0
      %v2421 = vadd.f32 0.0, %v2420
      %v2422 = vpop.f32.mrf.mxu0
      %2423 = vmatprep.mubr.bf16.mxu0 0
      %2424 = vmatmul.mubr.bf16.gmra.mxu0 %v1678
      %v2425 = vpop.f32.mrf.mxu0
      %v2426 = vadd.f32 0.0, %v2425
      %v2427 = vpop.f32.mrf.mxu0
      %v2428 = vpop.f32.mrf.mxu0
      %v2429 = vadd.f32 0.0, %v2428
      %v2430 = vpop.f32.mrf.mxu0
      %2431 = vmatprep.mubr.bf16.mxu0 0
      %2432 = vmatmul.mubr.bf16.gmra.mxu0 %v789
      %v2433 = vpop.f32.mrf.mxu0
      %v2434 = vadd.f32 0.0, %v2433
      %v2435 = vpop.f32.mrf.mxu0
      %v2436 = vpop.f32.mrf.mxu0
      %v2437 = vadd.f32 0.0, %v2436
      %v2438 = vpop.f32.mrf.mxu0
      %2439 = vdwg.mxu0
      %v2440 = vadd.f32 %v2244, %v2314
      %v2441 = vadd.f32 %v2245, %v2317
      %v2442 = vadd.f32 %v2246, %v2322
      %v2443 = vadd.f32 %v2247, %v2325
      %v2444 = vadd.f32 %v2248, %v2330
      %v2445 = vadd.f32 %v2249, %v2333
      %v2446 = vadd.f32 %v2250, %v2338
      %v2447 = vadd.f32 %v2251, %v2341
      %v2448 = vadd.f32 %v2252, %v2346
      %v2449 = vadd.f32 %v2253, %v2349
      %v2450 = vadd.f32 %v2254, %v2354
      %v2451 = vadd.f32 %v2255, %v2357
      %v2452 = vadd.f32 %v2256, %v2362
      %v2453 = vadd.f32 %v2257, %v2365
      %v2454 = vadd.f32 %v2258, %v2370
      %v2455 = vadd.f32 %v2259, %v2373
      %v2456 = vadd.f32 %v2260, %v2378
      %v2457 = vadd.f32 %v2261, %v2381
      %v2458 = vadd.f32 %v2262, %v2386
      %v2459 = vadd.f32 %v2263, %v2389
      %v2460 = vadd.f32 %v2264, %v2394
      %v2461 = vadd.f32 %v2265, %v2397
      %v2462 = vadd.f32 %v2266, %v2402
      %v2463 = vadd.f32 %v2267, %v2405
      %v2464 = vadd.f32 %v2268, %v2410
      %v2465 = vadd.f32 %v2269, %v2413
      %v2466 = vadd.f32 %v2270, %v2418
      %v2467 = vadd.f32 %v2271, %v2421
      %v2468 = vadd.f32 %v2272, %v2426
      %v2469 = vadd.f32 %v2273, %v2429
      %v2470 = vadd.f32 %v2274, %v2434
      %v2471 = vadd.f32 %v2275, %v2437
      %v2473 = vsel %vm791, %v563, 0
      %2475 = vmatprep.subr.bf16.mxu0 0
      %2476 = vmatpush1.bf16.msra.mxu0 0
      %2477 = vmatprep.subr.bf16.mxu0 0
      %2478 = vmatpush1.bf16.msra.mxu0 0
      %2479 = vmatprep.subr.bf16.mxu0 0
      %2480 = vmatpush1.bf16.msra.mxu0 0
      %2481 = vmatprep.subr.bf16.mxu0 0
      %2482 = vmatpush1.bf16.msra.mxu0 0
      %2483 = vmatprep.subr.bf16.mxu0 0
      %2484 = vmatpush1.bf16.msra.mxu0 0
      %2485 = vmatprep.subr.bf16.mxu0 0
      %2486 = vmatpush1.bf16.msra.mxu0 0
      %2487 = vmatprep.subr.bf16.mxu0 0
      %2488 = vmatpush1.bf16.msra.mxu0 0
      %2489 = vmatprep.subr.bf16.mxu0 0
      %2490 = vmatpush1.bf16.msra.mxu0 %v2473
      %2491 = vmatprep.subr.bf16.mxu0 0
      %2492 = vmatpush2.bf16.msra.mxu0 0
      %2493 = vmatprep.subr.bf16.mxu0 0
      %2494 = vmatpush2.bf16.msra.mxu0 0
      %2495 = vmatprep.subr.bf16.mxu0 0
      %2496 = vmatpush2.bf16.msra.mxu0 0
      %2497 = vmatprep.subr.bf16.mxu0 0
      %2498 = vmatpush2.bf16.msra.mxu0 0
      %2499 = vmatprep.subr.bf16.mxu0 0
      %2500 = vmatpush2.bf16.msra.mxu0 0
      %2501 = vmatprep.subr.bf16.mxu0 0
      %2502 = vmatpush2.bf16.msra.mxu0 0
      %2503 = vmatprep.subr.bf16.mxu0 0
      %2504 = vmatpush2.bf16.msra.mxu0 0
      %2505 = vmatprep.subr.bf16.mxu0 0
      %2506 = vmatpush2.bf16.msra.mxu0 0
      %2507 = vmatprep.mubr.bf16.mxu0 0
      %2508 = vmatmul.mubr.bf16.gmra.mxu0 %v1227
      %v2509 = vpop.f32.mrf.mxu0
      %v2510 = vadd.f32 0.0, %v2509
      %v2511 = vpop.f32.mrf.mxu0
      %v2512 = vpop.f32.mrf.mxu0
      %v2513 = vadd.f32 0.0, %v2512
      %v2514 = vpop.f32.mrf.mxu0
      %2515 = vmatprep.mubr.bf16.mxu0 0
      %2516 = vmatmul.mubr.bf16.gmra.mxu0 %v1233
      %v2517 = vpop.f32.mrf.mxu0
      %v2518 = vadd.f32 0.0, %v2517
      %v2519 = vpop.f32.mrf.mxu0
      %v2520 = vpop.f32.mrf.mxu0
      %v2521 = vadd.f32 0.0, %v2520
      %v2522 = vpop.f32.mrf.mxu0
      %2523 = vmatprep.mubr.bf16.mxu0 0
      %2524 = vmatmul.mubr.bf16.gmra.mxu0 %v1236
      %v2525 = vpop.f32.mrf.mxu0
      %v2526 = vadd.f32 0.0, %v2525
      %v2527 = vpop.f32.mrf.mxu0
      %v2528 = vpop.f32.mrf.mxu0
      %v2529 = vadd.f32 0.0, %v2528
      %v2530 = vpop.f32.mrf.mxu0
      %2531 = vmatprep.mubr.bf16.mxu0 0
      %2532 = vmatmul.mubr.bf16.gmra.mxu0 %v1239
      %v2533 = vpop.f32.mrf.mxu0
      %v2534 = vadd.f32 0.0, %v2533
      %v2535 = vpop.f32.mrf.mxu0
      %v2536 = vpop.f32.mrf.mxu0
      %v2537 = vadd.f32 0.0, %v2536
      %v2538 = vpop.f32.mrf.mxu0
      %2539 = vmatprep.mubr.bf16.mxu0 0
      %2540 = vmatmul.mubr.bf16.gmra.mxu0 %v1242
      %v2541 = vpop.f32.mrf.mxu0
      %v2542 = vadd.f32 0.0, %v2541
      %v2543 = vpop.f32.mrf.mxu0
      %v2544 = vpop.f32.mrf.mxu0
      %v2545 = vadd.f32 0.0, %v2544
      %v2546 = vpop.f32.mrf.mxu0
      %2547 = vmatprep.mubr.bf16.mxu0 0
      %2548 = vmatmul.mubr.bf16.gmra.mxu0 %v1245
      %v2549 = vpop.f32.mrf.mxu0
      %v2550 = vadd.f32 0.0, %v2549
      %v2551 = vpop.f32.mrf.mxu0
      %v2552 = vpop.f32.mrf.mxu0
      %v2553 = vadd.f32 0.0, %v2552
      %v2554 = vpop.f32.mrf.mxu0
      %2555 = vmatprep.mubr.bf16.mxu0 0
      %2556 = vmatmul.mubr.bf16.gmra.mxu0 %v1248
      %v2557 = vpop.f32.mrf.mxu0
      %v2558 = vadd.f32 0.0, %v2557
      %v2559 = vpop.f32.mrf.mxu0
      %v2560 = vpop.f32.mrf.mxu0
      %v2561 = vadd.f32 0.0, %v2560
      %v2562 = vpop.f32.mrf.mxu0
      %2563 = vmatprep.mubr.bf16.mxu0 0
      %2564 = vmatmul.mubr.bf16.gmra.mxu0 %v1251
      %v2565 = vpop.f32.mrf.mxu0
      %v2566 = vadd.f32 0.0, %v2565
      %v2567 = vpop.f32.mrf.mxu0
      %v2568 = vpop.f32.mrf.mxu0
      %v2569 = vadd.f32 0.0, %v2568
      %v2570 = vpop.f32.mrf.mxu0
      %2571 = vmatprep.mubr.bf16.mxu0 0
      %2572 = vmatmul.mubr.bf16.gmra.mxu0 %v1254
      %v2573 = vpop.f32.mrf.mxu0
      %v2574 = vadd.f32 0.0, %v2573
      %v2575 = vpop.f32.mrf.mxu0
      %v2576 = vpop.f32.mrf.mxu0
      %v2577 = vadd.f32 0.0, %v2576
      %v2578 = vpop.f32.mrf.mxu0
      %2579 = vmatprep.mubr.bf16.mxu0 0
      %2580 = vmatmul.mubr.bf16.gmra.mxu0 %v1257
      %v2581 = vpop.f32.mrf.mxu0
      %v2582 = vadd.f32 0.0, %v2581
      %v2583 = vpop.f32.mrf.mxu0
      %v2584 = vpop.f32.mrf.mxu0
      %v2585 = vadd.f32 0.0, %v2584
      %v2586 = vpop.f32.mrf.mxu0
      %2587 = vmatprep.mubr.bf16.mxu0 0
      %2588 = vmatmul.mubr.bf16.gmra.mxu0 %v1260
      %v2589 = vpop.f32.mrf.mxu0
      %v2590 = vadd.f32 0.0, %v2589
      %v2591 = vpop.f32.mrf.mxu0
      %v2592 = vpop.f32.mrf.mxu0
      %v2593 = vadd.f32 0.0, %v2592
      %v2594 = vpop.f32.mrf.mxu0
      %2595 = vmatprep.mubr.bf16.mxu0 0
      %2596 = vmatmul.mubr.bf16.gmra.mxu0 %v1263
      %v2597 = vpop.f32.mrf.mxu0
      %v2598 = vadd.f32 0.0, %v2597
      %v2599 = vpop.f32.mrf.mxu0
      %v2600 = vpop.f32.mrf.mxu0
      %v2601 = vadd.f32 0.0, %v2600
      %v2602 = vpop.f32.mrf.mxu0
      %2603 = vmatprep.mubr.bf16.mxu0 0
      %2604 = vmatmul.mubr.bf16.gmra.mxu0 %v1266
      %v2605 = vpop.f32.mrf.mxu0
      %v2606 = vadd.f32 0.0, %v2605
      %v2607 = vpop.f32.mrf.mxu0
      %v2608 = vpop.f32.mrf.mxu0
      %v2609 = vadd.f32 0.0, %v2608
      %v2610 = vpop.f32.mrf.mxu0
      %2611 = vmatprep.mubr.bf16.mxu0 0
      %2612 = vmatmul.mubr.bf16.gmra.mxu0 %v1269
      %v2613 = vpop.f32.mrf.mxu0
      %v2614 = vadd.f32 0.0, %v2613
      %v2615 = vpop.f32.mrf.mxu0
      %v2616 = vpop.f32.mrf.mxu0
      %v2617 = vadd.f32 0.0, %v2616
      %v2618 = vpop.f32.mrf.mxu0
      %2619 = vmatprep.mubr.bf16.mxu0 0
      %2620 = vmatmul.mubr.bf16.gmra.mxu0 %v1882
      %v2621 = vpop.f32.mrf.mxu0
      %v2622 = vadd.f32 0.0, %v2621
      %v2623 = vpop.f32.mrf.mxu0
      %v2624 = vpop.f32.mrf.mxu0
      %v2625 = vadd.f32 0.0, %v2624
      %v2626 = vpop.f32.mrf.mxu0
      %2627 = vmatprep.mubr.bf16.mxu0 0
      %2628 = vmatmul.mubr.bf16.gmra.mxu0 %v1269
      %v2629 = vpop.f32.mrf.mxu0
      %v2630 = vadd.f32 0.0, %v2629
      %v2631 = vpop.f32.mrf.mxu0
      %v2632 = vpop.f32.mrf.mxu0
      %v2633 = vadd.f32 0.0, %v2632
      %v2634 = vpop.f32.mrf.mxu0
      %2635 = vdwg.mxu0
      %v2636 = vadd.f32 %v2440, %v2510
      %v2637 = vadd.f32 %v2441, %v2513
      %v2638 = vadd.f32 %v2442, %v2518
      %v2639 = vadd.f32 %v2443, %v2521
      %v2640 = vadd.f32 %v2444, %v2526
      %v2641 = vadd.f32 %v2445, %v2529
      %v2642 = vadd.f32 %v2446, %v2534
      %v2643 = vadd.f32 %v2447, %v2537
      %v2644 = vadd.f32 %v2448, %v2542
      %v2645 = vadd.f32 %v2449, %v2545
      %v2646 = vadd.f32 %v2450, %v2550
      %v2647 = vadd.f32 %v2451, %v2553
      %v2648 = vadd.f32 %v2452, %v2558
      %v2649 = vadd.f32 %v2453, %v2561
      %v2650 = vadd.f32 %v2454, %v2566
      %v2651 = vadd.f32 %v2455, %v2569
      %v2652 = vadd.f32 %v2456, %v2574
      %v2653 = vadd.f32 %v2457, %v2577
      %v2654 = vadd.f32 %v2458, %v2582
      %v2655 = vadd.f32 %v2459, %v2585
      %v2656 = vadd.f32 %v2460, %v2590
      %v2657 = vadd.f32 %v2461, %v2593
      %v2658 = vadd.f32 %v2462, %v2598
      %v2659 = vadd.f32 %v2463, %v2601
      %v2660 = vadd.f32 %v2464, %v2606
      %v2661 = vadd.f32 %v2465, %v2609
      %v2662 = vadd.f32 %v2466, %v2614
      %v2663 = vadd.f32 %v2467, %v2617
      %v2664 = vadd.f32 %v2468, %v2622
      %v2665 = vadd.f32 %v2469, %v2625
      %v2666 = vadd.f32 %v2470, %v2630
      %v2667 = vadd.f32 %v2471, %v2633
      %v2668 = vld [vmem:[%s2] sm:$0x1]
      %v2670 = vlaneseq
      %v2671 = vshrl.u32 %v2670, 7
      %v2672 = vsub.s32 0, %v2671
      %v2673 = vrot.slane %v2668, %v2672
      %v2675 = vmul.f32 %v2636, %v2673
      %v2676 = vmul.f32 %v2637, %v2673
      %v2677 = vmul.f32 %v2638, %v2673
      %v2678 = vmul.f32 %v2639, %v2673
      %v2679 = vmul.f32 %v2640, %v2673
      %v2680 = vmul.f32 %v2641, %v2673
      %v2681 = vmul.f32 %v2642, %v2673
      %v2682 = vmul.f32 %v2643, %v2673
      %v2683 = vmul.f32 %v2644, %v2673
      %v2684 = vmul.f32 %v2645, %v2673
      %v2685 = vmul.f32 %v2646, %v2673
      %v2686 = vmul.f32 %v2647, %v2673
      %v2687 = vmul.f32 %v2648, %v2673
      %v2688 = vmul.f32 %v2649, %v2673
      %v2689 = vmul.f32 %v2650, %v2673
      %v2690 = vmul.f32 %v2651, %v2673
      %v2691 = vmul.f32 %v2652, %v2673
      %v2692 = vmul.f32 %v2653, %v2673
      %v2693 = vmul.f32 %v2654, %v2673
      %v2694 = vmul.f32 %v2655, %v2673
      %v2695 = vmul.f32 %v2656, %v2673
      %v2696 = vmul.f32 %v2657, %v2673
      %v2697 = vmul.f32 %v2658, %v2673
      %v2698 = vmul.f32 %v2659, %v2673
      %v2699 = vmul.f32 %v2660, %v2673
      %v2700 = vmul.f32 %v2661, %v2673
      %v2701 = vmul.f32 %v2662, %v2673
      %v2702 = vmul.f32 %v2663, %v2673
      %v2703 = vmul.f32 %v2664, %v2673
      %v2704 = vmul.f32 %v2665, %v2673
      %v2705 = vmul.f32 %v2666, %v2673
      %v2706 = vmul.f32 %v2667, %v2673
      %v2707 = vld [vmem:[%s3] sm:$0x1]
      %v2709 = vlaneseq
      %v2710 = vshrl.u32 %v2709, 7
      %v2711 = vsub.s32 0, %v2710
      %v2712 = vrot.slane %v2707, %v2711
      %v2714 = vadd.f32 %v2675, %v2712
      %v2715 = vadd.f32 %v2676, %v2712
      %v2716 = vadd.f32 %v2677, %v2712
      %v2717 = vadd.f32 %v2678, %v2712
      %v2718 = vadd.f32 %v2679, %v2712
      %v2719 = vadd.f32 %v2680, %v2712
      %v2720 = vadd.f32 %v2681, %v2712
      %v2721 = vadd.f32 %v2682, %v2712
      %v2722 = vadd.f32 %v2683, %v2712
      %v2723 = vadd.f32 %v2684, %v2712
      %v2724 = vadd.f32 %v2685, %v2712
      %v2725 = vadd.f32 %v2686, %v2712
      %v2726 = vadd.f32 %v2687, %v2712
      %v2727 = vadd.f32 %v2688, %v2712
      %v2728 = vadd.f32 %v2689, %v2712
      %v2729 = vadd.f32 %v2690, %v2712
      %v2730 = vadd.f32 %v2691, %v2712
      %v2731 = vadd.f32 %v2692, %v2712
      %v2732 = vadd.f32 %v2693, %v2712
      %v2733 = vadd.f32 %v2694, %v2712
      %v2734 = vadd.f32 %v2695, %v2712
      %v2735 = vadd.f32 %v2696, %v2712
      %v2736 = vadd.f32 %v2697, %v2712
      %v2737 = vadd.f32 %v2698, %v2712
      %v2738 = vadd.f32 %v2699, %v2712
      %v2739 = vadd.f32 %v2700, %v2712
      %v2740 = vadd.f32 %v2701, %v2712
      %v2741 = vadd.f32 %v2702, %v2712
      %v2742 = vadd.f32 %v2703, %v2712
      %v2743 = vadd.f32 %v2704, %v2712
      %v2744 = vadd.f32 %v2705, %v2712
      %v2745 = vadd.f32 %v2706, %v2712
      %v2746 = vmax.f32 %v2714, 0.0
      %v2747 = vmax.f32 %v2715, 0.0
      %v2748 = vmax.f32 %v2716, 0.0
      %v2749 = vmax.f32 %v2717, 0.0
      %v2750 = vmax.f32 %v2718, 0.0
      %v2751 = vmax.f32 %v2719, 0.0
      %v2752 = vmax.f32 %v2720, 0.0
      %v2753 = vmax.f32 %v2721, 0.0
      %v2754 = vmax.f32 %v2722, 0.0
      %v2755 = vmax.f32 %v2723, 0.0
      %v2756 = vmax.f32 %v2724, 0.0
      %v2757 = vmax.f32 %v2725, 0.0
      %v2758 = vmax.f32 %v2726, 0.0
      %v2759 = vmax.f32 %v2727, 0.0
      %v2760 = vmax.f32 %v2728, 0.0
      %v2761 = vmax.f32 %v2729, 0.0
      %v2762 = vmax.f32 %v2730, 0.0
      %v2763 = vmax.f32 %v2731, 0.0
      %v2764 = vmax.f32 %v2732, 0.0
      %v2765 = vmax.f32 %v2733, 0.0
      %v2766 = vmax.f32 %v2734, 0.0
      %v2767 = vmax.f32 %v2735, 0.0
      %v2768 = vmax.f32 %v2736, 0.0
      %v2769 = vmax.f32 %v2737, 0.0
      %v2770 = vmax.f32 %v2738, 0.0
      %v2771 = vmax.f32 %v2739, 0.0
      %v2772 = vmax.f32 %v2740, 0.0
      %v2773 = vmax.f32 %v2741, 0.0
      %v2774 = vmax.f32 %v2742, 0.0
      %v2775 = vmax.f32 %v2743, 0.0
      %v2776 = vmax.f32 %v2744, 0.0
      %v2777 = vmax.f32 %v2745, 0.0
      %v2778 = vpack.c.bf16 %v2747, %v2746
      %v2779 = vpack.c.bf16 %v2749, %v2748
      %v2780 = vpack.c.bf16 %v2751, %v2750
      %v2781 = vpack.c.bf16 %v2753, %v2752
      %v2782 = vpack.c.bf16 %v2755, %v2754
      %v2783 = vpack.c.bf16 %v2757, %v2756
      %v2784 = vpack.c.bf16 %v2759, %v2758
      %v2785 = vpack.c.bf16 %v2761, %v2760
      %v2786 = vpack.c.bf16 %v2763, %v2762
      %v2787 = vpack.c.bf16 %v2765, %v2764
      %v2788 = vpack.c.bf16 %v2767, %v2766
      %v2789 = vpack.c.bf16 %v2769, %v2768
      %v2790 = vpack.c.bf16 %v2771, %v2770
      %v2791 = vpack.c.bf16 %v2773, %v2772
      %v2792 = vpack.c.bf16 %v2775, %v2774
      %v2793 = vpack.c.bf16 %v2777, %v2776
      %v2795 = vshrl.u32 %v2779, 16
      %v2798 = vshrl.u32 %v2778, 16
      %v2801 = vshrl.u32 %v2780, 16
      %v2804 = vshrl.u32 %v2781, 16
      %v2807 = vshrl.u32 %v2782, 16
      %v2810 = vshrl.u32 %v2783, 16
      %v2813 = vshrl.u32 %v2784, 16
      %v2816 = vshrl.u32 %v2785, 16
      %v2819 = vshrl.u32 %v2786, 16
      %v2822 = vshrl.u32 %v2787, 16
      %v2825 = vshrl.u32 %v2788, 16
      %v2828 = vshrl.u32 %v2789, 16
      %v2831 = vshrl.u32 %v2790, 16
      %v2834 = vshrl.u32 %v2791, 16
      %v2837 = vshrl.u32 %v2792, 16
      %v2840 = vshrl.u32 %v2793, 16
      %v2858 = vrot.slane %v2795, 7
      %v2859 = vshll.u32 %v2779, 16
      %v2861 = vor.u32 %v2858, %v2859
      %v2862 = vrot.slane %v2798, 7
      %v2863 = vshll.u32 %v2778, 16
      %v2865 = vor.u32 %v2862, %v2863
      %v2866 = vrot.slane %v2801, 7
      %v2867 = vshll.u32 %v2780, 16
      %v2869 = vor.u32 %v2866, %v2867
      %v2870 = vrot.slane %v2804, 7
      %v2871 = vshll.u32 %v2781, 16
      %v2873 = vor.u32 %v2870, %v2871
      %v2874 = vrot.slane %v2807, 7
      %v2875 = vshll.u32 %v2782, 16
      %v2877 = vor.u32 %v2874, %v2875
      %v2878 = vrot.slane %v2810, 7
      %v2879 = vshll.u32 %v2783, 16
      %v2881 = vor.u32 %v2878, %v2879
      %v2882 = vrot.slane %v2813, 7
      %v2883 = vshll.u32 %v2784, 16
      %v2885 = vor.u32 %v2882, %v2883
      %v2886 = vrot.slane %v2816, 7
      %v2887 = vshll.u32 %v2785, 16
      %v2889 = vor.u32 %v2886, %v2887
      %v2890 = vrot.slane %v2819, 7
      %v2891 = vshll.u32 %v2786, 16
      %v2893 = vor.u32 %v2890, %v2891
      %v2894 = vrot.slane %v2822, 7
      %v2895 = vshll.u32 %v2787, 16
      %v2897 = vor.u32 %v2894, %v2895
      %v2898 = vrot.slane %v2825, 7
      %v2899 = vshll.u32 %v2788, 16
      %v2901 = vor.u32 %v2898, %v2899
      %v2902 = vrot.slane %v2828, 7
      %v2903 = vshll.u32 %v2789, 16
      %v2905 = vor.u32 %v2902, %v2903
      %v2906 = vrot.slane %v2831, 7
      %v2907 = vshll.u32 %v2790, 16
      %v2909 = vor.u32 %v2906, %v2907
      %v2910 = vrot.slane %v2834, 7
      %v2911 = vshll.u32 %v2791, 16
      %v2913 = vor.u32 %v2910, %v2911
      %v2914 = vrot.slane %v2837, 7
      %v2915 = vshll.u32 %v2792, 16
      %v2917 = vor.u32 %v2914, %v2915
      %v2918 = vrot.slane %v2840, 7
      %v2919 = vshll.u32 %v2793, 16
      %v2921 = vor.u32 %v2918, %v2919
      %v2954 = vrot.slane %v2859, 7
      %v2955 = vrot.slane %v2863, 7
      %v2956 = vrot.slane %v2867, 7
      %v2957 = vrot.slane %v2871, 7
      %v2958 = vrot.slane %v2875, 7
      %v2959 = vrot.slane %v2879, 7
      %v2960 = vrot.slane %v2883, 7
      %v2961 = vrot.slane %v2887, 7
      %v2962 = vrot.slane %v2891, 7
      %v2963 = vrot.slane %v2895, 7
      %v2964 = vrot.slane %v2899, 7
      %v2965 = vrot.slane %v2903, 7
      %v2966 = vrot.slane %v2907, 7
      %v2967 = vrot.slane %v2911, 7
      %v2968 = vrot.slane %v2915, 7
      %v2969 = vrot.slane %v2919, 7
      %v2986 = vsel %vm522, %v2795, %v2861
      %v2987 = vsel %vm522, %v2798, %v2865
      %v2988 = vsel %vm522, %v2801, %v2869
      %v2989 = vsel %vm522, %v2804, %v2873
      %v2990 = vsel %vm522, %v2807, %v2877
      %v2991 = vsel %vm522, %v2810, %v2881
      %v2992 = vsel %vm522, %v2813, %v2885
      %v2993 = vsel %vm522, %v2816, %v2889
      %v2994 = vsel %vm522, %v2819, %v2893
      %v2995 = vsel %vm522, %v2822, %v2897
      %v2996 = vsel %vm522, %v2825, %v2901
      %v2997 = vsel %vm522, %v2828, %v2905
      %v2998 = vsel %vm522, %v2831, %v2909
      %v2999 = vsel %vm522, %v2834, %v2913
      %v3000 = vsel %vm522, %v2837, %v2917
      %v3001 = vsel %vm522, %v2840, %v2921
      %v3002 = vsel %vm522, %v2858, %v2954
      %v3003 = vsel %vm522, %v2862, %v2955
      %v3004 = vsel %vm522, %v2866, %v2956
      %v3005 = vsel %vm522, %v2870, %v2957
      %v3006 = vsel %vm522, %v2874, %v2958
      %v3007 = vsel %vm522, %v2878, %v2959
      %v3008 = vsel %vm522, %v2882, %v2960
      %v3009 = vsel %vm522, %v2886, %v2961
      %v3010 = vsel %vm522, %v2890, %v2962
      %v3011 = vsel %vm522, %v2894, %v2963
      %v3012 = vsel %vm522, %v2898, %v2964
      %v3013 = vsel %vm522, %v2902, %v2965
      %v3014 = vsel %vm522, %v2906, %v2966
      %v3015 = vsel %vm522, %v2910, %v2967
      %v3016 = vsel %vm522, %v2914, %v2968
      %v3017 = vsel %vm522, %v2918, %v2969
      %v3018 = vld [vmem:[%s4] sm:$0xf]
      %v3019 = vld [vmem:[%s4 + $0x4] sm:$0xf]
      %v3020 = vld [vmem:[%s4 + $0x8] sm:$0xf]
      %v3021 = vld [vmem:[%s4 + $0xc] sm:$0xf]
      %v3022 = vld [vmem:[%s4 + $0x10] sm:$0xf]
      %v3023 = vld [vmem:[%s4 + $0x14] sm:$0xf]
      %v3024 = vld [vmem:[%s4 + $0x18] sm:$0xf]
      %v3025 = vld [vmem:[%s4 + $0x1c] sm:$0xf]
      %v3026 = vld [vmem:[%s4 + $0x20] sm:$0xf]
      %v3028 = vshrl.u32 %v2986, 16
      %v3030 = vshll.u32 %v2986, 16
      %v3032 = vrot.slane %v3030, 1
      %v3033 = vor.u32 %v3028, %v3032
      %v3035 = vshll.u32 %v3002, 16
      %v3037 = vrot.slane %v3035, 1
      %v3038 = vsel %vm564, %v3033, %v3037
      %v3040 = vshrl.u32 %v2987, 16
      %v3042 = vshll.u32 %v2987, 16
      %v3044 = vrot.slane %v3042, 1
      %v3045 = vor.u32 %v3040, %v3044
      %v3047 = vshll.u32 %v3003, 16
      %v3049 = vrot.slane %v3047, 1
      %v3050 = vsel %vm564, %v3045, %v3049
      %v3052 = vshrl.u32 %v2988, 16
      %v3054 = vshll.u32 %v2988, 16
      %v3056 = vrot.slane %v3054, 1
      %v3057 = vor.u32 %v3052, %v3056
      %v3059 = vshll.u32 %v3004, 16
      %v3061 = vrot.slane %v3059, 1
      %v3062 = vsel %vm564, %v3057, %v3061
      %v3064 = vshrl.u32 %v2989, 16
      %v3066 = vshll.u32 %v2989, 16
      %v3068 = vrot.slane %v3066, 1
      %v3069 = vor.u32 %v3064, %v3068
      %v3071 = vshll.u32 %v3005, 16
      %v3073 = vrot.slane %v3071, 1
      %v3074 = vsel %vm564, %v3069, %v3073
      %v3076 = vshrl.u32 %v2990, 16
      %v3078 = vshll.u32 %v2990, 16
      %v3080 = vrot.slane %v3078, 1
      %v3081 = vor.u32 %v3076, %v3080
      %v3083 = vshll.u32 %v3006, 16
      %v3085 = vrot.slane %v3083, 1
      %v3086 = vsel %vm564, %v3081, %v3085
      %v3088 = vshrl.u32 %v2991, 16
      %v3090 = vshll.u32 %v2991, 16
      %v3092 = vrot.slane %v3090, 1
      %v3093 = vor.u32 %v3088, %v3092
      %v3095 = vshll.u32 %v3007, 16
      %v3097 = vrot.slane %v3095, 1
      %v3098 = vsel %vm564, %v3093, %v3097
      %v3100 = vshrl.u32 %v2992, 16
      %v3102 = vshll.u32 %v2992, 16
      %v3104 = vrot.slane %v3102, 1
      %v3105 = vor.u32 %v3100, %v3104
      %v3107 = vshll.u32 %v3008, 16
      %v3109 = vrot.slane %v3107, 1
      %v3110 = vsel %vm564, %v3105, %v3109
      %v3112 = vshrl.u32 %v2993, 16
      %v3114 = vshll.u32 %v2993, 16
      %v3116 = vrot.slane %v3114, 1
      %v3117 = vor.u32 %v3112, %v3116
      %v3119 = vshll.u32 %v3009, 16
      %v3121 = vrot.slane %v3119, 1
      %v3122 = vsel %vm564, %v3117, %v3121
      %v3124 = vshrl.u32 %v2994, 16
      %v3126 = vshll.u32 %v2994, 16
      %v3128 = vrot.slane %v3126, 1
      %v3129 = vor.u32 %v3124, %v3128
      %v3131 = vshll.u32 %v3010, 16
      %v3133 = vrot.slane %v3131, 1
      %v3134 = vsel %vm564, %v3129, %v3133
      %v3136 = vshrl.u32 %v2995, 16
      %v3138 = vshll.u32 %v2995, 16
      %v3140 = vrot.slane %v3138, 1
      %v3141 = vor.u32 %v3136, %v3140
      %v3143 = vshll.u32 %v3011, 16
      %v3145 = vrot.slane %v3143, 1
      %v3146 = vsel %vm564, %v3141, %v3145
      %v3148 = vshrl.u32 %v2996, 16
      %v3150 = vshll.u32 %v2996, 16
      %v3152 = vrot.slane %v3150, 1
      %v3153 = vor.u32 %v3148, %v3152
      %v3155 = vshll.u32 %v3012, 16
      %v3157 = vrot.slane %v3155, 1
      %v3158 = vsel %vm564, %v3153, %v3157
      %v3160 = vshrl.u32 %v2997, 16
      %v3162 = vshll.u32 %v2997, 16
      %v3164 = vrot.slane %v3162, 1
      %v3165 = vor.u32 %v3160, %v3164
      %v3167 = vshll.u32 %v3013, 16
      %v3169 = vrot.slane %v3167, 1
      %v3170 = vsel %vm564, %v3165, %v3169
      %v3172 = vshrl.u32 %v2998, 16
      %v3174 = vshll.u32 %v2998, 16
      %v3176 = vrot.slane %v3174, 1
      %v3177 = vor.u32 %v3172, %v3176
      %v3179 = vshll.u32 %v3014, 16
      %v3181 = vrot.slane %v3179, 1
      %v3182 = vsel %vm564, %v3177, %v3181
      %v3184 = vshrl.u32 %v2999, 16
      %v3186 = vshll.u32 %v2999, 16
      %v3188 = vrot.slane %v3186, 1
      %v3189 = vor.u32 %v3184, %v3188
      %v3191 = vshll.u32 %v3015, 16
      %v3193 = vrot.slane %v3191, 1
      %v3194 = vsel %vm564, %v3189, %v3193
      %v3196 = vshrl.u32 %v3000, 16
      %v3198 = vshll.u32 %v3000, 16
      %v3200 = vrot.slane %v3198, 1
      %v3201 = vor.u32 %v3196, %v3200
      %v3203 = vshll.u32 %v3016, 16
      %v3205 = vrot.slane %v3203, 1
      %v3206 = vsel %vm564, %v3201, %v3205
      %vm3207 = vcmask 64512
      %v3209 = vsel %vm3207, %v3038, 0
      %v3212 = vsel %vm3207, %v3050, 0
      %v3215 = vsel %vm3207, %v3062, 0
      %v3218 = vsel %vm3207, %v3074, 0
      %v3221 = vsel %vm3207, %v3086, 0
      %v3224 = vsel %vm3207, %v3098, 0
      %v3227 = vsel %vm3207, %v3110, 0
      %v3230 = vsel %vm3207, %v3122, 0
      %v3233 = vsel %vm3207, %v3134, 0
      %v3236 = vsel %vm3207, %v3146, 0
      %v3239 = vsel %vm3207, %v3158, 0
      %v3242 = vsel %vm3207, %v3170, 0
      %v3245 = vsel %vm3207, %v3182, 0
      %v3248 = vsel %vm3207, %v3194, 0
      %v3251 = vsel %vm3207, %v3206, 0
      %vm3253 = vcmask 1043456
      %v3255 = vsel %vm3253, %v3019, 0
      %3257 = vmatprep.subr.bf16.mxu0 0
      %3258 = vmatpush1.bf16.msra.mxu0 0
      %3259 = vmatprep.subr.bf16.mxu0 0
      %3260 = vmatpush1.bf16.msra.mxu0 0
      %3261 = vmatprep.subr.bf16.mxu0 0
      %3262 = vmatpush1.bf16.msra.mxu0 0
      %3263 = vmatprep.subr.bf16.mxu0 0
      %3264 = vmatpush1.bf16.msra.mxu0 0
      %3265 = vmatprep.subr.bf16.mxu0 0
      %3266 = vmatpush1.bf16.msra.mxu0 0
      %3267 = vmatprep.subr.bf16.mxu0 0
      %3268 = vmatpush1.bf16.msra.mxu0 0
      %3269 = vmatprep.subr.bf16.mxu0 0
      %3270 = vmatpush1.bf16.msra.mxu0 0
      %3271 = vmatprep.subr.bf16.mxu0 0
      %3272 = vmatpush1.bf16.msra.mxu0 %v3255
      %3273 = vmatprep.subr.bf16.mxu0 0
      %3274 = vmatpush2.bf16.msra.mxu0 0
      %3275 = vmatprep.subr.bf16.mxu0 0
      %3276 = vmatpush2.bf16.msra.mxu0 0
      %3277 = vmatprep.subr.bf16.mxu0 0
      %3278 = vmatpush2.bf16.msra.mxu0 0
      %3279 = vmatprep.subr.bf16.mxu0 0
      %3280 = vmatpush2.bf16.msra.mxu0 0
      %3281 = vmatprep.subr.bf16.mxu0 0
      %3282 = vmatpush2.bf16.msra.mxu0 0
      %3283 = vmatprep.subr.bf16.mxu0 0
      %3284 = vmatpush2.bf16.msra.mxu0 0
      %3285 = vmatprep.subr.bf16.mxu0 0
      %3286 = vmatpush2.bf16.msra.mxu0 0
      %3287 = vmatprep.subr.bf16.mxu0 0
      %3288 = vmatpush2.bf16.msra.mxu0 0
      %3289 = vmatprep.mubr.bf16.mxu0 0
      %3290 = vmatmul.mubr.bf16.gmra.mxu0 %v3209
      %v3291 = vpop.f32.mrf.mxu0
      %v3292 = vadd.f32 0.0, %v3291
      %v3293 = vpop.f32.mrf.mxu0
      %v3294 = vpop.f32.mrf.mxu0
      %v3295 = vadd.f32 0.0, %v3294
      %v3296 = vpop.f32.mrf.mxu0
      %3297 = vmatprep.mubr.bf16.mxu0 0
      %3298 = vmatmul.mubr.bf16.gmra.mxu0 %v3212
      %v3299 = vpop.f32.mrf.mxu0
      %v3300 = vadd.f32 0.0, %v3299
      %v3301 = vpop.f32.mrf.mxu0
      %v3302 = vpop.f32.mrf.mxu0
      %v3303 = vadd.f32 0.0, %v3302
      %v3304 = vpop.f32.mrf.mxu0
      %3305 = vmatprep.mubr.bf16.mxu0 0
      %3306 = vmatmul.mubr.bf16.gmra.mxu0 %v3209
      %v3307 = vpop.f32.mrf.mxu0
      %v3308 = vadd.f32 0.0, %v3307
      %v3309 = vpop.f32.mrf.mxu0
      %v3310 = vpop.f32.mrf.mxu0
      %v3311 = vadd.f32 0.0, %v3310
      %v3312 = vpop.f32.mrf.mxu0
      %3313 = vmatprep.mubr.bf16.mxu0 0
      %3314 = vmatmul.mubr.bf16.gmra.mxu0 %v3215
      %v3315 = vpop.f32.mrf.mxu0
      %v3316 = vadd.f32 0.0, %v3315
      %v3317 = vpop.f32.mrf.mxu0
      %v3318 = vpop.f32.mrf.mxu0
      %v3319 = vadd.f32 0.0, %v3318
      %v3320 = vpop.f32.mrf.mxu0
      %3321 = vmatprep.mubr.bf16.mxu0 0
      %3322 = vmatmul.mubr.bf16.gmra.mxu0 %v3218
      %v3323 = vpop.f32.mrf.mxu0
      %v3324 = vadd.f32 0.0, %v3323
      %v3325 = vpop.f32.mrf.mxu0
      %v3326 = vpop.f32.mrf.mxu0
      %v3327 = vadd.f32 0.0, %v3326
      %v3328 = vpop.f32.mrf.mxu0
      %3329 = vmatprep.mubr.bf16.mxu0 0
      %3330 = vmatmul.mubr.bf16.gmra.mxu0 %v3221
      %v3331 = vpop.f32.mrf.mxu0
      %v3332 = vadd.f32 0.0, %v3331
      %v3333 = vpop.f32.mrf.mxu0
      %v3334 = vpop.f32.mrf.mxu0
      %v3335 = vadd.f32 0.0, %v3334
      %v3336 = vpop.f32.mrf.mxu0
      %3337 = vmatprep.mubr.bf16.mxu0 0
      %3338 = vmatmul.mubr.bf16.gmra.mxu0 %v3224
      %v3339 = vpop.f32.mrf.mxu0
      %v3340 = vadd.f32 0.0, %v3339
      %v3341 = vpop.f32.mrf.mxu0
      %v3342 = vpop.f32.mrf.mxu0
      %v3343 = vadd.f32 0.0, %v3342
      %v3344 = vpop.f32.mrf.mxu0
      %3345 = vmatprep.mubr.bf16.mxu0 0
      %3346 = vmatmul.mubr.bf16.gmra.mxu0 %v3227
      %v3347 = vpop.f32.mrf.mxu0
      %v3348 = vadd.f32 0.0, %v3347
      %v3349 = vpop.f32.mrf.mxu0
      %v3350 = vpop.f32.mrf.mxu0
      %v3351 = vadd.f32 0.0, %v3350
      %v3352 = vpop.f32.mrf.mxu0
      %3353 = vmatprep.mubr.bf16.mxu0 0
      %3354 = vmatmul.mubr.bf16.gmra.mxu0 %v3230
      %v3355 = vpop.f32.mrf.mxu0
      %v3356 = vadd.f32 0.0, %v3355
      %v3357 = vpop.f32.mrf.mxu0
      %v3358 = vpop.f32.mrf.mxu0
      %v3359 = vadd.f32 0.0, %v3358
      %v3360 = vpop.f32.mrf.mxu0
      %3361 = vmatprep.mubr.bf16.mxu0 0
      %3362 = vmatmul.mubr.bf16.gmra.mxu0 %v3233
      %v3363 = vpop.f32.mrf.mxu0
      %v3364 = vadd.f32 0.0, %v3363
      %v3365 = vpop.f32.mrf.mxu0
      %v3366 = vpop.f32.mrf.mxu0
      %v3367 = vadd.f32 0.0, %v3366
      %v3368 = vpop.f32.mrf.mxu0
      %3369 = vmatprep.mubr.bf16.mxu0 0
      %3370 = vmatmul.mubr.bf16.gmra.mxu0 %v3236
      %v3371 = vpop.f32.mrf.mxu0
      %v3372 = vadd.f32 0.0, %v3371
      %v3373 = vpop.f32.mrf.mxu0
      %v3374 = vpop.f32.mrf.mxu0
      %v3375 = vadd.f32 0.0, %v3374
      %v3376 = vpop.f32.mrf.mxu0
      %3377 = vmatprep.mubr.bf16.mxu0 0
      %3378 = vmatmul.mubr.bf16.gmra.mxu0 %v3239
      %v3379 = vpop.f32.mrf.mxu0
      %v3380 = vadd.f32 0.0, %v3379
      %v3381 = vpop.f32.mrf.mxu0
      %v3382 = vpop.f32.mrf.mxu0
      %v3383 = vadd.f32 0.0, %v3382
      %v3384 = vpop.f32.mrf.mxu0
      %3385 = vmatprep.mubr.bf16.mxu0 0
      %3386 = vmatmul.mubr.bf16.gmra.mxu0 %v3242
      %v3387 = vpop.f32.mrf.mxu0
      %v3388 = vadd.f32 0.0, %v3387
      %v3389 = vpop.f32.mrf.mxu0
      %v3390 = vpop.f32.mrf.mxu0
      %v3391 = vadd.f32 0.0, %v3390
      %v3392 = vpop.f32.mrf.mxu0
      %3393 = vmatprep.mubr.bf16.mxu0 0
      %3394 = vmatmul.mubr.bf16.gmra.mxu0 %v3245
      %v3395 = vpop.f32.mrf.mxu0
      %v3396 = vadd.f32 0.0, %v3395
      %v3397 = vpop.f32.mrf.mxu0
      %v3398 = vpop.f32.mrf.mxu0
      %v3399 = vadd.f32 0.0, %v3398
      %v3400 = vpop.f32.mrf.mxu0
      %3401 = vmatprep.mubr.bf16.mxu0 0
      %3402 = vmatmul.mubr.bf16.gmra.mxu0 %v3248
      %v3403 = vpop.f32.mrf.mxu0
      %v3404 = vadd.f32 0.0, %v3403
      %v3405 = vpop.f32.mrf.mxu0
      %v3406 = vpop.f32.mrf.mxu0
      %v3407 = vadd.f32 0.0, %v3406
      %v3408 = vpop.f32.mrf.mxu0
      %3409 = vmatprep.mubr.bf16.mxu0 0
      %3410 = vmatmul.mubr.bf16.gmra.mxu0 %v3251
      %v3411 = vpop.f32.mrf.mxu0
      %v3412 = vadd.f32 0.0, %v3411
      %v3413 = vpop.f32.mrf.mxu0
      %v3414 = vpop.f32.mrf.mxu0
      %v3415 = vadd.f32 0.0, %v3414
      %v3416 = vpop.f32.mrf.mxu0
      %3417 = vdwg.mxu0
      %v3418 = vsel %vm3207, %v2986, 0
      %v3420 = vsel %vm3207, %v2987, 0
      %v3422 = vsel %vm3207, %v2988, 0
      %v3424 = vsel %vm3207, %v2989, 0
      %v3426 = vsel %vm3207, %v2990, 0
      %v3428 = vsel %vm3207, %v2991, 0
      %v3430 = vsel %vm3207, %v2992, 0
      %v3432 = vsel %vm3207, %v2993, 0
      %v3434 = vsel %vm3207, %v2994, 0
      %v3436 = vsel %vm3207, %v2995, 0
      %v3438 = vsel %vm3207, %v2996, 0
      %v3440 = vsel %vm3207, %v2997, 0
      %v3442 = vsel %vm3207, %v2998, 0
      %v3444 = vsel %vm3207, %v2999, 0
      %v3446 = vsel %vm3207, %v3000, 0
      %v3449 = vsel %vm3253, %v3018, 0
      %3451 = vmatprep.subr.bf16.mxu0 0
      %3452 = vmatpush1.bf16.msra.mxu0 0
      %3453 = vmatprep.subr.bf16.mxu0 0
      %3454 = vmatpush1.bf16.msra.mxu0 0
      %3455 = vmatprep.subr.bf16.mxu0 0
      %3456 = vmatpush1.bf16.msra.mxu0 0
      %3457 = vmatprep.subr.bf16.mxu0 0
      %3458 = vmatpush1.bf16.msra.mxu0 0
      %3459 = vmatprep.subr.bf16.mxu0 0
      %3460 = vmatpush1.bf16.msra.mxu0 0
      %3461 = vmatprep.subr.bf16.mxu0 0
      %3462 = vmatpush1.bf16.msra.mxu0 0
      %3463 = vmatprep.subr.bf16.mxu0 0
      %3464 = vmatpush1.bf16.msra.mxu0 0
      %3465 = vmatprep.subr.bf16.mxu0 0
      %3466 = vmatpush1.bf16.msra.mxu0 %v3449
      %3467 = vmatprep.subr.bf16.mxu0 0
      %3468 = vmatpush2.bf16.msra.mxu0 0
      %3469 = vmatprep.subr.bf16.mxu0 0
      %3470 = vmatpush2.bf16.msra.mxu0 0
      %3471 = vmatprep.subr.bf16.mxu0 0
      %3472 = vmatpush2.bf16.msra.mxu0 0
      %3473 = vmatprep.subr.bf16.mxu0 0
      %3474 = vmatpush2.bf16.msra.mxu0 0
      %3475 = vmatprep.subr.bf16.mxu0 0
      %3476 = vmatpush2.bf16.msra.mxu0 0
      %3477 = vmatprep.subr.bf16.mxu0 0
      %3478 = vmatpush2.bf16.msra.mxu0 0
      %3479 = vmatprep.subr.bf16.mxu0 0
      %3480 = vmatpush2.bf16.msra.mxu0 0
      %3481 = vmatprep.subr.bf16.mxu0 0
      %3482 = vmatpush2.bf16.msra.mxu0 0
      %3483 = vmatprep.mubr.bf16.mxu0 0
      %3484 = vmatmul.mubr.bf16.gmra.mxu0 %v3418
      %v3485 = vpop.f32.mrf.mxu0
      %v3486 = vadd.f32 %v3292, %v3485
      %v3487 = vpop.f32.mrf.mxu0
      %v3488 = vpop.f32.mrf.mxu0
      %v3489 = vadd.f32 %v3295, %v3488
      %v3490 = vpop.f32.mrf.mxu0
      %3491 = vmatprep.mubr.bf16.mxu0 0
      %3492 = vmatmul.mubr.bf16.gmra.mxu0 %v3420
      %v3493 = vpop.f32.mrf.mxu0
      %v3494 = vadd.f32 %v3300, %v3493
      %v3495 = vpop.f32.mrf.mxu0
      %v3496 = vpop.f32.mrf.mxu0
      %v3497 = vadd.f32 %v3303, %v3496
      %v3498 = vpop.f32.mrf.mxu0
      %3499 = vmatprep.mubr.bf16.mxu0 0
      %3500 = vmatmul.mubr.bf16.gmra.mxu0 %v3418
      %v3501 = vpop.f32.mrf.mxu0
      %v3502 = vadd.f32 %v3308, %v3501
      %v3503 = vpop.f32.mrf.mxu0
      %v3504 = vpop.f32.mrf.mxu0
      %v3505 = vadd.f32 %v3311, %v3504
      %v3506 = vpop.f32.mrf.mxu0
      %3507 = vmatprep.mubr.bf16.mxu0 0
      %3508 = vmatmul.mubr.bf16.gmra.mxu0 %v3422
      %v3509 = vpop.f32.mrf.mxu0
      %v3510 = vadd.f32 %v3316, %v3509
      %v3511 = vpop.f32.mrf.mxu0
      %v3512 = vpop.f32.mrf.mxu0
      %v3513 = vadd.f32 %v3319, %v3512
      %v3514 = vpop.f32.mrf.mxu0
      %3515 = vmatprep.mubr.bf16.mxu0 0
      %3516 = vmatmul.mubr.bf16.gmra.mxu0 %v3424
      %v3517 = vpop.f32.mrf.mxu0
      %v3518 = vadd.f32 %v3324, %v3517
      %v3519 = vpop.f32.mrf.mxu0
      %v3520 = vpop.f32.mrf.mxu0
      %v3521 = vadd.f32 %v3327, %v3520
      %v3522 = vpop.f32.mrf.mxu0
      %3523 = vmatprep.mubr.bf16.mxu0 0
      %3524 = vmatmul.mubr.bf16.gmra.mxu0 %v3426
      %v3525 = vpop.f32.mrf.mxu0
      %v3526 = vadd.f32 %v3332, %v3525
      %v3527 = vpop.f32.mrf.mxu0
      %v3528 = vpop.f32.mrf.mxu0
      %v3529 = vadd.f32 %v3335, %v3528
      %v3530 = vpop.f32.mrf.mxu0
      %3531 = vmatprep.mubr.bf16.mxu0 0
      %3532 = vmatmul.mubr.bf16.gmra.mxu0 %v3428
      %v3533 = vpop.f32.mrf.mxu0
      %v3534 = vadd.f32 %v3340, %v3533
      %v3535 = vpop.f32.mrf.mxu0
      %v3536 = vpop.f32.mrf.mxu0
      %v3537 = vadd.f32 %v3343, %v3536
      %v3538 = vpop.f32.mrf.mxu0
      %3539 = vmatprep.mubr.bf16.mxu0 0
      %3540 = vmatmul.mubr.bf16.gmra.mxu0 %v3430
      %v3541 = vpop.f32.mrf.mxu0
      %v3542 = vadd.f32 %v3348, %v3541
      %v3543 = vpop.f32.mrf.mxu0
      %v3544 = vpop.f32.mrf.mxu0
      %v3545 = vadd.f32 %v3351, %v3544
      %v3546 = vpop.f32.mrf.mxu0
      %3547 = vmatprep.mubr.bf16.mxu0 0
      %3548 = vmatmul.mubr.bf16.gmra.mxu0 %v3432
      %v3549 = vpop.f32.mrf.mxu0
      %v3550 = vadd.f32 %v3356, %v3549
      %v3551 = vpop.f32.mrf.mxu0
      %v3552 = vpop.f32.mrf.mxu0
      %v3553 = vadd.f32 %v3359, %v3552
      %v3554 = vpop.f32.mrf.mxu0
      %3555 = vmatprep.mubr.bf16.mxu0 0
      %3556 = vmatmul.mubr.bf16.gmra.mxu0 %v3434
      %v3557 = vpop.f32.mrf.mxu0
      %v3558 = vadd.f32 %v3364, %v3557
      %v3559 = vpop.f32.mrf.mxu0
      %v3560 = vpop.f32.mrf.mxu0
      %v3561 = vadd.f32 %v3367, %v3560
      %v3562 = vpop.f32.mrf.mxu0
      %3563 = vmatprep.mubr.bf16.mxu0 0
      %3564 = vmatmul.mubr.bf16.gmra.mxu0 %v3436
      %v3565 = vpop.f32.mrf.mxu0
      %v3566 = vadd.f32 %v3372, %v3565
      %v3567 = vpop.f32.mrf.mxu0
      %v3568 = vpop.f32.mrf.mxu0
      %v3569 = vadd.f32 %v3375, %v3568
      %v3570 = vpop.f32.mrf.mxu0
      %3571 = vmatprep.mubr.bf16.mxu0 0
      %3572 = vmatmul.mubr.bf16.gmra.mxu0 %v3438
      %v3573 = vpop.f32.mrf.mxu0
      %v3574 = vadd.f32 %v3380, %v3573
      %v3575 = vpop.f32.mrf.mxu0
      %v3576 = vpop.f32.mrf.mxu0
      %v3577 = vadd.f32 %v3383, %v3576
      %v3578 = vpop.f32.mrf.mxu0
      %3579 = vmatprep.mubr.bf16.mxu0 0
      %3580 = vmatmul.mubr.bf16.gmra.mxu0 %v3440
      %v3581 = vpop.f32.mrf.mxu0
      %v3582 = vadd.f32 %v3388, %v3581
      %v3583 = vpop.f32.mrf.mxu0
      %v3584 = vpop.f32.mrf.mxu0
      %v3585 = vadd.f32 %v3391, %v3584
      %v3586 = vpop.f32.mrf.mxu0
      %3587 = vmatprep.mubr.bf16.mxu0 0
      %3588 = vmatmul.mubr.bf16.gmra.mxu0 %v3442
      %v3589 = vpop.f32.mrf.mxu0
      %v3590 = vadd.f32 %v3396, %v3589
      %v3591 = vpop.f32.mrf.mxu0
      %v3592 = vpop.f32.mrf.mxu0
      %v3593 = vadd.f32 %v3399, %v3592
      %v3594 = vpop.f32.mrf.mxu0
      %3595 = vmatprep.mubr.bf16.mxu0 0
      %3596 = vmatmul.mubr.bf16.gmra.mxu0 %v3444
      %v3597 = vpop.f32.mrf.mxu0
      %v3598 = vadd.f32 %v3404, %v3597
      %v3599 = vpop.f32.mrf.mxu0
      %v3600 = vpop.f32.mrf.mxu0
      %v3601 = vadd.f32 %v3407, %v3600
      %v3602 = vpop.f32.mrf.mxu0
      %3603 = vmatprep.mubr.bf16.mxu0 0
      %3604 = vmatmul.mubr.bf16.gmra.mxu0 %v3446
      %v3605 = vpop.f32.mrf.mxu0
      %v3606 = vadd.f32 %v3412, %v3605
      %v3607 = vpop.f32.mrf.mxu0
      %v3608 = vpop.f32.mrf.mxu0
      %v3609 = vadd.f32 %v3415, %v3608
      %v3610 = vpop.f32.mrf.mxu0
      %3611 = vdwg.mxu0
      %v3642 = vrot.slane %v2986, 1
      %v3643 = vrot.slane %v3002, 1
      %v3644 = vsel %vm1180, %v3642, %v3643
      %v3645 = vrot.slane %v2987, 1
      %v3646 = vrot.slane %v3003, 1
      %v3647 = vsel %vm1180, %v3645, %v3646
      %v3648 = vrot.slane %v2988, 1
      %v3649 = vrot.slane %v3004, 1
      %v3650 = vsel %vm1180, %v3648, %v3649
      %v3651 = vrot.slane %v2989, 1
      %v3652 = vrot.slane %v3005, 1
      %v3653 = vsel %vm1180, %v3651, %v3652
      %v3654 = vrot.slane %v2990, 1
      %v3655 = vrot.slane %v3006, 1
      %v3656 = vsel %vm1180, %v3654, %v3655
      %v3657 = vrot.slane %v2991, 1
      %v3658 = vrot.slane %v3007, 1
      %v3659 = vsel %vm1180, %v3657, %v3658
      %v3660 = vrot.slane %v2992, 1
      %v3661 = vrot.slane %v3008, 1
      %v3662 = vsel %vm1180, %v3660, %v3661
      %v3663 = vrot.slane %v2993, 1
      %v3664 = vrot.slane %v3009, 1
      %v3665 = vsel %vm1180, %v3663, %v3664
      %v3666 = vrot.slane %v2994, 1
      %v3667 = vrot.slane %v3010, 1
      %v3668 = vsel %vm1180, %v3666, %v3667
      %v3669 = vrot.slane %v2995, 1
      %v3670 = vrot.slane %v3011, 1
      %v3671 = vsel %vm1180, %v3669, %v3670
      %v3672 = vrot.slane %v2996, 1
      %v3673 = vrot.slane %v3012, 1
      %v3674 = vsel %vm1180, %v3672, %v3673
      %v3675 = vrot.slane %v2997, 1
      %v3676 = vrot.slane %v3013, 1
      %v3677 = vsel %vm1180, %v3675, %v3676
      %v3678 = vrot.slane %v2998, 1
      %v3679 = vrot.slane %v3014, 1
      %v3680 = vsel %vm1180, %v3678, %v3679
      %v3681 = vrot.slane %v2999, 1
      %v3682 = vrot.slane %v3015, 1
      %v3683 = vsel %vm1180, %v3681, %v3682
      %v3684 = vrot.slane %v3000, 1
      %v3685 = vrot.slane %v3016, 1
      %v3686 = vsel %vm1180, %v3684, %v3685
      %v3688 = vsel %vm3207, %v3644, 0
      %v3691 = vsel %vm3207, %v3647, 0
      %v3694 = vsel %vm3207, %v3650, 0
      %v3697 = vsel %vm3207, %v3653, 0
      %v3700 = vsel %vm3207, %v3656, 0
      %v3703 = vsel %vm3207, %v3659, 0
      %v3706 = vsel %vm3207, %v3662, 0
      %v3709 = vsel %vm3207, %v3665, 0
      %v3712 = vsel %vm3207, %v3668, 0
      %v3715 = vsel %vm3207, %v3671, 0
      %v3718 = vsel %vm3207, %v3674, 0
      %v3721 = vsel %vm3207, %v3677, 0
      %v3724 = vsel %vm3207, %v3680, 0
      %v3727 = vsel %vm3207, %v3683, 0
      %v3730 = vsel %vm3207, %v3686, 0
      %v3733 = vsel %vm3253, %v3020, 0
      %3735 = vmatprep.subr.bf16.mxu0 0
      %3736 = vmatpush1.bf16.msra.mxu0 0
      %3737 = vmatprep.subr.bf16.mxu0 0
      %3738 = vmatpush1.bf16.msra.mxu0 0
      %3739 = vmatprep.subr.bf16.mxu0 0
      %3740 = vmatpush1.bf16.msra.mxu0 0
      %3741 = vmatprep.subr.bf16.mxu0 0
      %3742 = vmatpush1.bf16.msra.mxu0 0
      %3743 = vmatprep.subr.bf16.mxu0 0
      %3744 = vmatpush1.bf16.msra.mxu0 0
      %3745 = vmatprep.subr.bf16.mxu0 0
      %3746 = vmatpush1.bf16.msra.mxu0 0
      %3747 = vmatprep.subr.bf16.mxu0 0
      %3748 = vmatpush1.bf16.msra.mxu0 0
      %3749 = vmatprep.subr.bf16.mxu0 0
      %3750 = vmatpush1.bf16.msra.mxu0 %v3733
      %3751 = vmatprep.subr.bf16.mxu0 0
      %3752 = vmatpush2.bf16.msra.mxu0 0
      %3753 = vmatprep.subr.bf16.mxu0 0
      %3754 = vmatpush2.bf16.msra.mxu0 0
      %3755 = vmatprep.subr.bf16.mxu0 0
      %3756 = vmatpush2.bf16.msra.mxu0 0
      %3757 = vmatprep.subr.bf16.mxu0 0
      %3758 = vmatpush2.bf16.msra.mxu0 0
      %3759 = vmatprep.subr.bf16.mxu0 0
      %3760 = vmatpush2.bf16.msra.mxu0 0
      %3761 = vmatprep.subr.bf16.mxu0 0
      %3762 = vmatpush2.bf16.msra.mxu0 0
      %3763 = vmatprep.subr.bf16.mxu0 0
      %3764 = vmatpush2.bf16.msra.mxu0 0
      %3765 = vmatprep.subr.bf16.mxu0 0
      %3766 = vmatpush2.bf16.msra.mxu0 0
      %3767 = vmatprep.mubr.bf16.mxu0 0
      %3768 = vmatmul.mubr.bf16.gmra.mxu0 %v3688
      %v3769 = vpop.f32.mrf.mxu0
      %v3770 = vadd.f32 0.0, %v3769
      %v3771 = vpop.f32.mrf.mxu0
      %v3772 = vpop.f32.mrf.mxu0
      %v3773 = vadd.f32 0.0, %v3772
      %v3774 = vpop.f32.mrf.mxu0
      %3775 = vmatprep.mubr.bf16.mxu0 0
      %3776 = vmatmul.mubr.bf16.gmra.mxu0 %v3691
      %v3777 = vpop.f32.mrf.mxu0
      %v3778 = vadd.f32 0.0, %v3777
      %v3779 = vpop.f32.mrf.mxu0
      %v3780 = vpop.f32.mrf.mxu0
      %v3781 = vadd.f32 0.0, %v3780
      %v3782 = vpop.f32.mrf.mxu0
      %3783 = vmatprep.mubr.bf16.mxu0 0
      %3784 = vmatmul.mubr.bf16.gmra.mxu0 %v3688
      %v3785 = vpop.f32.mrf.mxu0
      %v3786 = vadd.f32 0.0, %v3785
      %v3787 = vpop.f32.mrf.mxu0
      %v3788 = vpop.f32.mrf.mxu0
      %v3789 = vadd.f32 0.0, %v3788
      %v3790 = vpop.f32.mrf.mxu0
      %3791 = vmatprep.mubr.bf16.mxu0 0
      %3792 = vmatmul.mubr.bf16.gmra.mxu0 %v3694
      %v3793 = vpop.f32.mrf.mxu0
      %v3794 = vadd.f32 0.0, %v3793
      %v3795 = vpop.f32.mrf.mxu0
      %v3796 = vpop.f32.mrf.mxu0
      %v3797 = vadd.f32 0.0, %v3796
      %v3798 = vpop.f32.mrf.mxu0
      %3799 = vmatprep.mubr.bf16.mxu0 0
      %3800 = vmatmul.mubr.bf16.gmra.mxu0 %v3697
      %v3801 = vpop.f32.mrf.mxu0
      %v3802 = vadd.f32 0.0, %v3801
      %v3803 = vpop.f32.mrf.mxu0
      %v3804 = vpop.f32.mrf.mxu0
      %v3805 = vadd.f32 0.0, %v3804
      %v3806 = vpop.f32.mrf.mxu0
      %3807 = vmatprep.mubr.bf16.mxu0 0
      %3808 = vmatmul.mubr.bf16.gmra.mxu0 %v3700
      %v3809 = vpop.f32.mrf.mxu0
      %v3810 = vadd.f32 0.0, %v3809
      %v3811 = vpop.f32.mrf.mxu0
      %v3812 = vpop.f32.mrf.mxu0
      %v3813 = vadd.f32 0.0, %v3812
      %v3814 = vpop.f32.mrf.mxu0
      %3815 = vmatprep.mubr.bf16.mxu0 0
      %3816 = vmatmul.mubr.bf16.gmra.mxu0 %v3703
      %v3817 = vpop.f32.mrf.mxu0
      %v3818 = vadd.f32 0.0, %v3817
      %v3819 = vpop.f32.mrf.mxu0
      %v3820 = vpop.f32.mrf.mxu0
      %v3821 = vadd.f32 0.0, %v3820
      %v3822 = vpop.f32.mrf.mxu0
      %3823 = vmatprep.mubr.bf16.mxu0 0
      %3824 = vmatmul.mubr.bf16.gmra.mxu0 %v3706
      %v3825 = vpop.f32.mrf.mxu0
      %v3826 = vadd.f32 0.0, %v3825
      %v3827 = vpop.f32.mrf.mxu0
      %v3828 = vpop.f32.mrf.mxu0
      %v3829 = vadd.f32 0.0, %v3828
      %v3830 = vpop.f32.mrf.mxu0
      %3831 = vmatprep.mubr.bf16.mxu0 0
      %3832 = vmatmul.mubr.bf16.gmra.mxu0 %v3709
      %v3833 = vpop.f32.mrf.mxu0
      %v3834 = vadd.f32 0.0, %v3833
      %v3835 = vpop.f32.mrf.mxu0
      %v3836 = vpop.f32.mrf.mxu0
      %v3837 = vadd.f32 0.0, %v3836
      %v3838 = vpop.f32.mrf.mxu0
      %3839 = vmatprep.mubr.bf16.mxu0 0
      %3840 = vmatmul.mubr.bf16.gmra.mxu0 %v3712
      %v3841 = vpop.f32.mrf.mxu0
      %v3842 = vadd.f32 0.0, %v3841
      %v3843 = vpop.f32.mrf.mxu0
      %v3844 = vpop.f32.mrf.mxu0
      %v3845 = vadd.f32 0.0, %v3844
      %v3846 = vpop.f32.mrf.mxu0
      %3847 = vmatprep.mubr.bf16.mxu0 0
      %3848 = vmatmul.mubr.bf16.gmra.mxu0 %v3715
      %v3849 = vpop.f32.mrf.mxu0
      %v3850 = vadd.f32 0.0, %v3849
      %v3851 = vpop.f32.mrf.mxu0
      %v3852 = vpop.f32.mrf.mxu0
      %v3853 = vadd.f32 0.0, %v3852
      %v3854 = vpop.f32.mrf.mxu0
      %3855 = vmatprep.mubr.bf16.mxu0 0
      %3856 = vmatmul.mubr.bf16.gmra.mxu0 %v3718
      %v3857 = vpop.f32.mrf.mxu0
      %v3858 = vadd.f32 0.0, %v3857
      %v3859 = vpop.f32.mrf.mxu0
      %v3860 = vpop.f32.mrf.mxu0
      %v3861 = vadd.f32 0.0, %v3860
      %v3862 = vpop.f32.mrf.mxu0
      %3863 = vmatprep.mubr.bf16.mxu0 0
      %3864 = vmatmul.mubr.bf16.gmra.mxu0 %v3721
      %v3865 = vpop.f32.mrf.mxu0
      %v3866 = vadd.f32 0.0, %v3865
      %v3867 = vpop.f32.mrf.mxu0
      %v3868 = vpop.f32.mrf.mxu0
      %v3869 = vadd.f32 0.0, %v3868
      %v3870 = vpop.f32.mrf.mxu0
      %3871 = vmatprep.mubr.bf16.mxu0 0
      %3872 = vmatmul.mubr.bf16.gmra.mxu0 %v3724
      %v3873 = vpop.f32.mrf.mxu0
      %v3874 = vadd.f32 0.0, %v3873
      %v3875 = vpop.f32.mrf.mxu0
      %v3876 = vpop.f32.mrf.mxu0
      %v3877 = vadd.f32 0.0, %v3876
      %v3878 = vpop.f32.mrf.mxu0
      %3879 = vmatprep.mubr.bf16.mxu0 0
      %3880 = vmatmul.mubr.bf16.gmra.mxu0 %v3727
      %v3881 = vpop.f32.mrf.mxu0
      %v3882 = vadd.f32 0.0, %v3881
      %v3883 = vpop.f32.mrf.mxu0
      %v3884 = vpop.f32.mrf.mxu0
      %v3885 = vadd.f32 0.0, %v3884
      %v3886 = vpop.f32.mrf.mxu0
      %3887 = vmatprep.mubr.bf16.mxu0 0
      %3888 = vmatmul.mubr.bf16.gmra.mxu0 %v3730
      %v3889 = vpop.f32.mrf.mxu0
      %v3890 = vadd.f32 0.0, %v3889
      %v3891 = vpop.f32.mrf.mxu0
      %v3892 = vpop.f32.mrf.mxu0
      %v3893 = vadd.f32 0.0, %v3892
      %v3894 = vpop.f32.mrf.mxu0
      %3895 = vdwg.mxu0
      %v3896 = vadd.f32 %v3486, %v3770
      %v3897 = vadd.f32 %v3489, %v3773
      %v3898 = vadd.f32 %v3494, %v3778
      %v3899 = vadd.f32 %v3497, %v3781
      %v3900 = vadd.f32 %v3502, %v3786
      %v3901 = vadd.f32 %v3505, %v3789
      %v3902 = vadd.f32 %v3510, %v3794
      %v3903 = vadd.f32 %v3513, %v3797
      %v3904 = vadd.f32 %v3518, %v3802
      %v3905 = vadd.f32 %v3521, %v3805
      %v3906 = vadd.f32 %v3526, %v3810
      %v3907 = vadd.f32 %v3529, %v3813
      %v3908 = vadd.f32 %v3534, %v3818
      %v3909 = vadd.f32 %v3537, %v3821
      %v3910 = vadd.f32 %v3542, %v3826
      %v3911 = vadd.f32 %v3545, %v3829
      %v3912 = vadd.f32 %v3550, %v3834
      %v3913 = vadd.f32 %v3553, %v3837
      %v3914 = vadd.f32 %v3558, %v3842
      %v3915 = vadd.f32 %v3561, %v3845
      %v3916 = vadd.f32 %v3566, %v3850
      %v3917 = vadd.f32 %v3569, %v3853
      %v3918 = vadd.f32 %v3574, %v3858
      %v3919 = vadd.f32 %v3577, %v3861
      %v3920 = vadd.f32 %v3582, %v3866
      %v3921 = vadd.f32 %v3585, %v3869
      %v3922 = vadd.f32 %v3590, %v3874
      %v3923 = vadd.f32 %v3593, %v3877
      %v3924 = vadd.f32 %v3598, %v3882
      %v3925 = vadd.f32 %v3601, %v3885
      %v3926 = vadd.f32 %v3606, %v3890
      %v3927 = vadd.f32 %v3609, %v3893
      %v3929 = vsel %vm3207, %v3001, 0
      %v3932 = vsel %vm3253, %v3021, 0
      %3934 = vmatprep.subr.bf16.mxu0 0
      %3935 = vmatpush1.bf16.msra.mxu0 0
      %3936 = vmatprep.subr.bf16.mxu0 0
      %3937 = vmatpush1.bf16.msra.mxu0 0
      %3938 = vmatprep.subr.bf16.mxu0 0
      %3939 = vmatpush1.bf16.msra.mxu0 0
      %3940 = vmatprep.subr.bf16.mxu0 0
      %3941 = vmatpush1.bf16.msra.mxu0 0
      %3942 = vmatprep.subr.bf16.mxu0 0
      %3943 = vmatpush1.bf16.msra.mxu0 0
      %3944 = vmatprep.subr.bf16.mxu0 0
      %3945 = vmatpush1.bf16.msra.mxu0 0
      %3946 = vmatprep.subr.bf16.mxu0 0
      %3947 = vmatpush1.bf16.msra.mxu0 0
      %3948 = vmatprep.subr.bf16.mxu0 0
      %3949 = vmatpush1.bf16.msra.mxu0 %v3932
      %3950 = vmatprep.subr.bf16.mxu0 0
      %3951 = vmatpush2.bf16.msra.mxu0 0
      %3952 = vmatprep.subr.bf16.mxu0 0
      %3953 = vmatpush2.bf16.msra.mxu0 0
      %3954 = vmatprep.subr.bf16.mxu0 0
      %3955 = vmatpush2.bf16.msra.mxu0 0
      %3956 = vmatprep.subr.bf16.mxu0 0
      %3957 = vmatpush2.bf16.msra.mxu0 0
      %3958 = vmatprep.subr.bf16.mxu0 0
      %3959 = vmatpush2.bf16.msra.mxu0 0
      %3960 = vmatprep.subr.bf16.mxu0 0
      %3961 = vmatpush2.bf16.msra.mxu0 0
      %3962 = vmatprep.subr.bf16.mxu0 0
      %3963 = vmatpush2.bf16.msra.mxu0 0
      %3964 = vmatprep.subr.bf16.mxu0 0
      %3965 = vmatpush2.bf16.msra.mxu0 0
      %3966 = vmatprep.mubr.bf16.mxu0 0
      %3967 = vmatmul.mubr.bf16.gmra.mxu0 %v3420
      %v3968 = vpop.f32.mrf.mxu0
      %v3969 = vadd.f32 0.0, %v3968
      %v3970 = vpop.f32.mrf.mxu0
      %v3971 = vpop.f32.mrf.mxu0
      %v3972 = vadd.f32 0.0, %v3971
      %v3973 = vpop.f32.mrf.mxu0
      %3974 = vmatprep.mubr.bf16.mxu0 0
      %3975 = vmatmul.mubr.bf16.gmra.mxu0 %v3418
      %v3976 = vpop.f32.mrf.mxu0
      %v3977 = vadd.f32 0.0, %v3976
      %v3978 = vpop.f32.mrf.mxu0
      %v3979 = vpop.f32.mrf.mxu0
      %v3980 = vadd.f32 0.0, %v3979
      %v3981 = vpop.f32.mrf.mxu0
      %3982 = vmatprep.mubr.bf16.mxu0 0
      %3983 = vmatmul.mubr.bf16.gmra.mxu0 %v3422
      %v3984 = vpop.f32.mrf.mxu0
      %v3985 = vadd.f32 0.0, %v3984
      %v3986 = vpop.f32.mrf.mxu0
      %v3987 = vpop.f32.mrf.mxu0
      %v3988 = vadd.f32 0.0, %v3987
      %v3989 = vpop.f32.mrf.mxu0
      %3990 = vmatprep.mubr.bf16.mxu0 0
      %3991 = vmatmul.mubr.bf16.gmra.mxu0 %v3424
      %v3992 = vpop.f32.mrf.mxu0
      %v3993 = vadd.f32 0.0, %v3992
      %v3994 = vpop.f32.mrf.mxu0
      %v3995 = vpop.f32.mrf.mxu0
      %v3996 = vadd.f32 0.0, %v3995
      %v3997 = vpop.f32.mrf.mxu0
      %3998 = vmatprep.mubr.bf16.mxu0 0
      %3999 = vmatmul.mubr.bf16.gmra.mxu0 %v3426
      %v4000 = vpop.f32.mrf.mxu0
      %v4001 = vadd.f32 0.0, %v4000
      %v4002 = vpop.f32.mrf.mxu0
      %v4003 = vpop.f32.mrf.mxu0
      %v4004 = vadd.f32 0.0, %v4003
      %v4005 = vpop.f32.mrf.mxu0
      %4006 = vmatprep.mubr.bf16.mxu0 0
      %4007 = vmatmul.mubr.bf16.gmra.mxu0 %v3428
      %v4008 = vpop.f32.mrf.mxu0
      %v4009 = vadd.f32 0.0, %v4008
      %v4010 = vpop.f32.mrf.mxu0
      %v4011 = vpop.f32.mrf.mxu0
      %v4012 = vadd.f32 0.0, %v4011
      %v4013 = vpop.f32.mrf.mxu0
      %4014 = vmatprep.mubr.bf16.mxu0 0
      %4015 = vmatmul.mubr.bf16.gmra.mxu0 %v3430
      %v4016 = vpop.f32.mrf.mxu0
      %v4017 = vadd.f32 0.0, %v4016
      %v4018 = vpop.f32.mrf.mxu0
      %v4019 = vpop.f32.mrf.mxu0
      %v4020 = vadd.f32 0.0, %v4019
      %v4021 = vpop.f32.mrf.mxu0
      %4022 = vmatprep.mubr.bf16.mxu0 0
      %4023 = vmatmul.mubr.bf16.gmra.mxu0 %v3432
      %v4024 = vpop.f32.mrf.mxu0
      %v4025 = vadd.f32 0.0, %v4024
      %v4026 = vpop.f32.mrf.mxu0
      %v4027 = vpop.f32.mrf.mxu0
      %v4028 = vadd.f32 0.0, %v4027
      %v4029 = vpop.f32.mrf.mxu0
      %4030 = vmatprep.mubr.bf16.mxu0 0
      %4031 = vmatmul.mubr.bf16.gmra.mxu0 %v3434
      %v4032 = vpop.f32.mrf.mxu0
      %v4033 = vadd.f32 0.0, %v4032
      %v4034 = vpop.f32.mrf.mxu0
      %v4035 = vpop.f32.mrf.mxu0
      %v4036 = vadd.f32 0.0, %v4035
      %v4037 = vpop.f32.mrf.mxu0
      %4038 = vmatprep.mubr.bf16.mxu0 0
      %4039 = vmatmul.mubr.bf16.gmra.mxu0 %v3436
      %v4040 = vpop.f32.mrf.mxu0
      %v4041 = vadd.f32 0.0, %v4040
      %v4042 = vpop.f32.mrf.mxu0
      %v4043 = vpop.f32.mrf.mxu0
      %v4044 = vadd.f32 0.0, %v4043
      %v4045 = vpop.f32.mrf.mxu0
      %4046 = vmatprep.mubr.bf16.mxu0 0
      %4047 = vmatmul.mubr.bf16.gmra.mxu0 %v3438
      %v4048 = vpop.f32.mrf.mxu0
      %v4049 = vadd.f32 0.0, %v4048
      %v4050 = vpop.f32.mrf.mxu0
      %v4051 = vpop.f32.mrf.mxu0
      %v4052 = vadd.f32 0.0, %v4051
      %v4053 = vpop.f32.mrf.mxu0
      %4054 = vmatprep.mubr.bf16.mxu0 0
      %4055 = vmatmul.mubr.bf16.gmra.mxu0 %v3440
      %v4056 = vpop.f32.mrf.mxu0
      %v4057 = vadd.f32 0.0, %v4056
      %v4058 = vpop.f32.mrf.mxu0
      %v4059 = vpop.f32.mrf.mxu0
      %v4060 = vadd.f32 0.0, %v4059
      %v4061 = vpop.f32.mrf.mxu0
      %4062 = vmatprep.mubr.bf16.mxu0 0
      %4063 = vmatmul.mubr.bf16.gmra.mxu0 %v3442
      %v4064 = vpop.f32.mrf.mxu0
      %v4065 = vadd.f32 0.0, %v4064
      %v4066 = vpop.f32.mrf.mxu0
      %v4067 = vpop.f32.mrf.mxu0
      %v4068 = vadd.f32 0.0, %v4067
      %v4069 = vpop.f32.mrf.mxu0
      %4070 = vmatprep.mubr.bf16.mxu0 0
      %4071 = vmatmul.mubr.bf16.gmra.mxu0 %v3444
      %v4072 = vpop.f32.mrf.mxu0
      %v4073 = vadd.f32 0.0, %v4072
      %v4074 = vpop.f32.mrf.mxu0
      %v4075 = vpop.f32.mrf.mxu0
      %v4076 = vadd.f32 0.0, %v4075
      %v4077 = vpop.f32.mrf.mxu0
      %4078 = vmatprep.mubr.bf16.mxu0 0
      %4079 = vmatmul.mubr.bf16.gmra.mxu0 %v3446
      %v4080 = vpop.f32.mrf.mxu0
      %v4081 = vadd.f32 0.0, %v4080
      %v4082 = vpop.f32.mrf.mxu0
      %v4083 = vpop.f32.mrf.mxu0
      %v4084 = vadd.f32 0.0, %v4083
      %v4085 = vpop.f32.mrf.mxu0
      %4086 = vmatprep.mubr.bf16.mxu0 0
      %4087 = vmatmul.mubr.bf16.gmra.mxu0 %v3929
      %v4088 = vpop.f32.mrf.mxu0
      %v4089 = vadd.f32 0.0, %v4088
      %v4090 = vpop.f32.mrf.mxu0
      %v4091 = vpop.f32.mrf.mxu0
      %v4092 = vadd.f32 0.0, %v4091
      %v4093 = vpop.f32.mrf.mxu0
      %4094 = vdwg.mxu0
      %v4095 = vadd.f32 %v3896, %v3969
      %v4096 = vadd.f32 %v3897, %v3972
      %v4097 = vadd.f32 %v3898, %v3977
      %v4098 = vadd.f32 %v3899, %v3980
      %v4099 = vadd.f32 %v3900, %v3985
      %v4100 = vadd.f32 %v3901, %v3988
      %v4101 = vadd.f32 %v3902, %v3993
      %v4102 = vadd.f32 %v3903, %v3996
      %v4103 = vadd.f32 %v3904, %v4001
      %v4104 = vadd.f32 %v3905, %v4004
      %v4105 = vadd.f32 %v3906, %v4009
      %v4106 = vadd.f32 %v3907, %v4012
      %v4107 = vadd.f32 %v3908, %v4017
      %v4108 = vadd.f32 %v3909, %v4020
      %v4109 = vadd.f32 %v3910, %v4025
      %v4110 = vadd.f32 %v3911, %v4028
      %v4111 = vadd.f32 %v3912, %v4033
      %v4112 = vadd.f32 %v3913, %v4036
      %v4113 = vadd.f32 %v3914, %v4041
      %v4114 = vadd.f32 %v3915, %v4044
      %v4115 = vadd.f32 %v3916, %v4049
      %v4116 = vadd.f32 %v3917, %v4052
      %v4117 = vadd.f32 %v3918, %v4057
      %v4118 = vadd.f32 %v3919, %v4060
      %v4119 = vadd.f32 %v3920, %v4065
      %v4120 = vadd.f32 %v3921, %v4068
      %v4121 = vadd.f32 %v3922, %v4073
      %v4122 = vadd.f32 %v3923, %v4076
      %v4123 = vadd.f32 %v3924, %v4081
      %v4124 = vadd.f32 %v3925, %v4084
      %v4125 = vadd.f32 %v3926, %v4089
      %v4126 = vadd.f32 %v3927, %v4092
      %v4127 = vshrl.u32 %v3001, 16
      %v4129 = vshll.u32 %v3001, 16
      %v4131 = vrot.slane %v4129, 1
      %v4132 = vor.u32 %v4127, %v4131
      %v4134 = vshll.u32 %v3017, 16
      %v4136 = vrot.slane %v4134, 1
      %v4137 = vsel %vm564, %v4132, %v4136
      %v4139 = vsel %vm3207, %v4137, 0
      %v4142 = vsel %vm3253, %v3022, 0
      %4144 = vmatprep.subr.bf16.mxu0 0
      %4145 = vmatpush1.bf16.msra.mxu0 0
      %4146 = vmatprep.subr.bf16.mxu0 0
      %4147 = vmatpush1.bf16.msra.mxu0 0
      %4148 = vmatprep.subr.bf16.mxu0 0
      %4149 = vmatpush1.bf16.msra.mxu0 0
      %4150 = vmatprep.subr.bf16.mxu0 0
      %4151 = vmatpush1.bf16.msra.mxu0 0
      %4152 = vmatprep.subr.bf16.mxu0 0
      %4153 = vmatpush1.bf16.msra.mxu0 0
      %4154 = vmatprep.subr.bf16.mxu0 0
      %4155 = vmatpush1.bf16.msra.mxu0 0
      %4156 = vmatprep.subr.bf16.mxu0 0
      %4157 = vmatpush1.bf16.msra.mxu0 0
      %4158 = vmatprep.subr.bf16.mxu0 0
      %4159 = vmatpush1.bf16.msra.mxu0 %v4142
      %4160 = vmatprep.subr.bf16.mxu0 0
      %4161 = vmatpush2.bf16.msra.mxu0 0
      %4162 = vmatprep.subr.bf16.mxu0 0
      %4163 = vmatpush2.bf16.msra.mxu0 0
      %4164 = vmatprep.subr.bf16.mxu0 0
      %4165 = vmatpush2.bf16.msra.mxu0 0
      %4166 = vmatprep.subr.bf16.mxu0 0
      %4167 = vmatpush2.bf16.msra.mxu0 0
      %4168 = vmatprep.subr.bf16.mxu0 0
      %4169 = vmatpush2.bf16.msra.mxu0 0
      %4170 = vmatprep.subr.bf16.mxu0 0
      %4171 = vmatpush2.bf16.msra.mxu0 0
      %4172 = vmatprep.subr.bf16.mxu0 0
      %4173 = vmatpush2.bf16.msra.mxu0 0
      %4174 = vmatprep.subr.bf16.mxu0 0
      %4175 = vmatpush2.bf16.msra.mxu0 0
      %4176 = vmatprep.mubr.bf16.mxu0 0
      %4177 = vmatmul.mubr.bf16.gmra.mxu0 %v3212
      %v4178 = vpop.f32.mrf.mxu0
      %v4179 = vadd.f32 0.0, %v4178
      %v4180 = vpop.f32.mrf.mxu0
      %v4181 = vpop.f32.mrf.mxu0
      %v4182 = vadd.f32 0.0, %v4181
      %v4183 = vpop.f32.mrf.mxu0
      %4184 = vmatprep.mubr.bf16.mxu0 0
      %4185 = vmatmul.mubr.bf16.gmra.mxu0 %v3209
      %v4186 = vpop.f32.mrf.mxu0
      %v4187 = vadd.f32 0.0, %v4186
      %v4188 = vpop.f32.mrf.mxu0
      %v4189 = vpop.f32.mrf.mxu0
      %v4190 = vadd.f32 0.0, %v4189
      %v4191 = vpop.f32.mrf.mxu0
      %4192 = vmatprep.mubr.bf16.mxu0 0
      %4193 = vmatmul.mubr.bf16.gmra.mxu0 %v3215
      %v4194 = vpop.f32.mrf.mxu0
      %v4195 = vadd.f32 0.0, %v4194
      %v4196 = vpop.f32.mrf.mxu0
      %v4197 = vpop.f32.mrf.mxu0
      %v4198 = vadd.f32 0.0, %v4197
      %v4199 = vpop.f32.mrf.mxu0
      %4200 = vmatprep.mubr.bf16.mxu0 0
      %4201 = vmatmul.mubr.bf16.gmra.mxu0 %v3218
      %v4202 = vpop.f32.mrf.mxu0
      %v4203 = vadd.f32 0.0, %v4202
      %v4204 = vpop.f32.mrf.mxu0
      %v4205 = vpop.f32.mrf.mxu0
      %v4206 = vadd.f32 0.0, %v4205
      %v4207 = vpop.f32.mrf.mxu0
      %4208 = vmatprep.mubr.bf16.mxu0 0
      %4209 = vmatmul.mubr.bf16.gmra.mxu0 %v3221
      %v4210 = vpop.f32.mrf.mxu0
      %v4211 = vadd.f32 0.0, %v4210
      %v4212 = vpop.f32.mrf.mxu0
      %v4213 = vpop.f32.mrf.mxu0
      %v4214 = vadd.f32 0.0, %v4213
      %v4215 = vpop.f32.mrf.mxu0
      %4216 = vmatprep.mubr.bf16.mxu0 0
      %4217 = vmatmul.mubr.bf16.gmra.mxu0 %v3224
      %v4218 = vpop.f32.mrf.mxu0
      %v4219 = vadd.f32 0.0, %v4218
      %v4220 = vpop.f32.mrf.mxu0
      %v4221 = vpop.f32.mrf.mxu0
      %v4222 = vadd.f32 0.0, %v4221
      %v4223 = vpop.f32.mrf.mxu0
      %4224 = vmatprep.mubr.bf16.mxu0 0
      %4225 = vmatmul.mubr.bf16.gmra.mxu0 %v3227
      %v4226 = vpop.f32.mrf.mxu0
      %v4227 = vadd.f32 0.0, %v4226
      %v4228 = vpop.f32.mrf.mxu0
      %v4229 = vpop.f32.mrf.mxu0
      %v4230 = vadd.f32 0.0, %v4229
      %v4231 = vpop.f32.mrf.mxu0
      %4232 = vmatprep.mubr.bf16.mxu0 0
      %4233 = vmatmul.mubr.bf16.gmra.mxu0 %v3230
      %v4234 = vpop.f32.mrf.mxu0
      %v4235 = vadd.f32 0.0, %v4234
      %v4236 = vpop.f32.mrf.mxu0
      %v4237 = vpop.f32.mrf.mxu0
      %v4238 = vadd.f32 0.0, %v4237
      %v4239 = vpop.f32.mrf.mxu0
      %4240 = vmatprep.mubr.bf16.mxu0 0
      %4241 = vmatmul.mubr.bf16.gmra.mxu0 %v3233
      %v4242 = vpop.f32.mrf.mxu0
      %v4243 = vadd.f32 0.0, %v4242
      %v4244 = vpop.f32.mrf.mxu0
      %v4245 = vpop.f32.mrf.mxu0
      %v4246 = vadd.f32 0.0, %v4245
      %v4247 = vpop.f32.mrf.mxu0
      %4248 = vmatprep.mubr.bf16.mxu0 0
      %4249 = vmatmul.mubr.bf16.gmra.mxu0 %v3236
      %v4250 = vpop.f32.mrf.mxu0
      %v4251 = vadd.f32 0.0, %v4250
      %v4252 = vpop.f32.mrf.mxu0
      %v4253 = vpop.f32.mrf.mxu0
      %v4254 = vadd.f32 0.0, %v4253
      %v4255 = vpop.f32.mrf.mxu0
      %4256 = vmatprep.mubr.bf16.mxu0 0
      %4257 = vmatmul.mubr.bf16.gmra.mxu0 %v3239
      %v4258 = vpop.f32.mrf.mxu0
      %v4259 = vadd.f32 0.0, %v4258
      %v4260 = vpop.f32.mrf.mxu0
      %v4261 = vpop.f32.mrf.mxu0
      %v4262 = vadd.f32 0.0, %v4261
      %v4263 = vpop.f32.mrf.mxu0
      %4264 = vmatprep.mubr.bf16.mxu0 0
      %4265 = vmatmul.mubr.bf16.gmra.mxu0 %v3242
      %v4266 = vpop.f32.mrf.mxu0
      %v4267 = vadd.f32 0.0, %v4266
      %v4268 = vpop.f32.mrf.mxu0
      %v4269 = vpop.f32.mrf.mxu0
      %v4270 = vadd.f32 0.0, %v4269
      %v4271 = vpop.f32.mrf.mxu0
      %4272 = vmatprep.mubr.bf16.mxu0 0
      %4273 = vmatmul.mubr.bf16.gmra.mxu0 %v3245
      %v4274 = vpop.f32.mrf.mxu0
      %v4275 = vadd.f32 0.0, %v4274
      %v4276 = vpop.f32.mrf.mxu0
      %v4277 = vpop.f32.mrf.mxu0
      %v4278 = vadd.f32 0.0, %v4277
      %v4279 = vpop.f32.mrf.mxu0
      %4280 = vmatprep.mubr.bf16.mxu0 0
      %4281 = vmatmul.mubr.bf16.gmra.mxu0 %v3248
      %v4282 = vpop.f32.mrf.mxu0
      %v4283 = vadd.f32 0.0, %v4282
      %v4284 = vpop.f32.mrf.mxu0
      %v4285 = vpop.f32.mrf.mxu0
      %v4286 = vadd.f32 0.0, %v4285
      %v4287 = vpop.f32.mrf.mxu0
      %4288 = vmatprep.mubr.bf16.mxu0 0
      %4289 = vmatmul.mubr.bf16.gmra.mxu0 %v3251
      %v4290 = vpop.f32.mrf.mxu0
      %v4291 = vadd.f32 0.0, %v4290
      %v4292 = vpop.f32.mrf.mxu0
      %v4293 = vpop.f32.mrf.mxu0
      %v4294 = vadd.f32 0.0, %v4293
      %v4295 = vpop.f32.mrf.mxu0
      %4296 = vmatprep.mubr.bf16.mxu0 0
      %4297 = vmatmul.mubr.bf16.gmra.mxu0 %v4139
      %v4298 = vpop.f32.mrf.mxu0
      %v4299 = vadd.f32 0.0, %v4298
      %v4300 = vpop.f32.mrf.mxu0
      %v4301 = vpop.f32.mrf.mxu0
      %v4302 = vadd.f32 0.0, %v4301
      %v4303 = vpop.f32.mrf.mxu0
      %4304 = vdwg.mxu0
      %v4305 = vadd.f32 %v4095, %v4179
      %v4306 = vadd.f32 %v4096, %v4182
      %v4307 = vadd.f32 %v4097, %v4187
      %v4308 = vadd.f32 %v4098, %v4190
      %v4309 = vadd.f32 %v4099, %v4195
      %v4310 = vadd.f32 %v4100, %v4198
      %v4311 = vadd.f32 %v4101, %v4203
      %v4312 = vadd.f32 %v4102, %v4206
      %v4313 = vadd.f32 %v4103, %v4211
      %v4314 = vadd.f32 %v4104, %v4214
      %v4315 = vadd.f32 %v4105, %v4219
      %v4316 = vadd.f32 %v4106, %v4222
      %v4317 = vadd.f32 %v4107, %v4227
      %v4318 = vadd.f32 %v4108, %v4230
      %v4319 = vadd.f32 %v4109, %v4235
      %v4320 = vadd.f32 %v4110, %v4238
      %v4321 = vadd.f32 %v4111, %v4243
      %v4322 = vadd.f32 %v4112, %v4246
      %v4323 = vadd.f32 %v4113, %v4251
      %v4324 = vadd.f32 %v4114, %v4254
      %v4325 = vadd.f32 %v4115, %v4259
      %v4326 = vadd.f32 %v4116, %v4262
      %v4327 = vadd.f32 %v4117, %v4267
      %v4328 = vadd.f32 %v4118, %v4270
      %v4329 = vadd.f32 %v4119, %v4275
      %v4330 = vadd.f32 %v4120, %v4278
      %v4331 = vadd.f32 %v4121, %v4283
      %v4332 = vadd.f32 %v4122, %v4286
      %v4333 = vadd.f32 %v4123, %v4291
      %v4334 = vadd.f32 %v4124, %v4294
      %v4335 = vadd.f32 %v4125, %v4299
      %v4336 = vadd.f32 %v4126, %v4302
      %v4339 = vrot.slane %v3001, 1
      %v4340 = vrot.slane %v3017, 1
      %v4341 = vsel %vm1180, %v4339, %v4340
      %v4343 = vsel %vm3207, %v4341, 0
      %v4346 = vsel %vm3253, %v3023, 0
      %4348 = vmatprep.subr.bf16.mxu0 0
      %4349 = vmatpush1.bf16.msra.mxu0 0
      %4350 = vmatprep.subr.bf16.mxu0 0
      %4351 = vmatpush1.bf16.msra.mxu0 0
      %4352 = vmatprep.subr.bf16.mxu0 0
      %4353 = vmatpush1.bf16.msra.mxu0 0
      %4354 = vmatprep.subr.bf16.mxu0 0
      %4355 = vmatpush1.bf16.msra.mxu0 0
      %4356 = vmatprep.subr.bf16.mxu0 0
      %4357 = vmatpush1.bf16.msra.mxu0 0
      %4358 = vmatprep.subr.bf16.mxu0 0
      %4359 = vmatpush1.bf16.msra.mxu0 0
      %4360 = vmatprep.subr.bf16.mxu0 0
      %4361 = vmatpush1.bf16.msra.mxu0 0
      %4362 = vmatprep.subr.bf16.mxu0 0
      %4363 = vmatpush1.bf16.msra.mxu0 %v4346
      %4364 = vmatprep.subr.bf16.mxu0 0
      %4365 = vmatpush2.bf16.msra.mxu0 0
      %4366 = vmatprep.subr.bf16.mxu0 0
      %4367 = vmatpush2.bf16.msra.mxu0 0
      %4368 = vmatprep.subr.bf16.mxu0 0
      %4369 = vmatpush2.bf16.msra.mxu0 0
      %4370 = vmatprep.subr.bf16.mxu0 0
      %4371 = vmatpush2.bf16.msra.mxu0 0
      %4372 = vmatprep.subr.bf16.mxu0 0
      %4373 = vmatpush2.bf16.msra.mxu0 0
      %4374 = vmatprep.subr.bf16.mxu0 0
      %4375 = vmatpush2.bf16.msra.mxu0 0
      %4376 = vmatprep.subr.bf16.mxu0 0
      %4377 = vmatpush2.bf16.msra.mxu0 0
      %4378 = vmatprep.subr.bf16.mxu0 0
      %4379 = vmatpush2.bf16.msra.mxu0 0
      %4380 = vmatprep.mubr.bf16.mxu0 0
      %4381 = vmatmul.mubr.bf16.gmra.mxu0 %v3691
      %v4382 = vpop.f32.mrf.mxu0
      %v4383 = vadd.f32 0.0, %v4382
      %v4384 = vpop.f32.mrf.mxu0
      %v4385 = vpop.f32.mrf.mxu0
      %v4386 = vadd.f32 0.0, %v4385
      %v4387 = vpop.f32.mrf.mxu0
      %4388 = vmatprep.mubr.bf16.mxu0 0
      %4389 = vmatmul.mubr.bf16.gmra.mxu0 %v3688
      %v4390 = vpop.f32.mrf.mxu0
      %v4391 = vadd.f32 0.0, %v4390
      %v4392 = vpop.f32.mrf.mxu0
      %v4393 = vpop.f32.mrf.mxu0
      %v4394 = vadd.f32 0.0, %v4393
      %v4395 = vpop.f32.mrf.mxu0
      %4396 = vmatprep.mubr.bf16.mxu0 0
      %4397 = vmatmul.mubr.bf16.gmra.mxu0 %v3694
      %v4398 = vpop.f32.mrf.mxu0
      %v4399 = vadd.f32 0.0, %v4398
      %v4400 = vpop.f32.mrf.mxu0
      %v4401 = vpop.f32.mrf.mxu0
      %v4402 = vadd.f32 0.0, %v4401
      %v4403 = vpop.f32.mrf.mxu0
      %4404 = vmatprep.mubr.bf16.mxu0 0
      %4405 = vmatmul.mubr.bf16.gmra.mxu0 %v3697
      %v4406 = vpop.f32.mrf.mxu0
      %v4407 = vadd.f32 0.0, %v4406
      %v4408 = vpop.f32.mrf.mxu0
      %v4409 = vpop.f32.mrf.mxu0
      %v4410 = vadd.f32 0.0, %v4409
      %v4411 = vpop.f32.mrf.mxu0
      %4412 = vmatprep.mubr.bf16.mxu0 0
      %4413 = vmatmul.mubr.bf16.gmra.mxu0 %v3700
      %v4414 = vpop.f32.mrf.mxu0
      %v4415 = vadd.f32 0.0, %v4414
      %v4416 = vpop.f32.mrf.mxu0
      %v4417 = vpop.f32.mrf.mxu0
      %v4418 = vadd.f32 0.0, %v4417
      %v4419 = vpop.f32.mrf.mxu0
      %4420 = vmatprep.mubr.bf16.mxu0 0
      %4421 = vmatmul.mubr.bf16.gmra.mxu0 %v3703
      %v4422 = vpop.f32.mrf.mxu0
      %v4423 = vadd.f32 0.0, %v4422
      %v4424 = vpop.f32.mrf.mxu0
      %v4425 = vpop.f32.mrf.mxu0
      %v4426 = vadd.f32 0.0, %v4425
      %v4427 = vpop.f32.mrf.mxu0
      %4428 = vmatprep.mubr.bf16.mxu0 0
      %4429 = vmatmul.mubr.bf16.gmra.mxu0 %v3706
      %v4430 = vpop.f32.mrf.mxu0
      %v4431 = vadd.f32 0.0, %v4430
      %v4432 = vpop.f32.mrf.mxu0
      %v4433 = vpop.f32.mrf.mxu0
      %v4434 = vadd.f32 0.0, %v4433
      %v4435 = vpop.f32.mrf.mxu0
      %4436 = vmatprep.mubr.bf16.mxu0 0
      %4437 = vmatmul.mubr.bf16.gmra.mxu0 %v3709
      %v4438 = vpop.f32.mrf.mxu0
      %v4439 = vadd.f32 0.0, %v4438
      %v4440 = vpop.f32.mrf.mxu0
      %v4441 = vpop.f32.mrf.mxu0
      %v4442 = vadd.f32 0.0, %v4441
      %v4443 = vpop.f32.mrf.mxu0
      %4444 = vmatprep.mubr.bf16.mxu0 0
      %4445 = vmatmul.mubr.bf16.gmra.mxu0 %v3712
      %v4446 = vpop.f32.mrf.mxu0
      %v4447 = vadd.f32 0.0, %v4446
      %v4448 = vpop.f32.mrf.mxu0
      %v4449 = vpop.f32.mrf.mxu0
      %v4450 = vadd.f32 0.0, %v4449
      %v4451 = vpop.f32.mrf.mxu0
      %4452 = vmatprep.mubr.bf16.mxu0 0
      %4453 = vmatmul.mubr.bf16.gmra.mxu0 %v3715
      %v4454 = vpop.f32.mrf.mxu0
      %v4455 = vadd.f32 0.0, %v4454
      %v4456 = vpop.f32.mrf.mxu0
      %v4457 = vpop.f32.mrf.mxu0
      %v4458 = vadd.f32 0.0, %v4457
      %v4459 = vpop.f32.mrf.mxu0
      %4460 = vmatprep.mubr.bf16.mxu0 0
      %4461 = vmatmul.mubr.bf16.gmra.mxu0 %v3718
      %v4462 = vpop.f32.mrf.mxu0
      %v4463 = vadd.f32 0.0, %v4462
      %v4464 = vpop.f32.mrf.mxu0
      %v4465 = vpop.f32.mrf.mxu0
      %v4466 = vadd.f32 0.0, %v4465
      %v4467 = vpop.f32.mrf.mxu0
      %4468 = vmatprep.mubr.bf16.mxu0 0
      %4469 = vmatmul.mubr.bf16.gmra.mxu0 %v3721
      %v4470 = vpop.f32.mrf.mxu0
      %v4471 = vadd.f32 0.0, %v4470
      %v4472 = vpop.f32.mrf.mxu0
      %v4473 = vpop.f32.mrf.mxu0
      %v4474 = vadd.f32 0.0, %v4473
      %v4475 = vpop.f32.mrf.mxu0
      %4476 = vmatprep.mubr.bf16.mxu0 0
      %4477 = vmatmul.mubr.bf16.gmra.mxu0 %v3724
      %v4478 = vpop.f32.mrf.mxu0
      %v4479 = vadd.f32 0.0, %v4478
      %v4480 = vpop.f32.mrf.mxu0
      %v4481 = vpop.f32.mrf.mxu0
      %v4482 = vadd.f32 0.0, %v4481
      %v4483 = vpop.f32.mrf.mxu0
      %4484 = vmatprep.mubr.bf16.mxu0 0
      %4485 = vmatmul.mubr.bf16.gmra.mxu0 %v3727
      %v4486 = vpop.f32.mrf.mxu0
      %v4487 = vadd.f32 0.0, %v4486
      %v4488 = vpop.f32.mrf.mxu0
      %v4489 = vpop.f32.mrf.mxu0
      %v4490 = vadd.f32 0.0, %v4489
      %v4491 = vpop.f32.mrf.mxu0
      %4492 = vmatprep.mubr.bf16.mxu0 0
      %4493 = vmatmul.mubr.bf16.gmra.mxu0 %v3730
      %v4494 = vpop.f32.mrf.mxu0
      %v4495 = vadd.f32 0.0, %v4494
      %v4496 = vpop.f32.mrf.mxu0
      %v4497 = vpop.f32.mrf.mxu0
      %v4498 = vadd.f32 0.0, %v4497
      %v4499 = vpop.f32.mrf.mxu0
      %4500 = vmatprep.mubr.bf16.mxu0 0
      %4501 = vmatmul.mubr.bf16.gmra.mxu0 %v4343
      %v4502 = vpop.f32.mrf.mxu0
      %v4503 = vadd.f32 0.0, %v4502
      %v4504 = vpop.f32.mrf.mxu0
      %v4505 = vpop.f32.mrf.mxu0
      %v4506 = vadd.f32 0.0, %v4505
      %v4507 = vpop.f32.mrf.mxu0
      %4508 = vdwg.mxu0
      %v4509 = vadd.f32 %v4305, %v4383
      %v4510 = vadd.f32 %v4306, %v4386
      %v4511 = vadd.f32 %v4307, %v4391
      %v4512 = vadd.f32 %v4308, %v4394
      %v4513 = vadd.f32 %v4309, %v4399
      %v4514 = vadd.f32 %v4310, %v4402
      %v4515 = vadd.f32 %v4311, %v4407
      %v4516 = vadd.f32 %v4312, %v4410
      %v4517 = vadd.f32 %v4313, %v4415
      %v4518 = vadd.f32 %v4314, %v4418
      %v4519 = vadd.f32 %v4315, %v4423
      %v4520 = vadd.f32 %v4316, %v4426
      %v4521 = vadd.f32 %v4317, %v4431
      %v4522 = vadd.f32 %v4318, %v4434
      %v4523 = vadd.f32 %v4319, %v4439
      %v4524 = vadd.f32 %v4320, %v4442
      %v4525 = vadd.f32 %v4321, %v4447
      %v4526 = vadd.f32 %v4322, %v4450
      %v4527 = vadd.f32 %v4323, %v4455
      %v4528 = vadd.f32 %v4324, %v4458
      %v4529 = vadd.f32 %v4325, %v4463
      %v4530 = vadd.f32 %v4326, %v4466
      %v4531 = vadd.f32 %v4327, %v4471
      %v4532 = vadd.f32 %v4328, %v4474
      %v4533 = vadd.f32 %v4329, %v4479
      %v4534 = vadd.f32 %v4330, %v4482
      %v4535 = vadd.f32 %v4331, %v4487
      %v4536 = vadd.f32 %v4332, %v4490
      %v4537 = vadd.f32 %v4333, %v4495
      %v4538 = vadd.f32 %v4334, %v4498
      %v4539 = vadd.f32 %v4335, %v4503
      %v4540 = vadd.f32 %v4336, %v4506
      %v4542 = vsel %vm3253, %v3024, 0
      %4544 = vmatprep.subr.bf16.mxu0 0
      %4545 = vmatpush1.bf16.msra.mxu0 0
      %4546 = vmatprep.subr.bf16.mxu0 0
      %4547 = vmatpush1.bf16.msra.mxu0 0
      %4548 = vmatprep.subr.bf16.mxu0 0
      %4549 = vmatpush1.bf16.msra.mxu0 0
      %4550 = vmatprep.subr.bf16.mxu0 0
      %4551 = vmatpush1.bf16.msra.mxu0 0
      %4552 = vmatprep.subr.bf16.mxu0 0
      %4553 = vmatpush1.bf16.msra.mxu0 0
      %4554 = vmatprep.subr.bf16.mxu0 0
      %4555 = vmatpush1.bf16.msra.mxu0 0
      %4556 = vmatprep.subr.bf16.mxu0 0
      %4557 = vmatpush1.bf16.msra.mxu0 0
      %4558 = vmatprep.subr.bf16.mxu0 0
      %4559 = vmatpush1.bf16.msra.mxu0 %v4542
      %4560 = vmatprep.subr.bf16.mxu0 0
      %4561 = vmatpush2.bf16.msra.mxu0 0
      %4562 = vmatprep.subr.bf16.mxu0 0
      %4563 = vmatpush2.bf16.msra.mxu0 0
      %4564 = vmatprep.subr.bf16.mxu0 0
      %4565 = vmatpush2.bf16.msra.mxu0 0
      %4566 = vmatprep.subr.bf16.mxu0 0
      %4567 = vmatpush2.bf16.msra.mxu0 0
      %4568 = vmatprep.subr.bf16.mxu0 0
      %4569 = vmatpush2.bf16.msra.mxu0 0
      %4570 = vmatprep.subr.bf16.mxu0 0
      %4571 = vmatpush2.bf16.msra.mxu0 0
      %4572 = vmatprep.subr.bf16.mxu0 0
      %4573 = vmatpush2.bf16.msra.mxu0 0
      %4574 = vmatprep.subr.bf16.mxu0 0
      %4575 = vmatpush2.bf16.msra.mxu0 0
      %4576 = vmatprep.mubr.bf16.mxu0 0
      %4577 = vmatmul.mubr.bf16.gmra.mxu0 %v3418
      %v4578 = vpop.f32.mrf.mxu0
      %v4579 = vadd.f32 0.0, %v4578
      %v4580 = vpop.f32.mrf.mxu0
      %v4581 = vpop.f32.mrf.mxu0
      %v4582 = vadd.f32 0.0, %v4581
      %v4583 = vpop.f32.mrf.mxu0
      %4584 = vmatprep.mubr.bf16.mxu0 0
      %4585 = vmatmul.mubr.bf16.gmra.mxu0 %v3422
      %v4586 = vpop.f32.mrf.mxu0
      %v4587 = vadd.f32 0.0, %v4586
      %v4588 = vpop.f32.mrf.mxu0
      %v4589 = vpop.f32.mrf.mxu0
      %v4590 = vadd.f32 0.0, %v4589
      %v4591 = vpop.f32.mrf.mxu0
      %4592 = vmatprep.mubr.bf16.mxu0 0
      %4593 = vmatmul.mubr.bf16.gmra.mxu0 %v3424
      %v4594 = vpop.f32.mrf.mxu0
      %v4595 = vadd.f32 0.0, %v4594
      %v4596 = vpop.f32.mrf.mxu0
      %v4597 = vpop.f32.mrf.mxu0
      %v4598 = vadd.f32 0.0, %v4597
      %v4599 = vpop.f32.mrf.mxu0
      %4600 = vmatprep.mubr.bf16.mxu0 0
      %4601 = vmatmul.mubr.bf16.gmra.mxu0 %v3426
      %v4602 = vpop.f32.mrf.mxu0
      %v4603 = vadd.f32 0.0, %v4602
      %v4604 = vpop.f32.mrf.mxu0
      %v4605 = vpop.f32.mrf.mxu0
      %v4606 = vadd.f32 0.0, %v4605
      %v4607 = vpop.f32.mrf.mxu0
      %4608 = vmatprep.mubr.bf16.mxu0 0
      %4609 = vmatmul.mubr.bf16.gmra.mxu0 %v3428
      %v4610 = vpop.f32.mrf.mxu0
      %v4611 = vadd.f32 0.0, %v4610
      %v4612 = vpop.f32.mrf.mxu0
      %v4613 = vpop.f32.mrf.mxu0
      %v4614 = vadd.f32 0.0, %v4613
      %v4615 = vpop.f32.mrf.mxu0
      %4616 = vmatprep.mubr.bf16.mxu0 0
      %4617 = vmatmul.mubr.bf16.gmra.mxu0 %v3430
      %v4618 = vpop.f32.mrf.mxu0
      %v4619 = vadd.f32 0.0, %v4618
      %v4620 = vpop.f32.mrf.mxu0
      %v4621 = vpop.f32.mrf.mxu0
      %v4622 = vadd.f32 0.0, %v4621
      %v4623 = vpop.f32.mrf.mxu0
      %4624 = vmatprep.mubr.bf16.mxu0 0
      %4625 = vmatmul.mubr.bf16.gmra.mxu0 %v3432
      %v4626 = vpop.f32.mrf.mxu0
      %v4627 = vadd.f32 0.0, %v4626
      %v4628 = vpop.f32.mrf.mxu0
      %v4629 = vpop.f32.mrf.mxu0
      %v4630 = vadd.f32 0.0, %v4629
      %v4631 = vpop.f32.mrf.mxu0
      %4632 = vmatprep.mubr.bf16.mxu0 0
      %4633 = vmatmul.mubr.bf16.gmra.mxu0 %v3434
      %v4634 = vpop.f32.mrf.mxu0
      %v4635 = vadd.f32 0.0, %v4634
      %v4636 = vpop.f32.mrf.mxu0
      %v4637 = vpop.f32.mrf.mxu0
      %v4638 = vadd.f32 0.0, %v4637
      %v4639 = vpop.f32.mrf.mxu0
      %4640 = vmatprep.mubr.bf16.mxu0 0
      %4641 = vmatmul.mubr.bf16.gmra.mxu0 %v3436
      %v4642 = vpop.f32.mrf.mxu0
      %v4643 = vadd.f32 0.0, %v4642
      %v4644 = vpop.f32.mrf.mxu0
      %v4645 = vpop.f32.mrf.mxu0
      %v4646 = vadd.f32 0.0, %v4645
      %v4647 = vpop.f32.mrf.mxu0
      %4648 = vmatprep.mubr.bf16.mxu0 0
      %4649 = vmatmul.mubr.bf16.gmra.mxu0 %v3438
      %v4650 = vpop.f32.mrf.mxu0
      %v4651 = vadd.f32 0.0, %v4650
      %v4652 = vpop.f32.mrf.mxu0
      %v4653 = vpop.f32.mrf.mxu0
      %v4654 = vadd.f32 0.0, %v4653
      %v4655 = vpop.f32.mrf.mxu0
      %4656 = vmatprep.mubr.bf16.mxu0 0
      %4657 = vmatmul.mubr.bf16.gmra.mxu0 %v3440
      %v4658 = vpop.f32.mrf.mxu0
      %v4659 = vadd.f32 0.0, %v4658
      %v4660 = vpop.f32.mrf.mxu0
      %v4661 = vpop.f32.mrf.mxu0
      %v4662 = vadd.f32 0.0, %v4661
      %v4663 = vpop.f32.mrf.mxu0
      %4664 = vmatprep.mubr.bf16.mxu0 0
      %4665 = vmatmul.mubr.bf16.gmra.mxu0 %v3442
      %v4666 = vpop.f32.mrf.mxu0
      %v4667 = vadd.f32 0.0, %v4666
      %v4668 = vpop.f32.mrf.mxu0
      %v4669 = vpop.f32.mrf.mxu0
      %v4670 = vadd.f32 0.0, %v4669
      %v4671 = vpop.f32.mrf.mxu0
      %4672 = vmatprep.mubr.bf16.mxu0 0
      %4673 = vmatmul.mubr.bf16.gmra.mxu0 %v3444
      %v4674 = vpop.f32.mrf.mxu0
      %v4675 = vadd.f32 0.0, %v4674
      %v4676 = vpop.f32.mrf.mxu0
      %v4677 = vpop.f32.mrf.mxu0
      %v4678 = vadd.f32 0.0, %v4677
      %v4679 = vpop.f32.mrf.mxu0
      %4680 = vmatprep.mubr.bf16.mxu0 0
      %4681 = vmatmul.mubr.bf16.gmra.mxu0 %v3446
      %v4682 = vpop.f32.mrf.mxu0
      %v4683 = vadd.f32 0.0, %v4682
      %v4684 = vpop.f32.mrf.mxu0
      %v4685 = vpop.f32.mrf.mxu0
      %v4686 = vadd.f32 0.0, %v4685
      %v4687 = vpop.f32.mrf.mxu0
      %4688 = vmatprep.mubr.bf16.mxu0 0
      %4689 = vmatmul.mubr.bf16.gmra.mxu0 %v3929
      %v4690 = vpop.f32.mrf.mxu0
      %v4691 = vadd.f32 0.0, %v4690
      %v4692 = vpop.f32.mrf.mxu0
      %v4693 = vpop.f32.mrf.mxu0
      %v4694 = vadd.f32 0.0, %v4693
      %v4695 = vpop.f32.mrf.mxu0
      %4696 = vmatprep.mubr.bf16.mxu0 0
      %4697 = vmatmul.mubr.bf16.gmra.mxu0 %v3446
      %v4698 = vpop.f32.mrf.mxu0
      %v4699 = vadd.f32 0.0, %v4698
      %v4700 = vpop.f32.mrf.mxu0
      %v4701 = vpop.f32.mrf.mxu0
      %v4702 = vadd.f32 0.0, %v4701
      %v4703 = vpop.f32.mrf.mxu0
      %4704 = vdwg.mxu0
      %v4705 = vadd.f32 %v4509, %v4579
      %v4706 = vadd.f32 %v4510, %v4582
      %v4707 = vadd.f32 %v4511, %v4587
      %v4708 = vadd.f32 %v4512, %v4590
      %v4709 = vadd.f32 %v4513, %v4595
      %v4710 = vadd.f32 %v4514, %v4598
      %v4711 = vadd.f32 %v4515, %v4603
      %v4712 = vadd.f32 %v4516, %v4606
      %v4713 = vadd.f32 %v4517, %v4611
      %v4714 = vadd.f32 %v4518, %v4614
      %v4715 = vadd.f32 %v4519, %v4619
      %v4716 = vadd.f32 %v4520, %v4622
      %v4717 = vadd.f32 %v4521, %v4627
      %v4718 = vadd.f32 %v4522, %v4630
      %v4719 = vadd.f32 %v4523, %v4635
      %v4720 = vadd.f32 %v4524, %v4638
      %v4721 = vadd.f32 %v4525, %v4643
      %v4722 = vadd.f32 %v4526, %v4646
      %v4723 = vadd.f32 %v4527, %v4651
      %v4724 = vadd.f32 %v4528, %v4654
      %v4725 = vadd.f32 %v4529, %v4659
      %v4726 = vadd.f32 %v4530, %v4662
      %v4727 = vadd.f32 %v4531, %v4667
      %v4728 = vadd.f32 %v4532, %v4670
      %v4729 = vadd.f32 %v4533, %v4675
      %v4730 = vadd.f32 %v4534, %v4678
      %v4731 = vadd.f32 %v4535, %v4683
      %v4732 = vadd.f32 %v4536, %v4686
      %v4733 = vadd.f32 %v4537, %v4691
      %v4734 = vadd.f32 %v4538, %v4694
      %v4735 = vadd.f32 %v4539, %v4699
      %v4736 = vadd.f32 %v4540, %v4702
      %v4738 = vsel %vm3253, %v3025, 0
      %4740 = vmatprep.subr.bf16.mxu0 0
      %4741 = vmatpush1.bf16.msra.mxu0 0
      %4742 = vmatprep.subr.bf16.mxu0 0
      %4743 = vmatpush1.bf16.msra.mxu0 0
      %4744 = vmatprep.subr.bf16.mxu0 0
      %4745 = vmatpush1.bf16.msra.mxu0 0
      %4746 = vmatprep.subr.bf16.mxu0 0
      %4747 = vmatpush1.bf16.msra.mxu0 0
      %4748 = vmatprep.subr.bf16.mxu0 0
      %4749 = vmatpush1.bf16.msra.mxu0 0
      %4750 = vmatprep.subr.bf16.mxu0 0
      %4751 = vmatpush1.bf16.msra.mxu0 0
      %4752 = vmatprep.subr.bf16.mxu0 0
      %4753 = vmatpush1.bf16.msra.mxu0 0
      %4754 = vmatprep.subr.bf16.mxu0 0
      %4755 = vmatpush1.bf16.msra.mxu0 %v4738
      %4756 = vmatprep.subr.bf16.mxu0 0
      %4757 = vmatpush2.bf16.msra.mxu0 0
      %4758 = vmatprep.subr.bf16.mxu0 0
      %4759 = vmatpush2.bf16.msra.mxu0 0
      %4760 = vmatprep.subr.bf16.mxu0 0
      %4761 = vmatpush2.bf16.msra.mxu0 0
      %4762 = vmatprep.subr.bf16.mxu0 0
      %4763 = vmatpush2.bf16.msra.mxu0 0
      %4764 = vmatprep.subr.bf16.mxu0 0
      %4765 = vmatpush2.bf16.msra.mxu0 0
      %4766 = vmatprep.subr.bf16.mxu0 0
      %4767 = vmatpush2.bf16.msra.mxu0 0
      %4768 = vmatprep.subr.bf16.mxu0 0
      %4769 = vmatpush2.bf16.msra.mxu0 0
      %4770 = vmatprep.subr.bf16.mxu0 0
      %4771 = vmatpush2.bf16.msra.mxu0 0
      %4772 = vmatprep.mubr.bf16.mxu0 0
      %4773 = vmatmul.mubr.bf16.gmra.mxu0 %v3209
      %v4774 = vpop.f32.mrf.mxu0
      %v4775 = vadd.f32 0.0, %v4774
      %v4776 = vpop.f32.mrf.mxu0
      %v4777 = vpop.f32.mrf.mxu0
      %v4778 = vadd.f32 0.0, %v4777
      %v4779 = vpop.f32.mrf.mxu0
      %4780 = vmatprep.mubr.bf16.mxu0 0
      %4781 = vmatmul.mubr.bf16.gmra.mxu0 %v3215
      %v4782 = vpop.f32.mrf.mxu0
      %v4783 = vadd.f32 0.0, %v4782
      %v4784 = vpop.f32.mrf.mxu0
      %v4785 = vpop.f32.mrf.mxu0
      %v4786 = vadd.f32 0.0, %v4785
      %v4787 = vpop.f32.mrf.mxu0
      %4788 = vmatprep.mubr.bf16.mxu0 0
      %4789 = vmatmul.mubr.bf16.gmra.mxu0 %v3218
      %v4790 = vpop.f32.mrf.mxu0
      %v4791 = vadd.f32 0.0, %v4790
      %v4792 = vpop.f32.mrf.mxu0
      %v4793 = vpop.f32.mrf.mxu0
      %v4794 = vadd.f32 0.0, %v4793
      %v4795 = vpop.f32.mrf.mxu0
      %4796 = vmatprep.mubr.bf16.mxu0 0
      %4797 = vmatmul.mubr.bf16.gmra.mxu0 %v3221
      %v4798 = vpop.f32.mrf.mxu0
      %v4799 = vadd.f32 0.0, %v4798
      %v4800 = vpop.f32.mrf.mxu0
      %v4801 = vpop.f32.mrf.mxu0
      %v4802 = vadd.f32 0.0, %v4801
      %v4803 = vpop.f32.mrf.mxu0
      %4804 = vmatprep.mubr.bf16.mxu0 0
      %4805 = vmatmul.mubr.bf16.gmra.mxu0 %v3224
      %v4806 = vpop.f32.mrf.mxu0
      %v4807 = vadd.f32 0.0, %v4806
      %v4808 = vpop.f32.mrf.mxu0
      %v4809 = vpop.f32.mrf.mxu0
      %v4810 = vadd.f32 0.0, %v4809
      %v4811 = vpop.f32.mrf.mxu0
      %4812 = vmatprep.mubr.bf16.mxu0 0
      %4813 = vmatmul.mubr.bf16.gmra.mxu0 %v3227
      %v4814 = vpop.f32.mrf.mxu0
      %v4815 = vadd.f32 0.0, %v4814
      %v4816 = vpop.f32.mrf.mxu0
      %v4817 = vpop.f32.mrf.mxu0
      %v4818 = vadd.f32 0.0, %v4817
      %v4819 = vpop.f32.mrf.mxu0
      %4820 = vmatprep.mubr.bf16.mxu0 0
      %4821 = vmatmul.mubr.bf16.gmra.mxu0 %v3230
      %v4822 = vpop.f32.mrf.mxu0
      %v4823 = vadd.f32 0.0, %v4822
      %v4824 = vpop.f32.mrf.mxu0
      %v4825 = vpop.f32.mrf.mxu0
      %v4826 = vadd.f32 0.0, %v4825
      %v4827 = vpop.f32.mrf.mxu0
      %4828 = vmatprep.mubr.bf16.mxu0 0
      %4829 = vmatmul.mubr.bf16.gmra.mxu0 %v3233
      %v4830 = vpop.f32.mrf.mxu0
      %v4831 = vadd.f32 0.0, %v4830
      %v4832 = vpop.f32.mrf.mxu0
      %v4833 = vpop.f32.mrf.mxu0
      %v4834 = vadd.f32 0.0, %v4833
      %v4835 = vpop.f32.mrf.mxu0
      %4836 = vmatprep.mubr.bf16.mxu0 0
      %4837 = vmatmul.mubr.bf16.gmra.mxu0 %v3236
      %v4838 = vpop.f32.mrf.mxu0
      %v4839 = vadd.f32 0.0, %v4838
      %v4840 = vpop.f32.mrf.mxu0
      %v4841 = vpop.f32.mrf.mxu0
      %v4842 = vadd.f32 0.0, %v4841
      %v4843 = vpop.f32.mrf.mxu0
      %4844 = vmatprep.mubr.bf16.mxu0 0
      %4845 = vmatmul.mubr.bf16.gmra.mxu0 %v3239
      %v4846 = vpop.f32.mrf.mxu0
      %v4847 = vadd.f32 0.0, %v4846
      %v4848 = vpop.f32.mrf.mxu0
      %v4849 = vpop.f32.mrf.mxu0
      %v4850 = vadd.f32 0.0, %v4849
      %v4851 = vpop.f32.mrf.mxu0
      %4852 = vmatprep.mubr.bf16.mxu0 0
      %4853 = vmatmul.mubr.bf16.gmra.mxu0 %v3242
      %v4854 = vpop.f32.mrf.mxu0
      %v4855 = vadd.f32 0.0, %v4854
      %v4856 = vpop.f32.mrf.mxu0
      %v4857 = vpop.f32.mrf.mxu0
      %v4858 = vadd.f32 0.0, %v4857
      %v4859 = vpop.f32.mrf.mxu0
      %4860 = vmatprep.mubr.bf16.mxu0 0
      %4861 = vmatmul.mubr.bf16.gmra.mxu0 %v3245
      %v4862 = vpop.f32.mrf.mxu0
      %v4863 = vadd.f32 0.0, %v4862
      %v4864 = vpop.f32.mrf.mxu0
      %v4865 = vpop.f32.mrf.mxu0
      %v4866 = vadd.f32 0.0, %v4865
      %v4867 = vpop.f32.mrf.mxu0
      %4868 = vmatprep.mubr.bf16.mxu0 0
      %4869 = vmatmul.mubr.bf16.gmra.mxu0 %v3248
      %v4870 = vpop.f32.mrf.mxu0
      %v4871 = vadd.f32 0.0, %v4870
      %v4872 = vpop.f32.mrf.mxu0
      %v4873 = vpop.f32.mrf.mxu0
      %v4874 = vadd.f32 0.0, %v4873
      %v4875 = vpop.f32.mrf.mxu0
      %4876 = vmatprep.mubr.bf16.mxu0 0
      %4877 = vmatmul.mubr.bf16.gmra.mxu0 %v3251
      %v4878 = vpop.f32.mrf.mxu0
      %v4879 = vadd.f32 0.0, %v4878
      %v4880 = vpop.f32.mrf.mxu0
      %v4881 = vpop.f32.mrf.mxu0
      %v4882 = vadd.f32 0.0, %v4881
      %v4883 = vpop.f32.mrf.mxu0
      %4884 = vmatprep.mubr.bf16.mxu0 0
      %4885 = vmatmul.mubr.bf16.gmra.mxu0 %v4139
      %v4886 = vpop.f32.mrf.mxu0
      %v4887 = vadd.f32 0.0, %v4886
      %v4888 = vpop.f32.mrf.mxu0
      %v4889 = vpop.f32.mrf.mxu0
      %v4890 = vadd.f32 0.0, %v4889
      %v4891 = vpop.f32.mrf.mxu0
      %4892 = vmatprep.mubr.bf16.mxu0 0
      %4893 = vmatmul.mubr.bf16.gmra.mxu0 %v3251
      %v4894 = vpop.f32.mrf.mxu0
      %v4895 = vadd.f32 0.0, %v4894
      %v4896 = vpop.f32.mrf.mxu0
      %v4897 = vpop.f32.mrf.mxu0
      %v4898 = vadd.f32 0.0, %v4897
      %v4899 = vpop.f32.mrf.mxu0
      %4900 = vdwg.mxu0
      %v4901 = vadd.f32 %v4705, %v4775
      %v4902 = vadd.f32 %v4706, %v4778
      %v4903 = vadd.f32 %v4707, %v4783
      %v4904 = vadd.f32 %v4708, %v4786
      %v4905 = vadd.f32 %v4709, %v4791
      %v4906 = vadd.f32 %v4710, %v4794
      %v4907 = vadd.f32 %v4711, %v4799
      %v4908 = vadd.f32 %v4712, %v4802
      %v4909 = vadd.f32 %v4713, %v4807
      %v4910 = vadd.f32 %v4714, %v4810
      %v4911 = vadd.f32 %v4715, %v4815
      %v4912 = vadd.f32 %v4716, %v4818
      %v4913 = vadd.f32 %v4717, %v4823
      %v4914 = vadd.f32 %v4718, %v4826
      %v4915 = vadd.f32 %v4719, %v4831
      %v4916 = vadd.f32 %v4720, %v4834
      %v4917 = vadd.f32 %v4721, %v4839
      %v4918 = vadd.f32 %v4722, %v4842
      %v4919 = vadd.f32 %v4723, %v4847
      %v4920 = vadd.f32 %v4724, %v4850
      %v4921 = vadd.f32 %v4725, %v4855
      %v4922 = vadd.f32 %v4726, %v4858
      %v4923 = vadd.f32 %v4727, %v4863
      %v4924 = vadd.f32 %v4728, %v4866
      %v4925 = vadd.f32 %v4729, %v4871
      %v4926 = vadd.f32 %v4730, %v4874
      %v4927 = vadd.f32 %v4731, %v4879
      %v4928 = vadd.f32 %v4732, %v4882
      %v4929 = vadd.f32 %v4733, %v4887
      %v4930 = vadd.f32 %v4734, %v4890
      %v4931 = vadd.f32 %v4735, %v4895
      %v4932 = vadd.f32 %v4736, %v4898
      %v4934 = vsel %vm3253, %v3026, 0
      %4936 = vmatprep.subr.bf16.mxu0 0
      %4937 = vmatpush1.bf16.msra.mxu0 0
      %4938 = vmatprep.subr.bf16.mxu0 0
      %4939 = vmatpush1.bf16.msra.mxu0 0
      %4940 = vmatprep.subr.bf16.mxu0 0
      %4941 = vmatpush1.bf16.msra.mxu0 0
      %4942 = vmatprep.subr.bf16.mxu0 0
      %4943 = vmatpush1.bf16.msra.mxu0 0
      %4944 = vmatprep.subr.bf16.mxu0 0
      %4945 = vmatpush1.bf16.msra.mxu0 0
      %4946 = vmatprep.subr.bf16.mxu0 0
      %4947 = vmatpush1.bf16.msra.mxu0 0
      %4948 = vmatprep.subr.bf16.mxu0 0
      %4949 = vmatpush1.bf16.msra.mxu0 0
      %4950 = vmatprep.subr.bf16.mxu0 0
      %4951 = vmatpush1.bf16.msra.mxu0 %v4934
      %4952 = vmatprep.subr.bf16.mxu0 0
      %4953 = vmatpush2.bf16.msra.mxu0 0
      %4954 = vmatprep.subr.bf16.mxu0 0
      %4955 = vmatpush2.bf16.msra.mxu0 0
      %4956 = vmatprep.subr.bf16.mxu0 0
      %4957 = vmatpush2.bf16.msra.mxu0 0
      %4958 = vmatprep.subr.bf16.mxu0 0
      %4959 = vmatpush2.bf16.msra.mxu0 0
      %4960 = vmatprep.subr.bf16.mxu0 0
      %4961 = vmatpush2.bf16.msra.mxu0 0
      %4962 = vmatprep.subr.bf16.mxu0 0
      %4963 = vmatpush2.bf16.msra.mxu0 0
      %4964 = vmatprep.subr.bf16.mxu0 0
      %4965 = vmatpush2.bf16.msra.mxu0 0
      %4966 = vmatprep.subr.bf16.mxu0 0
      %4967 = vmatpush2.bf16.msra.mxu0 0
      %4968 = vmatprep.mubr.bf16.mxu0 0
      %4969 = vmatmul.mubr.bf16.gmra.mxu0 %v3688
      %v4970 = vpop.f32.mrf.mxu0
      %v4971 = vadd.f32 0.0, %v4970
      %v4972 = vpop.f32.mrf.mxu0
      %v4973 = vpop.f32.mrf.mxu0
      %v4974 = vadd.f32 0.0, %v4973
      %v4975 = vpop.f32.mrf.mxu0
      %4976 = vmatprep.mubr.bf16.mxu0 0
      %4977 = vmatmul.mubr.bf16.gmra.mxu0 %v3694
      %v4978 = vpop.f32.mrf.mxu0
      %v4979 = vadd.f32 0.0, %v4978
      %v4980 = vpop.f32.mrf.mxu0
      %v4981 = vpop.f32.mrf.mxu0
      %v4982 = vadd.f32 0.0, %v4981
      %v4983 = vpop.f32.mrf.mxu0
      %4984 = vmatprep.mubr.bf16.mxu0 0
      %4985 = vmatmul.mubr.bf16.gmra.mxu0 %v3697
      %v4986 = vpop.f32.mrf.mxu0
      %v4987 = vadd.f32 0.0, %v4986
      %v4988 = vpop.f32.mrf.mxu0
      %v4989 = vpop.f32.mrf.mxu0
      %v4990 = vadd.f32 0.0, %v4989
      %v4991 = vpop.f32.mrf.mxu0
      %4992 = vmatprep.mubr.bf16.mxu0 0
      %4993 = vmatmul.mubr.bf16.gmra.mxu0 %v3700
      %v4994 = vpop.f32.mrf.mxu0
      %v4995 = vadd.f32 0.0, %v4994
      %v4996 = vpop.f32.mrf.mxu0
      %v4997 = vpop.f32.mrf.mxu0
      %v4998 = vadd.f32 0.0, %v4997
      %v4999 = vpop.f32.mrf.mxu0
      %5000 = vmatprep.mubr.bf16.mxu0 0
      %5001 = vmatmul.mubr.bf16.gmra.mxu0 %v3703
      %v5002 = vpop.f32.mrf.mxu0
      %v5003 = vadd.f32 0.0, %v5002
      %v5004 = vpop.f32.mrf.mxu0
      %v5005 = vpop.f32.mrf.mxu0
      %v5006 = vadd.f32 0.0, %v5005
      %v5007 = vpop.f32.mrf.mxu0
      %5008 = vmatprep.mubr.bf16.mxu0 0
      %5009 = vmatmul.mubr.bf16.gmra.mxu0 %v3706
      %v5010 = vpop.f32.mrf.mxu0
      %v5011 = vadd.f32 0.0, %v5010
      %v5012 = vpop.f32.mrf.mxu0
      %v5013 = vpop.f32.mrf.mxu0
      %v5014 = vadd.f32 0.0, %v5013
      %v5015 = vpop.f32.mrf.mxu0
      %5016 = vmatprep.mubr.bf16.mxu0 0
      %5017 = vmatmul.mubr.bf16.gmra.mxu0 %v3709
      %v5018 = vpop.f32.mrf.mxu0
      %v5019 = vadd.f32 0.0, %v5018
      %v5020 = vpop.f32.mrf.mxu0
      %v5021 = vpop.f32.mrf.mxu0
      %v5022 = vadd.f32 0.0, %v5021
      %v5023 = vpop.f32.mrf.mxu0
      %5024 = vmatprep.mubr.bf16.mxu0 0
      %5025 = vmatmul.mubr.bf16.gmra.mxu0 %v3712
      %v5026 = vpop.f32.mrf.mxu0
      %v5027 = vadd.f32 0.0, %v5026
      %v5028 = vpop.f32.mrf.mxu0
      %v5029 = vpop.f32.mrf.mxu0
      %v5030 = vadd.f32 0.0, %v5029
      %v5031 = vpop.f32.mrf.mxu0
      %5032 = vmatprep.mubr.bf16.mxu0 0
      %5033 = vmatmul.mubr.bf16.gmra.mxu0 %v3715
      %v5034 = vpop.f32.mrf.mxu0
      %v5035 = vadd.f32 0.0, %v5034
      %v5036 = vpop.f32.mrf.mxu0
      %v5037 = vpop.f32.mrf.mxu0
      %v5038 = vadd.f32 0.0, %v5037
      %v5039 = vpop.f32.mrf.mxu0
      %5040 = vmatprep.mubr.bf16.mxu0 0
      %5041 = vmatmul.mubr.bf16.gmra.mxu0 %v3718
      %v5042 = vpop.f32.mrf.mxu0
      %v5043 = vadd.f32 0.0, %v5042
      %v5044 = vpop.f32.mrf.mxu0
      %v5045 = vpop.f32.mrf.mxu0
      %v5046 = vadd.f32 0.0, %v5045
      %v5047 = vpop.f32.mrf.mxu0
      %5048 = vmatprep.mubr.bf16.mxu0 0
      %5049 = vmatmul.mubr.bf16.gmra.mxu0 %v3721
      %v5050 = vpop.f32.mrf.mxu0
      %v5051 = vadd.f32 0.0, %v5050
      %v5052 = vpop.f32.mrf.mxu0
      %v5053 = vpop.f32.mrf.mxu0
      %v5054 = vadd.f32 0.0, %v5053
      %v5055 = vpop.f32.mrf.mxu0
      %5056 = vmatprep.mubr.bf16.mxu0 0
      %5057 = vmatmul.mubr.bf16.gmra.mxu0 %v3724
      %v5058 = vpop.f32.mrf.mxu0
      %v5059 = vadd.f32 0.0, %v5058
      %v5060 = vpop.f32.mrf.mxu0
      %v5061 = vpop.f32.mrf.mxu0
      %v5062 = vadd.f32 0.0, %v5061
      %v5063 = vpop.f32.mrf.mxu0
      %5064 = vmatprep.mubr.bf16.mxu0 0
      %5065 = vmatmul.mubr.bf16.gmra.mxu0 %v3727
      %v5066 = vpop.f32.mrf.mxu0
      %v5067 = vadd.f32 0.0, %v5066
      %v5068 = vpop.f32.mrf.mxu0
      %v5069 = vpop.f32.mrf.mxu0
      %v5070 = vadd.f32 0.0, %v5069
      %v5071 = vpop.f32.mrf.mxu0
      %5072 = vmatprep.mubr.bf16.mxu0 0
      %5073 = vmatmul.mubr.bf16.gmra.mxu0 %v3730
      %v5074 = vpop.f32.mrf.mxu0
      %v5075 = vadd.f32 0.0, %v5074
      %v5076 = vpop.f32.mrf.mxu0
      %v5077 = vpop.f32.mrf.mxu0
      %v5078 = vadd.f32 0.0, %v5077
      %v5079 = vpop.f32.mrf.mxu0
      %5080 = vmatprep.mubr.bf16.mxu0 0
      %5081 = vmatmul.mubr.bf16.gmra.mxu0 %v4343
      %v5082 = vpop.f32.mrf.mxu0
      %v5083 = vadd.f32 0.0, %v5082
      %v5084 = vpop.f32.mrf.mxu0
      %v5085 = vpop.f32.mrf.mxu0
      %v5086 = vadd.f32 0.0, %v5085
      %v5087 = vpop.f32.mrf.mxu0
      %5088 = vmatprep.mubr.bf16.mxu0 0
      %5089 = vmatmul.mubr.bf16.gmra.mxu0 %v3730
      %v5090 = vpop.f32.mrf.mxu0
      %v5091 = vadd.f32 0.0, %v5090
      %v5092 = vpop.f32.mrf.mxu0
      %v5093 = vpop.f32.mrf.mxu0
      %v5094 = vadd.f32 0.0, %v5093
      %v5095 = vpop.f32.mrf.mxu0
      %5096 = vdwg.mxu0
      %v5097 = vadd.f32 %v4901, %v4971
      %v5098 = vadd.f32 %v4902, %v4974
      %v5099 = vadd.f32 %v4903, %v4979
      %v5100 = vadd.f32 %v4904, %v4982
      %v5101 = vadd.f32 %v4905, %v4987
      %v5102 = vadd.f32 %v4906, %v4990
      %v5103 = vadd.f32 %v4907, %v4995
      %v5104 = vadd.f32 %v4908, %v4998
      %v5105 = vadd.f32 %v4909, %v5003
      %v5106 = vadd.f32 %v4910, %v5006
      %v5107 = vadd.f32 %v4911, %v5011
      %v5108 = vadd.f32 %v4912, %v5014
      %v5109 = vadd.f32 %v4913, %v5019
      %v5110 = vadd.f32 %v4914, %v5022
      %v5111 = vadd.f32 %v4915, %v5027
      %v5112 = vadd.f32 %v4916, %v5030
      %v5113 = vadd.f32 %v4917, %v5035
      %v5114 = vadd.f32 %v4918, %v5038
      %v5115 = vadd.f32 %v4919, %v5043
      %v5116 = vadd.f32 %v4920, %v5046
      %v5117 = vadd.f32 %v4921, %v5051
      %v5118 = vadd.f32 %v4922, %v5054
      %v5119 = vadd.f32 %v4923, %v5059
      %v5120 = vadd.f32 %v4924, %v5062
      %v5121 = vadd.f32 %v4925, %v5067
      %v5122 = vadd.f32 %v4926, %v5070
      %v5123 = vadd.f32 %v4927, %v5075
      %v5124 = vadd.f32 %v4928, %v5078
      %v5125 = vadd.f32 %v4929, %v5083
      %v5126 = vadd.f32 %v4930, %v5086
      %v5127 = vadd.f32 %v4931, %v5091
      %v5128 = vadd.f32 %v4932, %v5094
      %v5129 = vld [vmem:[%s5] sm:$0x1]
      %v5131 = vlaneseq
      %v5132 = vshrl.u32 %v5131, 7
      %v5133 = vsub.s32 0, %v5132
      %v5134 = vrot.slane %v5129, %v5133
      %v5136 = vmul.f32 %v5097, %v5134
      %v5137 = vmul.f32 %v5098, %v5134
      %v5138 = vmul.f32 %v5099, %v5134
      %v5139 = vmul.f32 %v5100, %v5134
      %v5140 = vmul.f32 %v5101, %v5134
      %v5141 = vmul.f32 %v5102, %v5134
      %v5142 = vmul.f32 %v5103, %v5134
      %v5143 = vmul.f32 %v5104, %v5134
      %v5144 = vmul.f32 %v5105, %v5134
      %v5145 = vmul.f32 %v5106, %v5134
      %v5146 = vmul.f32 %v5107, %v5134
      %v5147 = vmul.f32 %v5108, %v5134
      %v5148 = vmul.f32 %v5109, %v5134
      %v5149 = vmul.f32 %v5110, %v5134
      %v5150 = vmul.f32 %v5111, %v5134
      %v5151 = vmul.f32 %v5112, %v5134
      %v5152 = vmul.f32 %v5113, %v5134
      %v5153 = vmul.f32 %v5114, %v5134
      %v5154 = vmul.f32 %v5115, %v5134
      %v5155 = vmul.f32 %v5116, %v5134
      %v5156 = vmul.f32 %v5117, %v5134
      %v5157 = vmul.f32 %v5118, %v5134
      %v5158 = vmul.f32 %v5119, %v5134
      %v5159 = vmul.f32 %v5120, %v5134
      %v5160 = vmul.f32 %v5121, %v5134
      %v5161 = vmul.f32 %v5122, %v5134
      %v5162 = vmul.f32 %v5123, %v5134
      %v5163 = vmul.f32 %v5124, %v5134
      %v5164 = vmul.f32 %v5125, %v5134
      %v5165 = vmul.f32 %v5126, %v5134
      %v5166 = vmul.f32 %v5127, %v5134
      %v5167 = vmul.f32 %v5128, %v5134
      %v5168 = vld [vmem:[%s6] sm:$0x1]
      %v5170 = vlaneseq
      %v5171 = vshrl.u32 %v5170, 7
      %v5172 = vsub.s32 0, %v5171
      %v5173 = vrot.slane %v5168, %v5172
      %v5175 = vadd.f32 %v5136, %v5173
      %v5176 = vadd.f32 %v5137, %v5173
      %v5177 = vadd.f32 %v5138, %v5173
      %v5178 = vadd.f32 %v5139, %v5173
      %v5179 = vadd.f32 %v5140, %v5173
      %v5180 = vadd.f32 %v5141, %v5173
      %v5181 = vadd.f32 %v5142, %v5173
      %v5182 = vadd.f32 %v5143, %v5173
      %v5183 = vadd.f32 %v5144, %v5173
      %v5184 = vadd.f32 %v5145, %v5173
      %v5185 = vadd.f32 %v5146, %v5173
      %v5186 = vadd.f32 %v5147, %v5173
      %v5187 = vadd.f32 %v5148, %v5173
      %v5188 = vadd.f32 %v5149, %v5173
      %v5189 = vadd.f32 %v5150, %v5173
      %v5190 = vadd.f32 %v5151, %v5173
      %v5191 = vadd.f32 %v5152, %v5173
      %v5192 = vadd.f32 %v5153, %v5173
      %v5193 = vadd.f32 %v5154, %v5173
      %v5194 = vadd.f32 %v5155, %v5173
      %v5195 = vadd.f32 %v5156, %v5173
      %v5196 = vadd.f32 %v5157, %v5173
      %v5197 = vadd.f32 %v5158, %v5173
      %v5198 = vadd.f32 %v5159, %v5173
      %v5199 = vadd.f32 %v5160, %v5173
      %v5200 = vadd.f32 %v5161, %v5173
      %v5201 = vadd.f32 %v5162, %v5173
      %v5202 = vadd.f32 %v5163, %v5173
      %v5203 = vadd.f32 %v5164, %v5173
      %v5204 = vadd.f32 %v5165, %v5173
      %v5205 = vadd.f32 %v5166, %v5173
      %v5206 = vadd.f32 %v5167, %v5173
      %v5207 = vmax.f32 %v5175, 0.0
      %v5208 = vmax.f32 %v5176, 0.0
      %v5209 = vmax.f32 %v5177, 0.0
      %v5210 = vmax.f32 %v5178, 0.0
      %v5211 = vmax.f32 %v5179, 0.0
      %v5212 = vmax.f32 %v5180, 0.0
      %v5213 = vmax.f32 %v5181, 0.0
      %v5214 = vmax.f32 %v5182, 0.0
      %v5215 = vmax.f32 %v5183, 0.0
      %v5216 = vmax.f32 %v5184, 0.0
      %v5217 = vmax.f32 %v5185, 0.0
      %v5218 = vmax.f32 %v5186, 0.0
      %v5219 = vmax.f32 %v5187, 0.0
      %v5220 = vmax.f32 %v5188, 0.0
      %v5221 = vmax.f32 %v5189, 0.0
      %v5222 = vmax.f32 %v5190, 0.0
      %v5223 = vmax.f32 %v5191, 0.0
      %v5224 = vmax.f32 %v5192, 0.0
      %v5225 = vmax.f32 %v5193, 0.0
      %v5226 = vmax.f32 %v5194, 0.0
      %v5227 = vmax.f32 %v5195, 0.0
      %v5228 = vmax.f32 %v5196, 0.0
      %v5229 = vmax.f32 %v5197, 0.0
      %v5230 = vmax.f32 %v5198, 0.0
      %v5231 = vmax.f32 %v5199, 0.0
      %v5232 = vmax.f32 %v5200, 0.0
      %v5233 = vmax.f32 %v5201, 0.0
      %v5234 = vmax.f32 %v5202, 0.0
      %v5235 = vmax.f32 %v5203, 0.0
      %v5236 = vmax.f32 %v5204, 0.0
      %v5237 = vmax.f32 %v5205, 0.0
      %v5238 = vmax.f32 %v5206, 0.0
      %v5239 = vpack.c.bf16 %v5208, %v5207
      %v5240 = vpack.c.bf16 %v5210, %v5209
      %v5241 = vpack.c.bf16 %v5212, %v5211
      %v5242 = vpack.c.bf16 %v5214, %v5213
      %v5243 = vpack.c.bf16 %v5216, %v5215
      %v5244 = vpack.c.bf16 %v5218, %v5217
      %v5245 = vpack.c.bf16 %v5220, %v5219
      %v5246 = vpack.c.bf16 %v5222, %v5221
      %v5247 = vpack.c.bf16 %v5224, %v5223
      %v5248 = vpack.c.bf16 %v5226, %v5225
      %v5249 = vpack.c.bf16 %v5228, %v5227
      %v5250 = vpack.c.bf16 %v5230, %v5229
      %v5251 = vpack.c.bf16 %v5232, %v5231
      %v5252 = vpack.c.bf16 %v5234, %v5233
      %v5253 = vpack.c.bf16 %v5236, %v5235
      %v5254 = vpack.c.bf16 %v5238, %v5237
      %v5271 = vunpack.c.l.b16 %v5239
      %v5272 = vunpack.c.h.b16 %v5239
      %v5273 = vunpack.c.l.b16 %v5240
      %v5274 = vunpack.c.h.b16 %v5240
      %v5275 = vunpack.c.l.b16 %v5241
      %v5276 = vunpack.c.h.b16 %v5241
      %v5277 = vunpack.c.l.b16 %v5242
      %v5278 = vunpack.c.h.b16 %v5242
      %v5279 = vunpack.c.l.b16 %v5243
      %v5280 = vunpack.c.h.b16 %v5243
      %v5281 = vunpack.c.l.b16 %v5244
      %v5282 = vunpack.c.h.b16 %v5244
      %v5283 = vunpack.c.l.b16 %v5245
      %v5284 = vunpack.c.h.b16 %v5245
      %v5285 = vunpack.c.l.b16 %v5246
      %v5286 = vunpack.c.h.b16 %v5246
      %v5287 = vunpack.c.l.b16 %v5247
      %v5288 = vunpack.c.h.b16 %v5247
      %v5289 = vunpack.c.l.b16 %v5248
      %v5290 = vunpack.c.h.b16 %v5248
      %v5291 = vunpack.c.l.b16 %v5249
      %v5292 = vunpack.c.h.b16 %v5249
      %v5293 = vunpack.c.l.b16 %v5250
      %v5294 = vunpack.c.h.b16 %v5250
      %v5295 = vunpack.c.l.b16 %v5251
      %v5296 = vunpack.c.h.b16 %v5251
      %v5297 = vunpack.c.l.b16 %v5252
      %v5298 = vunpack.c.h.b16 %v5252
      %v5299 = vunpack.c.l.b16 %v5253
      %v5300 = vunpack.c.h.b16 %v5253
      %v5301 = vunpack.c.l.b16 %v5254
      %v5302 = vunpack.c.h.b16 %v5254
      %v5303 = vpack.c.b16 %v5271, %v5271
      %v5304 = vpack.c.b16 %v5272, %v5272
      %v5305 = vpack.c.b16 %v5273, %v5273
      %v5306 = vpack.c.b16 %v5274, %v5274
      %v5307 = vpack.c.b16 %v5275, %v5275
      %v5308 = vpack.c.b16 %v5276, %v5276
      %v5309 = vpack.c.b16 %v5277, %v5277
      %v5310 = vpack.c.b16 %v5278, %v5278
      %v5311 = vpack.c.b16 %v5279, %v5279
      %v5312 = vpack.c.b16 %v5280, %v5280
      %v5313 = vpack.c.b16 %v5281, %v5281
      %v5314 = vpack.c.b16 %v5282, %v5282
      %v5315 = vpack.c.b16 %v5283, %v5283
      %v5316 = vpack.c.b16 %v5284, %v5284
      %v5317 = vpack.c.b16 %v5285, %v5285
      %v5318 = vpack.c.b16 %v5286, %v5286
      %v5319 = vpack.c.b16 %v5287, %v5287
      %v5320 = vpack.c.b16 %v5288, %v5288
      %v5321 = vpack.c.b16 %v5289, %v5289
      %v5322 = vpack.c.b16 %v5290, %v5290
      %v5323 = vpack.c.b16 %v5291, %v5291
      %v5324 = vpack.c.b16 %v5292, %v5292
      %v5325 = vpack.c.b16 %v5293, %v5293
      %v5326 = vpack.c.b16 %v5294, %v5294
      %v5327 = vpack.c.b16 %v5295, %v5295
      %v5328 = vpack.c.b16 %v5296, %v5296
      %v5329 = vpack.c.b16 %v5297, %v5297
      %v5330 = vpack.c.b16 %v5298, %v5298
      %v5331 = vpack.c.b16 %v5299, %v5299
      %v5332 = vpack.c.b16 %v5300, %v5300
      %v5333 = vpack.c.b16 %v5301, %v5301
      %v5334 = vpack.c.b16 %v5302, %v5302
      %vm5367 = vcmask 60416
      %5368 = vst.msk [vmem:[%s278] sm:$0xf] %vm5367, %v5303
      %5369 = vst.msk [vmem:[%s278 + $0x4] sm:$0xf] %vm5367, %v5304
      %5370 = vst.msk [vmem:[%s278 + $0x8] sm:$0xf] %vm5367, %v5305
      %5371 = vst.msk [vmem:[%s278 + $0xc] sm:$0xf] %vm5367, %v5306
      %5372 = vst.msk [vmem:[%s278 + $0x10] sm:$0xf] %vm5367, %v5307
      %5373 = vst.msk [vmem:[%s278 + $0x14] sm:$0xf] %vm5367, %v5308
      %5374 = vst.msk [vmem:[%s278 + $0x18] sm:$0xf] %vm5367, %v5309
      %5375 = vst.msk [vmem:[%s278 + $0x1c] sm:$0xf] %vm5367, %v5310
      %5376 = vst.msk [vmem:[%s278 + $0x20] sm:$0xf] %vm5367, %v5311
      %5377 = vst.msk [vmem:[%s278 + $0x24] sm:$0xf] %vm5367, %v5312
      %5378 = vst.msk [vmem:[%s278 + $0x28] sm:$0xf] %vm5367, %v5313
      %5379 = vst.msk [vmem:[%s278 + $0x2c] sm:$0xf] %vm5367, %v5314
      %5380 = vst.msk [vmem:[%s278 + $0x30] sm:$0xf] %vm5367, %v5315
      %5381 = vst.msk [vmem:[%s278 + $0x34] sm:$0xf] %vm5367, %v5316
      %5382 = vst.msk [vmem:[%s278 + $0x38] sm:$0xf] %vm5367, %v5317
      %5383 = vst.msk [vmem:[%s278 + $0x3c] sm:$0xf] %vm5367, %v5318
      %5384 = vst.msk [vmem:[%s278 + $0x40] sm:$0xf] %vm5367, %v5319
      %5385 = vst.msk [vmem:[%s278 + $0x44] sm:$0xf] %vm5367, %v5320
      %5386 = vst.msk [vmem:[%s278 + $0x48] sm:$0xf] %vm5367, %v5321
      %5387 = vst.msk [vmem:[%s278 + $0x4c] sm:$0xf] %vm5367, %v5322
      %5388 = vst.msk [vmem:[%s278 + $0x50] sm:$0xf] %vm5367, %v5323
      %5389 = vst.msk [vmem:[%s278 + $0x54] sm:$0xf] %vm5367, %v5324
      %5390 = vst.msk [vmem:[%s278 + $0x58] sm:$0xf] %vm5367, %v5325
      %5391 = vst.msk [vmem:[%s278 + $0x5c] sm:$0xf] %vm5367, %v5326
      %5392 = vst.msk [vmem:[%s278 + $0x60] sm:$0xf] %vm5367, %v5327
      %5393 = vst.msk [vmem:[%s278 + $0x64] sm:$0xf] %vm5367, %v5328
      %5394 = vst.msk [vmem:[%s278 + $0x68] sm:$0xf] %vm5367, %v5329
      %5395 = vst.msk [vmem:[%s278 + $0x6c] sm:$0xf] %vm5367, %v5330
      %5396 = vst.msk [vmem:[%s278 + $0x70] sm:$0xf] %vm5367, %v5331
      %5397 = vst.msk [vmem:[%s278 + $0x74] sm:$0xf] %vm5367, %v5332
      %5398 = vst.msk [vmem:[%s278 + $0x78] sm:$0xf] %vm5367, %v5333
      %5399 = vst.msk [vmem:[%s278 + $0x7c] sm:$0xf] %vm5367, %v5334
      %p5400 = scmp.lt.s32.totalorder %s18, 1
      %s5401 = scalar_select %p5400, %s18, 1
      %s5402 = smul.addr %s5401, 32
      %s5403 = smul.addr %s5402, 4
      %s5404 = scalar_lea.vmem %s7, %s5403
      // Predicated region
      $region49: #{tpu_custom_call.1} parent=47 // pred_check
        %p5405 = pneg %p188
      $region50: #{tpu_custom_call.1} parent=47 // pred_check_branch
        %5407 = sbr.rel (%p5405) target = $region52
      $region51: #{tpu_custom_call.1} parent=47 // pred_region
        _
      $region52: #{tpu_custom_call.1} parent=47 // pred_fallthru
        _
    $region48: #{tpu_custom_call.1} parent=5 // pred_fallthru
      _
    %p5408 = scmp.le.s32.totalorder 2, %s13
    // Predicated region
    $region53: #{tpu_custom_call.1} parent=5 // pred_check
      %p5409 = pneg %p5408
    $region54: #{tpu_custom_call.1} parent=5 // pred_check_branch
      %5411 = sbr.rel (%p5409) target = $region56
    $region55: #{tpu_custom_call.1} parent=5 // pred_region
      %s5412 = ssub.s32 %s13, 2
      // Predicated region
      $region57: #{tpu_custom_call.1} parent=55 // pred_check
        %p5413 = pneg %p194
      $region58: #{tpu_custom_call.1} parent=55 // pred_check_branch
        %5415 = sbr.rel (%p5413) target = $region60
      $region59: #{tpu_custom_call.1} parent=55 // pred_region
        %p5416 = scmp.lt.s32.totalorder %s19, 1
        %s5417 = scalar_select %p5416, %s19, 1
        %s5418 = smul.addr %s5417, 32
        %s5419 = smul.addr %s5418, 4
        %s5420 = scalar_lea.vmem %s7, %s5419
      $region60: #{tpu_custom_call.1} parent=55 // pred_fallthru
        _
    $region56: #{tpu_custom_call.1} parent=5 // pred_fallthru
      _
  $region6: #{tpu_custom_call.1} parent=0 // loop_footer
    %s17 = sadd.s32 1, %s13
  $region7: #{tpu_custom_call.1} parent=0 // loop_footer_branch
    %12 = sbr.rel target = $region3
  $region8: #{tpu_custom_call.1} parent=0 // loop_exit
    _

</llo_original>
